<compile_context>
chip_gen: v7x
topology: tpu7x:2x2x1
jax: 0.10.0
libtpu: 0.0.40
codegen_flags: <defaults>
</compile_context>

<pallas_src>
import math
import numpy as np
import jax
import jax.numpy as jnp
from jax.experimental import pallas as pl
from jax.experimental.pallas import tpu as pltpu


def make_kernel(H, W):
    Hp, Wp = H + 2, W + 2
    L = Hp * Wp                      # padded-flat spatial length (lane axis)
    F = Wp + 1                       # flank = max |tap offset|; keeps all windows in-bounds
    # tap offsets in the padded-flat layout, kh-major / kw-minor (PyTorch tap order)
    offs = [dh * Wp + dw for dh in (-1, 0, 1) for dw in (-1, 0, 1)]

    def kernel(x_ref, w1_ref, s1_ref, t1_ref, w2_ref, s2_ref, t2_ref,
               mask_ref, a_ref, out_ref, ybuf):
        # x_ref   : (1, C, L + 2F) flanked, padded-flat input (zero ring + zero flanks)
        # w*_ref  : (9, C, C)      3x3 taps as (Cout, Cin) matrices
        # s*,t*   : (C, 1)         folded BN scale / (conv-bias + BN) shift
        # mask_ref: (1, L)         1 in the image interior, 0 on the 1-px pad ring
        # a_ref   : (1,) in SMEM   PReLU slope (single shared parameter, nn.PReLU() default)
        # out_ref : (1, C, L)      padded-flat output (pad-ring values are don't-care)
        # ybuf    : (C, L + 2F)    VMEM staging buffer for the conv2 input
        C = x_ref.shape[1]

        def conv3x3(read_window, w_ref):
            acc = None
            for t, off in enumerate(offs):
                term = jnp.dot(w_ref[t], read_window(off),
                               preferred_element_type=jnp.float32)
                acc = term if acc is None else acc + term
            return acc

        # ---- conv1: 9 windowed ref reads + 9 small MXU dots ----
        y = conv3x3(lambda off: x_ref[0, :, F + off:F + off + L], w1_ref)
        y = y * s1_ref[...] + t1_ref[...]            # conv1 bias + BN1, folded affine
        a = a_ref[0]
        y = jnp.where(y > 0.0, y, a * y)             # PReLU (shared scalar slope)
        y = y * mask_ref[...]                        # re-zero the pad ring for conv2

        # ---- stage conv2's input so its taps are also windowed ref reads ----
        ybuf[:, 0:F] = jnp.zeros((C, F), jnp.float32)
        ybuf[:, F + L:F + L + F] = jnp.zeros((C, F), jnp.float32)
        ybuf[:, F:F + L] = y

        # ---- conv2 + BN2 + residual ----
        z = conv3x3(lambda off: ybuf[:, F + off:F + off + L], w2_ref)
        z = z * s2_ref[...] + t2_ref[...]            # conv2 bias + BN2, folded affine
        out_ref[0] = (z + x_ref[0, :, F:F + L]).astype(out_ref.dtype)

    return kernel


def cnnblocks_pallas(x_nchw, params):
    """x_nchw: (N, C, H, W) float32. Returns (N, C, H, W) float32."""
    (w1, b1, s1, t1, a, w2, b2, s2, t2) = params
    N, C, H, W = x_nchw.shape
    assert w1.shape == (C, C, 3, 3) and w2.shape == (C, C, 3, 3), "requires Cin == Cout"
    Hp, Wp = H + 2, W + 2
    L = Hp * Wp
    F = Wp + 1
    LF = L + 2 * F

    # Padded-flat, flanked input in NCHW order: (N, C, (H+2)*(W+2) + 2F).
    x = x_nchw.astype(jnp.float32)
    x_pad = jnp.pad(x, ((0, 0), (0, 0), (1, 1), (1, 1)))      # (N, C, Hp, Wp)
    x_flanked = jnp.pad(x_pad.reshape(N, C, L), ((0, 0), (0, 0), (F, F)))

    # Taps as (tap, Cout, Cin) matrices; fold the conv bias into the BN shift.
    w1f = jnp.transpose(w1, (2, 3, 0, 1)).reshape(9, C, C)
    w2f = jnp.transpose(w2, (2, 3, 0, 1)).reshape(9, C, C)
    s1c = s1.reshape(C, 1)
    t1c = (b1 * s1 + t1).reshape(C, 1)
    s2c = s2.reshape(C, 1)
    t2c = (b2 * s2 + t2).reshape(C, 1)

    # Interior mask over the padded-flat axis (1 inside, 0 on the 1-px pad ring).
    rows = jnp.arange(L, dtype=jnp.int32) // Wp
    cols = jnp.arange(L, dtype=jnp.int32) % Wp
    mask = (((rows >= 1) & (rows <= H) & (cols >= 1) & (cols <= W))
            .astype(jnp.float32).reshape(1, L))

    kernel = make_kernel(H, W)

    out_flat = pl.pallas_call(
        kernel,
        out_shape=jax.ShapeDtypeStruct((N, C, L), jnp.float32),
        grid_spec=pltpu.PrefetchScalarGridSpec(
            num_scalar_prefetch=0,
            grid=(N,),
            in_specs=[
                pl.BlockSpec((1, C, LF), lambda n: (n, 0, 0)),   # x (flanked, padded-flat)
                pl.BlockSpec((9, C, C), lambda n: (0, 0, 0)),    # conv1 taps
                pl.BlockSpec((C, 1), lambda n: (0, 0)),          # BN1 scale
                pl.BlockSpec((C, 1), lambda n: (0, 0)),          # BN1 shift (+bias)
                pl.BlockSpec((9, C, C), lambda n: (0, 0, 0)),    # conv2 taps
                pl.BlockSpec((C, 1), lambda n: (0, 0)),          # BN2 scale
                pl.BlockSpec((C, 1), lambda n: (0, 0)),          # BN2 shift (+bias)
                pl.BlockSpec((1, L), lambda n: (0, 0)),          # interior mask
                pl.BlockSpec(memory_space=pltpu.MemorySpace.SMEM),  # PReLU slope
            ],
            out_specs=pl.BlockSpec((1, C, L), lambda n: (n, 0, 0)),
            scratch_shapes=[pltpu.VMEM((C, LF), jnp.float32)],
        ),
        compiler_params=pltpu.CompilerParams(dimension_semantics=("parallel",)),
    )(x_flanked, w1f, s1c, t1c, w2f, s2c, t2c, mask, a)

    out = out_flat.reshape(N, C, Hp, Wp)[:, :, 1:H + 1, 1:W + 1]
    return out


def cnnblocks_reference(x_nchw, params):
    """Pure-JAX reference (NHWC internally) for correctness checking."""
    (w1, b1, s1, t1, a, w2, b2, s2, t2) = params
    x = jnp.transpose(x_nchw, (0, 2, 3, 1))
    w1h = jnp.transpose(w1, (2, 3, 1, 0))      # OIHW -> HWIO
    w2h = jnp.transpose(w2, (2, 3, 1, 0))
    dn = ('NHWC', 'HWIO', 'NHWC')
    y = jax.lax.conv_general_dilated(x, w1h, (1, 1), 'SAME', dimension_numbers=dn) + b1
    y = y * s1 + t1
    y = jnp.where(y > 0, y, a[0] * y)
    y = jax.lax.conv_general_dilated(y, w2h, (1, 1), 'SAME', dimension_numbers=dn) + b2
    y = y * s2 + t2
    y = y + x
    return jnp.transpose(y, (0, 3, 1, 2))


def make_params(key, C):
    ks = jax.random.split(key, 8)
    fan_in = C * 3 * 3
    bound = 1.0 / math.sqrt(fan_in)
    eps = 1e-5

    w1 = jax.random.uniform(ks[0], (C, C, 3, 3), jnp.float32, -bound, bound)  # OIHW
    b1 = jax.random.uniform(ks[1], (C,), jnp.float32, -bound, bound)
    w2 = jax.random.uniform(ks[2], (C, C, 3, 3), jnp.float32, -bound, bound)
    b2 = jax.random.uniform(ks[3], (C,), jnp.float32, -bound, bound)

    # BatchNorm (eval mode): gamma/beta + running stats folded to scale/shift.
    g1, be1 = jnp.ones((C,), jnp.float32), jnp.zeros((C,), jnp.float32)
    rm1 = 0.1 * jax.random.normal(ks[4], (C,), jnp.float32)
    rv1 = jax.random.uniform(ks[5], (C,), jnp.float32, 0.5, 1.5)
    s1 = g1 / jnp.sqrt(rv1 + eps)
    t1 = be1 - rm1 * s1

    g2, be2 = jnp.ones((C,), jnp.float32), jnp.zeros((C,), jnp.float32)
    rm2 = 0.1 * jax.random.normal(ks[6], (C,), jnp.float32)
    rv2 = jax.random.uniform(ks[7], (C,), jnp.float32, 0.5, 1.5)
    s2 = g2 / jnp.sqrt(rv2 + eps)
    t2 = be2 - rm2 * s2

    a = jnp.full((1,), 0.25, jnp.float32)      # nn.PReLU() default: single shared slope
    return (w1, b1, s1, t1, a, w2, b2, s2, t2)


if __name__ == "__main__":
    key = jax.random.PRNGKey(0)
    k_x, k_p = jax.random.split(key)

    N, C, H, W = 2, 4, 16, 16                  # NCHW, like the PyTorch module
    x = jax.random.normal(k_x, (N, C, H, W), jnp.float32)
    params = make_params(k_p, C)

    out = jax.block_until_ready(cnnblocks_pallas(x, params))
    ref = jax.block_until_ready(cnnblocks_reference(x, params))

    assert out.shape == (N, C, H, W)
    np.testing.assert_allclose(np.asarray(out), np.asarray(ref), atol=1e-4, rtol=1e-4)

    print("KERNEL_OK")
</pallas_src>

<mosaic_0001>
module attributes {stable_mosaic.version = 11 : i64} {
  func.func @kernel(%arg0: i32, %arg1: memref<1x4x362xf32, #tpu.memory_space<vmem>>, %arg2: memref<9x4x4xf32, #tpu.memory_space<vmem>>, %arg3: memref<4x1xf32, #tpu.memory_space<vmem>>, %arg4: memref<4x1xf32, #tpu.memory_space<vmem>>, %arg5: memref<9x4x4xf32, #tpu.memory_space<vmem>>, %arg6: memref<4x1xf32, #tpu.memory_space<vmem>>, %arg7: memref<4x1xf32, #tpu.memory_space<vmem>>, %arg8: memref<1x324xf32, #tpu.memory_space<vmem>>, %arg9: memref<1xf32, #tpu.memory_space<smem>>, %arg10: memref<1x4x324xf32, #tpu.memory_space<vmem>>, %arg11: memref<4x362xf32, #tpu.memory_space<vmem>>) attributes {dimension_semantics = [#tpu.dimension_semantics<parallel>], iteration_bounds = array<i64: 2>, scalar_prefetch = 0 : i64, scratch_operands = 1 : i64, tpu.core_type = #tpu.core_type<tc>, window_params = [{transform_indices = @transform_0, window_bounds = array<i64: 1, 4, 362>}, {pipeline_mode = #tpu.pipeline_mode<synchronous>, transform_indices = @transform_1, window_bounds = array<i64: 9, 4, 4>}, {pipeline_mode = #tpu.pipeline_mode<synchronous>, transform_indices = @transform_2, window_bounds = array<i64: 4, 1>}, {pipeline_mode = #tpu.pipeline_mode<synchronous>, transform_indices = @transform_3, window_bounds = array<i64: 4, 1>}, {pipeline_mode = #tpu.pipeline_mode<synchronous>, transform_indices = @transform_4, window_bounds = array<i64: 9, 4, 4>}, {pipeline_mode = #tpu.pipeline_mode<synchronous>, transform_indices = @transform_5, window_bounds = array<i64: 4, 1>}, {pipeline_mode = #tpu.pipeline_mode<synchronous>, transform_indices = @transform_6, window_bounds = array<i64: 4, 1>}, {pipeline_mode = #tpu.pipeline_mode<synchronous>, transform_indices = @transform_7, window_bounds = array<i64: 1, 324>}, {transform_indices = @transform_8, window_bounds = array<i64: 1>}, {transform_indices = @transform_9, window_bounds = array<i64: 1, 4, 324>}]} {
    %c0 = arith.constant 0 : index
    %c0_0 = arith.constant 0 : index
    %c0_1 = arith.constant 0 : index
    %0 = vector.load %arg2[%c0, %c0_0, %c0_1] : memref<9x4x4xf32, #tpu.memory_space<vmem>>, vector<1x4x4xf32>
    %1 = vector.shape_cast %0 : vector<1x4x4xf32> to vector<4x4xf32>
    %c0_2 = arith.constant 0 : index
    %c0_3 = arith.constant 0 : index
    %c0_4 = arith.constant 0 : index
    %2 = vector.load %arg1[%c0_2, %c0_3, %c0_4] : memref<1x4x362xf32, #tpu.memory_space<vmem>>, vector<1x4x324xf32>
    %3 = vector.shape_cast %2 : vector<1x4x324xf32> to vector<4x324xf32>
    %cst = arith.constant dense<0.000000e+00> : vector<4x324xf32>
    %4 = tpu.matmul %1, %3, %cst {dimension_numbers = #tpu.dot_dimension_numbers<[1], [0], [0], [1], [0, 0, 1, 1], [], []>} : vector<4x4xf32>, vector<4x324xf32>, vector<4x324xf32> -> vector<4x324xf32>
    %c1 = arith.constant 1 : index
    %c0_5 = arith.constant 0 : index
    %c0_6 = arith.constant 0 : index
    %5 = vector.load %arg2[%c1, %c0_5, %c0_6] : memref<9x4x4xf32, #tpu.memory_space<vmem>>, vector<1x4x4xf32>
    %6 = vector.shape_cast %5 : vector<1x4x4xf32> to vector<4x4xf32>
    %c0_7 = arith.constant 0 : index
    %c0_8 = arith.constant 0 : index
    %c1_9 = arith.constant 1 : index
    %7 = vector.load %arg1[%c0_7, %c0_8, %c1_9] : memref<1x4x362xf32, #tpu.memory_space<vmem>>, vector<1x4x324xf32>
    %8 = vector.shape_cast %7 : vector<1x4x324xf32> to vector<4x324xf32>
    %cst_10 = arith.constant dense<0.000000e+00> : vector<4x324xf32>
    %9 = tpu.matmul %6, %8, %cst_10 {dimension_numbers = #tpu.dot_dimension_numbers<[1], [0], [0], [1], [0, 0, 1, 1], [], []>} : vector<4x4xf32>, vector<4x324xf32>, vector<4x324xf32> -> vector<4x324xf32>
    %10 = arith.addf %4, %9 : vector<4x324xf32>
    %c2 = arith.constant 2 : index
    %c0_11 = arith.constant 0 : index
    %c0_12 = arith.constant 0 : index
    %11 = vector.load %arg2[%c2, %c0_11, %c0_12] : memref<9x4x4xf32, #tpu.memory_space<vmem>>, vector<1x4x4xf32>
    %12 = vector.shape_cast %11 : vector<1x4x4xf32> to vector<4x4xf32>
    %c0_13 = arith.constant 0 : index
    %c0_14 = arith.constant 0 : index
    %c2_15 = arith.constant 2 : index
    %13 = vector.load %arg1[%c0_13, %c0_14, %c2_15] : memref<1x4x362xf32, #tpu.memory_space<vmem>>, vector<1x4x324xf32>
    %14 = vector.shape_cast %13 : vector<1x4x324xf32> to vector<4x324xf32>
    %cst_16 = arith.constant dense<0.000000e+00> : vector<4x324xf32>
    %15 = tpu.matmul %12, %14, %cst_16 {dimension_numbers = #tpu.dot_dimension_numbers<[1], [0], [0], [1], [0, 0, 1, 1], [], []>} : vector<4x4xf32>, vector<4x324xf32>, vector<4x324xf32> -> vector<4x324xf32>
    %16 = arith.addf %10, %15 : vector<4x324xf32>
    %c3 = arith.constant 3 : index
    %c0_17 = arith.constant 0 : index
    %c0_18 = arith.constant 0 : index
    %17 = vector.load %arg2[%c3, %c0_17, %c0_18] : memref<9x4x4xf32, #tpu.memory_space<vmem>>, vector<1x4x4xf32>
    %18 = vector.shape_cast %17 : vector<1x4x4xf32> to vector<4x4xf32>
    %c0_19 = arith.constant 0 : index
    %c0_20 = arith.constant 0 : index
    %c18 = arith.constant 18 : index
    %19 = vector.load %arg1[%c0_19, %c0_20, %c18] : memref<1x4x362xf32, #tpu.memory_space<vmem>>, vector<1x4x324xf32>
    %20 = vector.shape_cast %19 : vector<1x4x324xf32> to vector<4x324xf32>
    %cst_21 = arith.constant dense<0.000000e+00> : vector<4x324xf32>
    %21 = tpu.matmul %18, %20, %cst_21 {dimension_numbers = #tpu.dot_dimension_numbers<[1], [0], [0], [1], [0, 0, 1, 1], [], []>} : vector<4x4xf32>, vector<4x324xf32>, vector<4x324xf32> -> vector<4x324xf32>
    %22 = arith.addf %16, %21 : vector<4x324xf32>
    %c4 = arith.constant 4 : index
    %c0_22 = arith.constant 0 : index
    %c0_23 = arith.constant 0 : index
    %23 = vector.load %arg2[%c4, %c0_22, %c0_23] : memref<9x4x4xf32, #tpu.memory_space<vmem>>, vector<1x4x4xf32>
    %24 = vector.shape_cast %23 : vector<1x4x4xf32> to vector<4x4xf32>
    %c0_24 = arith.constant 0 : index
    %c0_25 = arith.constant 0 : index
    %c19 = arith.constant 19 : index
    %25 = vector.load %arg1[%c0_24, %c0_25, %c19] : memref<1x4x362xf32, #tpu.memory_space<vmem>>, vector<1x4x324xf32>
    %26 = vector.shape_cast %25 : vector<1x4x324xf32> to vector<4x324xf32>
    %cst_26 = arith.constant dense<0.000000e+00> : vector<4x324xf32>
    %27 = tpu.matmul %24, %26, %cst_26 {dimension_numbers = #tpu.dot_dimension_numbers<[1], [0], [0], [1], [0, 0, 1, 1], [], []>} : vector<4x4xf32>, vector<4x324xf32>, vector<4x324xf32> -> vector<4x324xf32>
    %28 = arith.addf %22, %27 : vector<4x324xf32>
    %c5 = arith.constant 5 : index
    %c0_27 = arith.constant 0 : index
    %c0_28 = arith.constant 0 : index
    %29 = vector.load %arg2[%c5, %c0_27, %c0_28] : memref<9x4x4xf32, #tpu.memory_space<vmem>>, vector<1x4x4xf32>
    %30 = vector.shape_cast %29 : vector<1x4x4xf32> to vector<4x4xf32>
    %c0_29 = arith.constant 0 : index
    %c0_30 = arith.constant 0 : index
    %c20 = arith.constant 20 : index
    %31 = vector.load %arg1[%c0_29, %c0_30, %c20] : memref<1x4x362xf32, #tpu.memory_space<vmem>>, vector<1x4x324xf32>
    %32 = vector.shape_cast %31 : vector<1x4x324xf32> to vector<4x324xf32>
    %cst_31 = arith.constant dense<0.000000e+00> : vector<4x324xf32>
    %33 = tpu.matmul %30, %32, %cst_31 {dimension_numbers = #tpu.dot_dimension_numbers<[1], [0], [0], [1], [0, 0, 1, 1], [], []>} : vector<4x4xf32>, vector<4x324xf32>, vector<4x324xf32> -> vector<4x324xf32>
    %34 = arith.addf %28, %33 : vector<4x324xf32>
    %c6 = arith.constant 6 : index
    %c0_32 = arith.constant 0 : index
    %c0_33 = arith.constant 0 : index
    %35 = vector.load %arg2[%c6, %c0_32, %c0_33] : memref<9x4x4xf32, #tpu.memory_space<vmem>>, vector<1x4x4xf32>
    %36 = vector.shape_cast %35 : vector<1x4x4xf32> to vector<4x4xf32>
    %c0_34 = arith.constant 0 : index
    %c0_35 = arith.constant 0 : index
    %c36 = arith.constant 36 : index
    %37 = vector.load %arg1[%c0_34, %c0_35, %c36] : memref<1x4x362xf32, #tpu.memory_space<vmem>>, vector<1x4x324xf32>
    %38 = vector.shape_cast %37 : vector<1x4x324xf32> to vector<4x324xf32>
    %cst_36 = arith.constant dense<0.000000e+00> : vector<4x324xf32>
    %39 = tpu.matmul %36, %38, %cst_36 {dimension_numbers = #tpu.dot_dimension_numbers<[1], [0], [0], [1], [0, 0, 1, 1], [], []>} : vector<4x4xf32>, vector<4x324xf32>, vector<4x324xf32> -> vector<4x324xf32>
    %40 = arith.addf %34, %39 : vector<4x324xf32>
    %c7 = arith.constant 7 : index
    %c0_37 = arith.constant 0 : index
    %c0_38 = arith.constant 0 : index
    %41 = vector.load %arg2[%c7, %c0_37, %c0_38] : memref<9x4x4xf32, #tpu.memory_space<vmem>>, vector<1x4x4xf32>
    %42 = vector.shape_cast %41 : vector<1x4x4xf32> to vector<4x4xf32>
    %c0_39 = arith.constant 0 : index
    %c0_40 = arith.constant 0 : index
    %c37 = arith.constant 37 : index
    %43 = vector.load %arg1[%c0_39, %c0_40, %c37] : memref<1x4x362xf32, #tpu.memory_space<vmem>>, vector<1x4x324xf32>
    %44 = vector.shape_cast %43 : vector<1x4x324xf32> to vector<4x324xf32>
    %cst_41 = arith.constant dense<0.000000e+00> : vector<4x324xf32>
    %45 = tpu.matmul %42, %44, %cst_41 {dimension_numbers = #tpu.dot_dimension_numbers<[1], [0], [0], [1], [0, 0, 1, 1], [], []>} : vector<4x4xf32>, vector<4x324xf32>, vector<4x324xf32> -> vector<4x324xf32>
    %46 = arith.addf %40, %45 : vector<4x324xf32>
    %c8 = arith.constant 8 : index
    %c0_42 = arith.constant 0 : index
    %c0_43 = arith.constant 0 : index
    %47 = vector.load %arg2[%c8, %c0_42, %c0_43] : memref<9x4x4xf32, #tpu.memory_space<vmem>>, vector<1x4x4xf32>
    %48 = vector.shape_cast %47 : vector<1x4x4xf32> to vector<4x4xf32>
    %c0_44 = arith.constant 0 : index
    %c0_45 = arith.constant 0 : index
    %c38 = arith.constant 38 : index
    %49 = vector.load %arg1[%c0_44, %c0_45, %c38] : memref<1x4x362xf32, #tpu.memory_space<vmem>>, vector<1x4x324xf32>
    %50 = vector.shape_cast %49 : vector<1x4x324xf32> to vector<4x324xf32>
    %cst_46 = arith.constant dense<0.000000e+00> : vector<4x324xf32>
    %51 = tpu.matmul %48, %50, %cst_46 {dimension_numbers = #tpu.dot_dimension_numbers<[1], [0], [0], [1], [0, 0, 1, 1], [], []>} : vector<4x4xf32>, vector<4x324xf32>, vector<4x324xf32> -> vector<4x324xf32>
    %52 = arith.addf %46, %51 : vector<4x324xf32>
    %c0_47 = arith.constant 0 : index
    %c0_48 = arith.constant 0 : index
    %53 = vector.load %arg3[%c0_47, %c0_48] : memref<4x1xf32, #tpu.memory_space<vmem>>, vector<4x1xf32>
    %54 = vector.broadcast %53 : vector<4x1xf32> to vector<4x324xf32>
    %55 = arith.mulf %52, %54 : vector<4x324xf32>
    %c0_49 = arith.constant 0 : index
    %c0_50 = arith.constant 0 : index
    %56 = vector.load %arg4[%c0_49, %c0_50] : memref<4x1xf32, #tpu.memory_space<vmem>>, vector<4x1xf32>
    %57 = vector.broadcast %56 : vector<4x1xf32> to vector<4x324xf32>
    %58 = arith.addf %55, %57 : vector<4x324xf32>
    %c0_51 = arith.constant 0 : index
    %59 = memref.load %arg9[%c0_51] : memref<1xf32, #tpu.memory_space<smem>>
    %cst_52 = arith.constant 0.000000e+00 : f32
    %60 = vector.broadcast %cst_52 : f32 to vector<4x324xf32>
    %61 = arith.cmpf ogt, %58, %60 : vector<4x324xf32>
    %62 = vector.broadcast %59 : f32 to vector<4x324xf32>
    %63 = arith.mulf %62, %58 : vector<4x324xf32>
    %64 = arith.select %61, %58, %63 : vector<4x324xi1>, vector<4x324xf32>
    %c0_53 = arith.constant 0 : index
    %c0_54 = arith.constant 0 : index
    %65 = vector.load %arg8[%c0_53, %c0_54] : memref<1x324xf32, #tpu.memory_space<vmem>>, vector<1x324xf32>
    %66 = vector.broadcast %65 : vector<1x324xf32> to vector<4x324xf32>
    %67 = arith.mulf %64, %66 : vector<4x324xf32>
    %cst_55 = arith.constant 0.000000e+00 : f32
    %68 = vector.broadcast %cst_55 : f32 to vector<4x19xf32>
    %c0_56 = arith.constant 0 : index
    %c0_57 = arith.constant 0 : index
    %69 = vector.load %arg11[%c0_56, %c0_57] : memref<4x362xf32, #tpu.memory_space<vmem>>, vector<4x19xf32>
    tpu.vector_store %arg11[%c0_56, %c0_57], %68 {strides = array<i32>} : memref<4x362xf32, #tpu.memory_space<vmem>>, vector<4x19xf32>,
    %cst_58 = arith.constant 0.000000e+00 : f32
    %70 = vector.broadcast %cst_58 : f32 to vector<4x19xf32>
    %c0_59 = arith.constant 0 : index
    %c343 = arith.constant 343 : index
    %71 = vector.load %arg11[%c0_59, %c343] : memref<4x362xf32, #tpu.memory_space<vmem>>, vector<4x19xf32>
    tpu.vector_store %arg11[%c0_59, %c343], %70 {strides = array<i32>} : memref<4x362xf32, #tpu.memory_space<vmem>>, vector<4x19xf32>,
    %c0_60 = arith.constant 0 : index
    %c19_61 = arith.constant 19 : index
    %72 = vector.load %arg11[%c0_60, %c19_61] : memref<4x362xf32, #tpu.memory_space<vmem>>, vector<4x324xf32>
    tpu.vector_store %arg11[%c0_60, %c19_61], %67 {strides = array<i32>} : memref<4x362xf32, #tpu.memory_space<vmem>>, vector<4x324xf32>,
    %c0_62 = arith.constant 0 : index
    %c0_63 = arith.constant 0 : index
    %c0_64 = arith.constant 0 : index
    %73 = vector.load %arg5[%c0_62, %c0_63, %c0_64] : memref<9x4x4xf32, #tpu.memory_space<vmem>>, vector<1x4x4xf32>
    %74 = vector.shape_cast %73 : vector<1x4x4xf32> to vector<4x4xf32>
    %c0_65 = arith.constant 0 : index
    %c0_66 = arith.constant 0 : index
    %75 = vector.load %arg11[%c0_65, %c0_66] : memref<4x362xf32, #tpu.memory_space<vmem>>, vector<4x324xf32>
    %cst_67 = arith.constant dense<0.000000e+00> : vector<4x324xf32>
    %76 = tpu.matmul %74, %75, %cst_67 {dimension_numbers = #tpu.dot_dimension_numbers<[1], [0], [0], [1], [0, 0, 1, 1], [], []>} : vector<4x4xf32>, vector<4x324xf32>, vector<4x324xf32> -> vector<4x324xf32>
    %c1_68 = arith.constant 1 : index
    %c0_69 = arith.constant 0 : index
    %c0_70 = arith.constant 0 : index
    %77 = vector.load %arg5[%c1_68, %c0_69, %c0_70] : memref<9x4x4xf32, #tpu.memory_space<vmem>>, vector<1x4x4xf32>
    %78 = vector.shape_cast %77 : vector<1x4x4xf32> to vector<4x4xf32>
    %c0_71 = arith.constant 0 : index
    %c1_72 = arith.constant 1 : index
    %79 = vector.load %arg11[%c0_71, %c1_72] : memref<4x362xf32, #tpu.memory_space<vmem>>, vector<4x324xf32>
    %cst_73 = arith.constant dense<0.000000e+00> : vector<4x324xf32>
    %80 = tpu.matmul %78, %79, %cst_73 {dimension_numbers = #tpu.dot_dimension_numbers<[1], [0], [0], [1], [0, 0, 1, 1], [], []>} : vector<4x4xf32>, vector<4x324xf32>, vector<4x324xf32> -> vector<4x324xf32>
    %81 = arith.addf %76, %80 : vector<4x324xf32>
    %c2_74 = arith.constant 2 : index
    %c0_75 = arith.constant 0 : index
    %c0_76 = arith.constant 0 : index
    %82 = vector.load %arg5[%c2_74, %c0_75, %c0_76] : memref<9x4x4xf32, #tpu.memory_space<vmem>>, vector<1x4x4xf32>
    %83 = vector.shape_cast %82 : vector<1x4x4xf32> to vector<4x4xf32>
    %c0_77 = arith.constant 0 : index
    %c2_78 = arith.constant 2 : index
    %84 = vector.load %arg11[%c0_77, %c2_78] : memref<4x362xf32, #tpu.memory_space<vmem>>, vector<4x324xf32>
    %cst_79 = arith.constant dense<0.000000e+00> : vector<4x324xf32>
    %85 = tpu.matmul %83, %84, %cst_79 {dimension_numbers = #tpu.dot_dimension_numbers<[1], [0], [0], [1], [0, 0, 1, 1], [], []>} : vector<4x4xf32>, vector<4x324xf32>, vector<4x324xf32> -> vector<4x324xf32>
    %86 = arith.addf %81, %85 : vector<4x324xf32>
    %c3_80 = arith.constant 3 : index
    %c0_81 = arith.constant 0 : index
    %c0_82 = arith.constant 0 : index
    %87 = vector.load %arg5[%c3_80, %c0_81, %c0_82] : memref<9x4x4xf32, #tpu.memory_space<vmem>>, vector<1x4x4xf32>
    %88 = vector.shape_cast %87 : vector<1x4x4xf32> to vector<4x4xf32>
    %c0_83 = arith.constant 0 : index
    %c18_84 = arith.constant 18 : index
    %89 = vector.load %arg11[%c0_83, %c18_84] : memref<4x362xf32, #tpu.memory_space<vmem>>, vector<4x324xf32>
    %cst_85 = arith.constant dense<0.000000e+00> : vector<4x324xf32>
    %90 = tpu.matmul %88, %89, %cst_85 {dimension_numbers = #tpu.dot_dimension_numbers<[1], [0], [0], [1], [0, 0, 1, 1], [], []>} : vector<4x4xf32>, vector<4x324xf32>, vector<4x324xf32> -> vector<4x324xf32>
    %91 = arith.addf %86, %90 : vector<4x324xf32>
    %c4_86 = arith.constant 4 : index
    %c0_87 = arith.constant 0 : index
    %c0_88 = arith.constant 0 : index
    %92 = vector.load %arg5[%c4_86, %c0_87, %c0_88] : memref<9x4x4xf32, #tpu.memory_space<vmem>>, vector<1x4x4xf32>
    %93 = vector.shape_cast %92 : vector<1x4x4xf32> to vector<4x4xf32>
    %c0_89 = arith.constant 0 : index
    %c19_90 = arith.constant 19 : index
    %94 = vector.load %arg11[%c0_89, %c19_90] : memref<4x362xf32, #tpu.memory_space<vmem>>, vector<4x324xf32>
    %cst_91 = arith.constant dense<0.000000e+00> : vector<4x324xf32>
    %95 = tpu.matmul %93, %94, %cst_91 {dimension_numbers = #tpu.dot_dimension_numbers<[1], [0], [0], [1], [0, 0, 1, 1], [], []>} : vector<4x4xf32>, vector<4x324xf32>, vector<4x324xf32> -> vector<4x324xf32>
    %96 = arith.addf %91, %95 : vector<4x324xf32>
    %c5_92 = arith.constant 5 : index
    %c0_93 = arith.constant 0 : index
    %c0_94 = arith.constant 0 : index
    %97 = vector.load %arg5[%c5_92, %c0_93, %c0_94] : memref<9x4x4xf32, #tpu.memory_space<vmem>>, vector<1x4x4xf32>
    %98 = vector.shape_cast %97 : vector<1x4x4xf32> to vector<4x4xf32>
    %c0_95 = arith.constant 0 : index
    %c20_96 = arith.constant 20 : index
    %99 = vector.load %arg11[%c0_95, %c20_96] : memref<4x362xf32, #tpu.memory_space<vmem>>, vector<4x324xf32>
    %cst_97 = arith.constant dense<0.000000e+00> : vector<4x324xf32>
    %100 = tpu.matmul %98, %99, %cst_97 {dimension_numbers = #tpu.dot_dimension_numbers<[1], [0], [0], [1], [0, 0, 1, 1], [], []>} : vector<4x4xf32>, vector<4x324xf32>, vector<4x324xf32> -> vector<4x324xf32>
    %101 = arith.addf %96, %100 : vector<4x324xf32>
    %c6_98 = arith.constant 6 : index
    %c0_99 = arith.constant 0 : index
    %c0_100 = arith.constant 0 : index
    %102 = vector.load %arg5[%c6_98, %c0_99, %c0_100] : memref<9x4x4xf32, #tpu.memory_space<vmem>>, vector<1x4x4xf32>
    %103 = vector.shape_cast %102 : vector<1x4x4xf32> to vector<4x4xf32>
    %c0_101 = arith.constant 0 : index
    %c36_102 = arith.constant 36 : index
    %104 = vector.load %arg11[%c0_101, %c36_102] : memref<4x362xf32, #tpu.memory_space<vmem>>, vector<4x324xf32>
    %cst_103 = arith.constant dense<0.000000e+00> : vector<4x324xf32>
    %105 = tpu.matmul %103, %104, %cst_103 {dimension_numbers = #tpu.dot_dimension_numbers<[1], [0], [0], [1], [0, 0, 1, 1], [], []>} : vector<4x4xf32>, vector<4x324xf32>, vector<4x324xf32> -> vector<4x324xf32>
    %106 = arith.addf %101, %105 : vector<4x324xf32>
    %c7_104 = arith.constant 7 : index
    %c0_105 = arith.constant 0 : index
    %c0_106 = arith.constant 0 : index
    %107 = vector.load %arg5[%c7_104, %c0_105, %c0_106] : memref<9x4x4xf32, #tpu.memory_space<vmem>>, vector<1x4x4xf32>
    %108 = vector.shape_cast %107 : vector<1x4x4xf32> to vector<4x4xf32>
    %c0_107 = arith.constant 0 : index
    %c37_108 = arith.constant 37 : index
    %109 = vector.load %arg11[%c0_107, %c37_108] : memref<4x362xf32, #tpu.memory_space<vmem>>, vector<4x324xf32>
    %cst_109 = arith.constant dense<0.000000e+00> : vector<4x324xf32>
    %110 = tpu.matmul %108, %109, %cst_109 {dimension_numbers = #tpu.dot_dimension_numbers<[1], [0], [0], [1], [0, 0, 1, 1], [], []>} : vector<4x4xf32>, vector<4x324xf32>, vector<4x324xf32> -> vector<4x324xf32>
    %111 = arith.addf %106, %110 : vector<4x324xf32>
    %c8_110 = arith.constant 8 : index
    %c0_111 = arith.constant 0 : index
    %c0_112 = arith.constant 0 : index
    %112 = vector.load %arg5[%c8_110, %c0_111, %c0_112] : memref<9x4x4xf32, #tpu.memory_space<vmem>>, vector<1x4x4xf32>
    %113 = vector.shape_cast %112 : vector<1x4x4xf32> to vector<4x4xf32>
    %c0_113 = arith.constant 0 : index
    %c38_114 = arith.constant 38 : index
    %114 = vector.load %arg11[%c0_113, %c38_114] : memref<4x362xf32, #tpu.memory_space<vmem>>, vector<4x324xf32>
    %cst_115 = arith.constant dense<0.000000e+00> : vector<4x324xf32>
    %115 = tpu.matmul %113, %114, %cst_115 {dimension_numbers = #tpu.dot_dimension_numbers<[1], [0], [0], [1], [0, 0, 1, 1], [], []>} : vector<4x4xf32>, vector<4x324xf32>, vector<4x324xf32> -> vector<4x324xf32>
    %116 = arith.addf %111, %115 : vector<4x324xf32>
    %c0_116 = arith.constant 0 : index
    %c0_117 = arith.constant 0 : index
    %117 = vector.load %arg6[%c0_116, %c0_117] : memref<4x1xf32, #tpu.memory_space<vmem>>, vector<4x1xf32>
    %118 = vector.broadcast %117 : vector<4x1xf32> to vector<4x324xf32>
    %119 = arith.mulf %116, %118 : vector<4x324xf32>
    %c0_118 = arith.constant 0 : index
    %c0_119 = arith.constant 0 : index
    %120 = vector.load %arg7[%c0_118, %c0_119] : memref<4x1xf32, #tpu.memory_space<vmem>>, vector<4x1xf32>
    %121 = vector.broadcast %120 : vector<4x1xf32> to vector<4x324xf32>
    %122 = arith.addf %119, %121 : vector<4x324xf32>
    %c0_120 = arith.constant 0 : index
    %c0_121 = arith.constant 0 : index
    %c19_122 = arith.constant 19 : index
    %123 = vector.load %arg1[%c0_120, %c0_121, %c19_122] : memref<1x4x362xf32, #tpu.memory_space<vmem>>, vector<1x4x324xf32>
    %124 = vector.shape_cast %123 : vector<1x4x324xf32> to vector<4x324xf32>
    %125 = arith.addf %122, %124 : vector<4x324xf32>
    %c0_123 = arith.constant 0 : index
    %c0_124 = arith.constant 0 : index
    %c0_125 = arith.constant 0 : index
    %126 = vector.load %arg10[%c0_123, %c0_124, %c0_125] : memref<1x4x324xf32, #tpu.memory_space<vmem>>, vector<1x4x324xf32>
    %127 = vector.shape_cast %126 : vector<1x4x324xf32> to vector<4x324xf32>
    %128 = vector.shape_cast %125 : vector<4x324xf32> to vector<1x4x324xf32>
    tpu.vector_store %arg10[%c0_123, %c0_124, %c0_125], %128 {strides = array<i32>} : memref<1x4x324xf32, #tpu.memory_space<vmem>>, vector<1x4x324xf32>,
    return
  }
  func.func @transform_0(%arg0: i32) -> (i32, i32, i32) {
    %c0_i32 = arith.constant 0 : i32
    %c0_i32_0 = arith.constant 0 : i32
    %c0_i32_1 = arith.constant 0 : i32
    return %arg0, %c0_i32, %c0_i32_0 : i32, i32, i32
  }
  func.func @transform_1(%arg0: i32) -> (i32, i32, i32) {
    %c0_i32 = arith.constant 0 : i32
    %c0_i32_0 = arith.constant 0 : i32
    %c0_i32_1 = arith.constant 0 : i32
    %c0_i32_2 = arith.constant 0 : i32
    return %c0_i32, %c0_i32_0, %c0_i32_1 : i32, i32, i32
  }
  func.func @transform_2(%arg0: i32) -> (i32, i32) {
    %c0_i32 = arith.constant 0 : i32
    %c0_i32_0 = arith.constant 0 : i32
    %c0_i32_1 = arith.constant 0 : i32
    return %c0_i32, %c0_i32_0 : i32, i32
  }
  func.func @transform_3(%arg0: i32) -> (i32, i32) {
    %c0_i32 = arith.constant 0 : i32
    %c0_i32_0 = arith.constant 0 : i32
    %c0_i32_1 = arith.constant 0 : i32
    return %c0_i32, %c0_i32_0 : i32, i32
  }
  func.func @transform_4(%arg0: i32) -> (i32, i32, i32) {
    %c0_i32 = arith.constant 0 : i32
    %c0_i32_0 = arith.constant 0 : i32
    %c0_i32_1 = arith.constant 0 : i32
    %c0_i32_2 = arith.constant 0 : i32
    return %c0_i32, %c0_i32_0, %c0_i32_1 : i32, i32, i32
  }
  func.func @transform_5(%arg0: i32) -> (i32, i32) {
    %c0_i32 = arith.constant 0 : i32
    %c0_i32_0 = arith.constant 0 : i32
    %c0_i32_1 = arith.constant 0 : i32
    return %c0_i32, %c0_i32_0 : i32, i32
  }
  func.func @transform_6(%arg0: i32) -> (i32, i32) {
    %c0_i32 = arith.constant 0 : i32
    %c0_i32_0 = arith.constant 0 : i32
    %c0_i32_1 = arith.constant 0 : i32
    return %c0_i32, %c0_i32_0 : i32, i32
  }
  func.func @transform_7(%arg0: i32) -> (i32, i32) {
    %c0_i32 = arith.constant 0 : i32
    %c0_i32_0 = arith.constant 0 : i32
    %c0_i32_1 = arith.constant 0 : i32
    return %c0_i32, %c0_i32_0 : i32, i32
  }
  func.func @transform_8(%arg0: i32) -> i32 {
    %c0_i32 = arith.constant 0 : i32
    %c0_i32_0 = arith.constant 0 : i32
    return %c0_i32 : i32
  }
  func.func @transform_9(%arg0: i32) -> (i32, i32, i32) {
    %c0_i32 = arith.constant 0 : i32
    %c0_i32_0 = arith.constant 0 : i32
    %c0_i32_1 = arith.constant 0 : i32
    return %arg0, %c0_i32, %c0_i32_0 : i32, i32, i32
  }
}

</mosaic_0001>

<llo_original>
// kernel: tpu_custom_call.1
$region0: #{tpu_custom_call.1}
  #allocation0 [shape = 'u32[]', space=smem, size = 0x4, offset = 0x4, fixed_abs, tag = 'smem constant byte address 0x4 - core index']
  #allocation1 [shape = 'u32[144,128]{1,0:T(1,128)}', space=vmem, size = 0x12000, scoped, tag = 'internal scratch']
  #allocation2 [shape = 'f32[4,362]{1,0:T(4,128)}', space=vmem, size = 0x1800, scoped, tag = 'scratch operand']
  #allocation3 [shape = 'f32[1]{0:T(128)S(6)}', space=smem, size = 0x200, scoped, tag = 'scoped memory for tpu_custom_call.1']
  %s0 = inlined_call_operand.vmem [shape: f32[2,4,362], index: 0, kind: input, shape index: {}]
  %s1 = inlined_call_operand.vmem [shape: f32[9,4,4], index: 1, kind: input, shape index: {}]
  %s2 = inlined_call_operand.vmem [shape: f32[4,1], index: 2, kind: input, shape index: {}]
  %s3 = inlined_call_operand.vmem [shape: f32[4,1], index: 3, kind: input, shape index: {}]
  %s4 = inlined_call_operand.vmem [shape: f32[9,4,4], index: 4, kind: input, shape index: {}]
  %s5 = inlined_call_operand.vmem [shape: f32[4,1], index: 5, kind: input, shape index: {}]
  %s6 = inlined_call_operand.vmem [shape: f32[4,1], index: 6, kind: input, shape index: {}]
  %s7 = inlined_call_operand.vmem [shape: f32[1,324], index: 7, kind: input, shape index: {}]
  %s8 = inlined_call_operand.<no memory space> [shape: f32[1], index: 8, kind: input, shape index: {}]
  %s9 = inlined_call_operand.hbm [shape: f32[2,4,324], index: 9, kind: output, shape index: {}]
  %s10 = sld [smem:[#allocation0]]
  $region69: #{tpu_custom_call.1} parent=0
    _
  %s12 = ssub.s32 1, %s10
  %s13 = scalar_select 0, %s12, %s10
  %14 = sst [smem:[#allocation3]] %s8
  $region1: #{tpu_custom_call.1} parent=0
    #allocation4 [shape = 'u8[12288]{0}', space=vmem, size = 0x3000, scoped, tag = 'output window, operand 0']
    #allocation5 [shape = 's32[2]{0}', space=sflag, size = 0x8, scoped, tag = 'scoped memory for tpu_custom_call.1']
    %15 = vsyncpa [#allocation5], 0
    %s16 = scalar_lea.sflag [#allocation5], 1
    %17 = vsyncpa %s16, 0
    loop: start=0, step=1, limit=4
    $region2: #{tpu_custom_call.1} parent=1 // loop_pre_header
      _
    $region3: #{tpu_custom_call.1} parent=1 // loop_header
      %s19 = sphi 0, %s23
      %p20 = scmp.ge.s32.totalorder %s19, 4
      %s29 = sphi 0, %s31
      %s32 = sphi 0, %s29
      %s33 = sphi 0, %s32
      %s49 = sphi 0, %s33
      %s53 = sphi 0, %s53
      %s55 = sphi 0, %s53
      %s56 = sphi 0, %s55
      %s70 = sphi 0, %s56
      %s74 = sphi 0, %s74
      %s76 = sphi 0, %s74
      %s77 = sphi 0, %s76
      %s91 = sphi 0, %s77
      %s95 = sphi 0, %s95
      %s97 = sphi 0, %s95
      %s98 = sphi 0, %s97
      %s112 = sphi 0, %s98
      %s116 = sphi 0, %s116
      %s118 = sphi 0, %s116
      %s119 = sphi 0, %s118
      %s133 = sphi 0, %s119
      %s137 = sphi 0, %s137
      %s139 = sphi 0, %s137
      %s140 = sphi 0, %s139
      %s154 = sphi 0, %s140
      %s158 = sphi 0, %s158
      %s160 = sphi 0, %s158
      %s161 = sphi 0, %s160
      %s175 = sphi 0, %s161
      %s179 = sphi 0, %s179
      %s181 = sphi 0, %s179
      %s182 = sphi 0, %s181
      %s196 = sphi 0, %s182
      %s200 = sphi 0, %s200
      %s202 = sphi 0, %s200
      %s203 = sphi 0, %s202
      %s217 = sphi 0, %s203
      %s223 = sphi 0, %s225
      %s226 = sphi 0, %s223
      %s227 = sphi 0, %s226
      %s243 = sphi 0, %s227
    $region4: #{tpu_custom_call.1} parent=1 // loop_header_branch
      %22 = sbr.rel (%p20) target = $region8
    $region5: #{tpu_custom_call.1} parent=1 // loop_body
      %s24 = ssub.s32 %s19, 1
      %s25 = ssub.s32 %s19, 2
      %s26 = sadd.s32 %s19, 1
      %s27 = ssub.s32 %s19, %s26
      %p28 = scmp.eq.s32.totalorder %s27, 0
      %s30 = sadd.s32 %s29, 1
      %s31 = scalar_select %p28, %s29, %s30
      %p34 = pneg %p28
      %p35 = scmp.eq.s32.totalorder %s19, 1
      %p36 = por %p34, %p35
      %p37 = scmp.ne.s32.totalorder %s29, %s32
      %p38 = scmp.eq.s32.totalorder %s19, 0
      %p39 = por %p37, %p38
      %p40 = scmp.ne.s32.totalorder %s29, %s32
      %p41 = scmp.eq.s32.totalorder %s24, 1
      %p42 = por %p40, %p41
      %p43 = scmp.ne.s32.totalorder %s32, %s33
      %p44 = scmp.eq.s32.totalorder %s24, 0
      %p45 = por %p43, %p44
      %p46 = scmp.ne.s32.totalorder %s32, %s33
      %p47 = scmp.eq.s32.totalorder %s25, 1
      %p48 = por %p46, %p47
      %p50 = scmp.ne.s32.totalorder %s33, %s49
      %p51 = scmp.eq.s32.totalorder %s25, 0
      %p52 = por %p50, %p51
      %s54 = sadd.s32 %s53, 1
      %p57 = scmp.eq.s32.totalorder %s19, 1
      %p58 = scmp.ne.s32.totalorder %s53, %s55
      %p59 = scmp.eq.s32.totalorder %s19, 0
      %p60 = por %p58, %p59
      %p61 = scmp.ne.s32.totalorder %s53, %s55
      %p62 = scmp.eq.s32.totalorder %s24, 1
      %p63 = por %p61, %p62
      %p64 = scmp.ne.s32.totalorder %s55, %s56
      %p65 = scmp.eq.s32.totalorder %s24, 0
      %p66 = por %p64, %p65
      %p67 = scmp.ne.s32.totalorder %s55, %s56
      %p68 = scmp.eq.s32.totalorder %s25, 1
      %p69 = por %p67, %p68
      %p71 = scmp.ne.s32.totalorder %s56, %s70
      %p72 = scmp.eq.s32.totalorder %s25, 0
      %p73 = por %p71, %p72
      %s75 = sadd.s32 %s74, 1
      %p78 = scmp.eq.s32.totalorder %s19, 1
      %p79 = scmp.ne.s32.totalorder %s74, %s76
      %p80 = scmp.eq.s32.totalorder %s19, 0
      %p81 = por %p79, %p80
      %p82 = scmp.ne.s32.totalorder %s74, %s76
      %p83 = scmp.eq.s32.totalorder %s24, 1
      %p84 = por %p82, %p83
      %p85 = scmp.ne.s32.totalorder %s76, %s77
      %p86 = scmp.eq.s32.totalorder %s24, 0
      %p87 = por %p85, %p86
      %p88 = scmp.ne.s32.totalorder %s76, %s77
      %p89 = scmp.eq.s32.totalorder %s25, 1
      %p90 = por %p88, %p89
      %p92 = scmp.ne.s32.totalorder %s77, %s91
      %p93 = scmp.eq.s32.totalorder %s25, 0
      %p94 = por %p92, %p93
      %s96 = sadd.s32 %s95, 1
      %p99 = scmp.eq.s32.totalorder %s19, 1
      %p100 = scmp.ne.s32.totalorder %s95, %s97
      %p101 = scmp.eq.s32.totalorder %s19, 0
      %p102 = por %p100, %p101
      %p103 = scmp.ne.s32.totalorder %s95, %s97
      %p104 = scmp.eq.s32.totalorder %s24, 1
      %p105 = por %p103, %p104
      %p106 = scmp.ne.s32.totalorder %s97, %s98
      %p107 = scmp.eq.s32.totalorder %s24, 0
      %p108 = por %p106, %p107
      %p109 = scmp.ne.s32.totalorder %s97, %s98
      %p110 = scmp.eq.s32.totalorder %s25, 1
      %p111 = por %p109, %p110
      %p113 = scmp.ne.s32.totalorder %s98, %s112
      %p114 = scmp.eq.s32.totalorder %s25, 0
      %p115 = por %p113, %p114
      %s117 = sadd.s32 %s116, 1
      %p120 = scmp.eq.s32.totalorder %s19, 1
      %p121 = scmp.ne.s32.totalorder %s116, %s118
      %p122 = scmp.eq.s32.totalorder %s19, 0
      %p123 = por %p121, %p122
      %p124 = scmp.ne.s32.totalorder %s116, %s118
      %p125 = scmp.eq.s32.totalorder %s24, 1
      %p126 = por %p124, %p125
      %p127 = scmp.ne.s32.totalorder %s118, %s119
      %p128 = scmp.eq.s32.totalorder %s24, 0
      %p129 = por %p127, %p128
      %p130 = scmp.ne.s32.totalorder %s118, %s119
      %p131 = scmp.eq.s32.totalorder %s25, 1
      %p132 = por %p130, %p131
      %p134 = scmp.ne.s32.totalorder %s119, %s133
      %p135 = scmp.eq.s32.totalorder %s25, 0
      %p136 = por %p134, %p135
      %s138 = sadd.s32 %s137, 1
      %p141 = scmp.eq.s32.totalorder %s19, 1
      %p142 = scmp.ne.s32.totalorder %s137, %s139
      %p143 = scmp.eq.s32.totalorder %s19, 0
      %p144 = por %p142, %p143
      %p145 = scmp.ne.s32.totalorder %s137, %s139
      %p146 = scmp.eq.s32.totalorder %s24, 1
      %p147 = por %p145, %p146
      %p148 = scmp.ne.s32.totalorder %s139, %s140
      %p149 = scmp.eq.s32.totalorder %s24, 0
      %p150 = por %p148, %p149
      %p151 = scmp.ne.s32.totalorder %s139, %s140
      %p152 = scmp.eq.s32.totalorder %s25, 1
      %p153 = por %p151, %p152
      %p155 = scmp.ne.s32.totalorder %s140, %s154
      %p156 = scmp.eq.s32.totalorder %s25, 0
      %p157 = por %p155, %p156
      %s159 = sadd.s32 %s158, 1
      %p162 = scmp.eq.s32.totalorder %s19, 1
      %p163 = scmp.ne.s32.totalorder %s158, %s160
      %p164 = scmp.eq.s32.totalorder %s19, 0
      %p165 = por %p163, %p164
      %p166 = scmp.ne.s32.totalorder %s158, %s160
      %p167 = scmp.eq.s32.totalorder %s24, 1
      %p168 = por %p166, %p167
      %p169 = scmp.ne.s32.totalorder %s160, %s161
      %p170 = scmp.eq.s32.totalorder %s24, 0
      %p171 = por %p169, %p170
      %p172 = scmp.ne.s32.totalorder %s160, %s161
      %p173 = scmp.eq.s32.totalorder %s25, 1
      %p174 = por %p172, %p173
      %p176 = scmp.ne.s32.totalorder %s161, %s175
      %p177 = scmp.eq.s32.totalorder %s25, 0
      %p178 = por %p176, %p177
      %s180 = sadd.s32 %s179, 1
      %p183 = scmp.eq.s32.totalorder %s19, 1
      %p184 = scmp.ne.s32.totalorder %s179, %s181
      %p185 = scmp.eq.s32.totalorder %s19, 0
      %p186 = por %p184, %p185
      %p187 = scmp.ne.s32.totalorder %s179, %s181
      %p188 = scmp.eq.s32.totalorder %s24, 1
      %p189 = por %p187, %p188
      %p190 = scmp.ne.s32.totalorder %s181, %s182
      %p191 = scmp.eq.s32.totalorder %s24, 0
      %p192 = por %p190, %p191
      %p193 = scmp.ne.s32.totalorder %s181, %s182
      %p194 = scmp.eq.s32.totalorder %s25, 1
      %p195 = por %p193, %p194
      %p197 = scmp.ne.s32.totalorder %s182, %s196
      %p198 = scmp.eq.s32.totalorder %s25, 0
      %p199 = por %p197, %p198
      %s201 = sadd.s32 %s200, 1
      %p204 = scmp.eq.s32.totalorder %s19, 1
      %p205 = scmp.ne.s32.totalorder %s200, %s202
      %p206 = scmp.eq.s32.totalorder %s19, 0
      %p207 = por %p205, %p206
      %p208 = scmp.ne.s32.totalorder %s200, %s202
      %p209 = scmp.eq.s32.totalorder %s24, 1
      %p210 = por %p208, %p209
      %p211 = scmp.ne.s32.totalorder %s202, %s203
      %p212 = scmp.eq.s32.totalorder %s24, 0
      %p213 = por %p211, %p212
      %p214 = scmp.ne.s32.totalorder %s202, %s203
      %p215 = scmp.eq.s32.totalorder %s25, 1
      %p216 = por %p214, %p215
      %p218 = scmp.ne.s32.totalorder %s203, %s217
      %p219 = scmp.eq.s32.totalorder %s25, 0
      %p220 = por %p218, %p219
      %s221 = ssub.s32 %s19, %s26
      %p222 = scmp.eq.s32.totalorder %s221, 0
      %s224 = sadd.s32 %s223, 1
      %s225 = scalar_select %p222, %s223, %s224
      %p228 = pneg %p222
      %p229 = scmp.eq.s32.totalorder %s19, 1
      %p230 = por %p228, %p229
      %p231 = scmp.ne.s32.totalorder %s223, %s226
      %p232 = scmp.eq.s32.totalorder %s19, 0
      %p233 = por %p231, %p232
      %p234 = scmp.ne.s32.totalorder %s223, %s226
      %p235 = scmp.eq.s32.totalorder %s24, 1
      %p236 = por %p234, %p235
      %p237 = scmp.ne.s32.totalorder %s226, %s227
      %p238 = scmp.eq.s32.totalorder %s24, 0
      %p239 = por %p237, %p238
      %p240 = scmp.ne.s32.totalorder %s226, %s227
      %p241 = scmp.eq.s32.totalorder %s25, 1
      %p242 = por %p240, %p241
      %p244 = scmp.ne.s32.totalorder %s227, %s243
      %p245 = scmp.eq.s32.totalorder %s25, 0
      %p246 = por %p244, %p245
      %p247 = scmp.le.s32.totalorder 1, %s19
      %p248 = scmp.lt.s32.totalorder %s19, 3
      %p249 = pnand %p247, %p248
      %p250 = pneg %p249
      // Predicated region
      $region9: #{tpu_custom_call.1} parent=5 // pred_check
        _
      $region10: #{tpu_custom_call.1} parent=5 // pred_check_branch
        %252 = sbr.rel (%p249) target = $region12
      $region11: #{tpu_custom_call.1} parent=5 // pred_region
        %s253 = ssub.s32 %s19, 1
        // Predicated region
        $region13: #{tpu_custom_call.1} parent=11 // pred_check
          %p254 = pneg %p66
        $region14: #{tpu_custom_call.1} parent=11 // pred_check_branch
          %256 = sbr.rel (%p254) target = $region16
        $region15: #{tpu_custom_call.1} parent=11 // pred_region
          _
        $region16: #{tpu_custom_call.1} parent=11 // pred_fallthru
          _
        // Predicated region
        $region17: #{tpu_custom_call.1} parent=11 // pred_check
          %p257 = pneg %p87
        $region18: #{tpu_custom_call.1} parent=11 // pred_check_branch
          %259 = sbr.rel (%p257) target = $region20
        $region19: #{tpu_custom_call.1} parent=11 // pred_region
          _
        $region20: #{tpu_custom_call.1} parent=11 // pred_fallthru
          _
        // Predicated region
        $region21: #{tpu_custom_call.1} parent=11 // pred_check
          %p260 = pneg %p108
        $region22: #{tpu_custom_call.1} parent=11 // pred_check_branch
          %262 = sbr.rel (%p260) target = $region24
        $region23: #{tpu_custom_call.1} parent=11 // pred_region
          _
        $region24: #{tpu_custom_call.1} parent=11 // pred_fallthru
          _
        // Predicated region
        $region25: #{tpu_custom_call.1} parent=11 // pred_check
          %p263 = pneg %p129
        $region26: #{tpu_custom_call.1} parent=11 // pred_check_branch
          %265 = sbr.rel (%p263) target = $region28
        $region27: #{tpu_custom_call.1} parent=11 // pred_region
          _
        $region28: #{tpu_custom_call.1} parent=11 // pred_fallthru
          _
        // Predicated region
        $region29: #{tpu_custom_call.1} parent=11 // pred_check
          %p266 = pneg %p150
        $region30: #{tpu_custom_call.1} parent=11 // pred_check_branch
          %268 = sbr.rel (%p266) target = $region32
        $region31: #{tpu_custom_call.1} parent=11 // pred_region
          _
        $region32: #{tpu_custom_call.1} parent=11 // pred_fallthru
          _
        // Predicated region
        $region33: #{tpu_custom_call.1} parent=11 // pred_check
          %p269 = pneg %p171
        $region34: #{tpu_custom_call.1} parent=11 // pred_check_branch
          %271 = sbr.rel (%p269) target = $region36
        $region35: #{tpu_custom_call.1} parent=11 // pred_region
          _
        $region36: #{tpu_custom_call.1} parent=11 // pred_fallthru
          _
        // Predicated region
        $region37: #{tpu_custom_call.1} parent=11 // pred_check
          %p272 = pneg %p192
        $region38: #{tpu_custom_call.1} parent=11 // pred_check_branch
          %274 = sbr.rel (%p272) target = $region40
        $region39: #{tpu_custom_call.1} parent=11 // pred_region
          _
        $region40: #{tpu_custom_call.1} parent=11 // pred_fallthru
          _
        // Predicated region
        $region41: #{tpu_custom_call.1} parent=11 // pred_check
          %p275 = pneg %p213
        $region42: #{tpu_custom_call.1} parent=11 // pred_check_branch
          %277 = sbr.rel (%p275) target = $region44
        $region43: #{tpu_custom_call.1} parent=11 // pred_region
          _
        $region44: #{tpu_custom_call.1} parent=11 // pred_fallthru
          _
      $region12: #{tpu_custom_call.1} parent=5 // pred_fallthru
        _
      %p278 = scmp.lt.s32.totalorder %s19, 2
      // Predicated region
      $region45: #{tpu_custom_call.1} parent=5 // pred_check
        %p279 = pneg %p278
      $region46: #{tpu_custom_call.1} parent=5 // pred_check_branch
        %281 = sbr.rel (%p279) target = $region48
      $region47: #{tpu_custom_call.1} parent=5 // pred_region
        // Predicated region
        $region49: #{tpu_custom_call.1} parent=47 // pred_check
          %p282 = pneg %p39
        $region50: #{tpu_custom_call.1} parent=47 // pred_check_branch
          %284 = sbr.rel (%p282) target = $region52
        $region51: #{tpu_custom_call.1} parent=47 // pred_region
          %p285 = scmp.lt.s32.totalorder %s19, 1
          %s286 = scalar_select %p285, %s19, 1
          %s287 = smul.addr %s286, 3
          %s288 = smul.addr %s287, 4
          %s289 = scalar_lea.vmem %s0, %s288
        $region52: #{tpu_custom_call.1} parent=47 // pred_fallthru
          _
      $region48: #{tpu_custom_call.1} parent=5 // pred_fallthru
        _
      %p290 = scmp.le.s32.totalorder 1, %s19
      %p291 = scmp.lt.s32.totalorder %s19, 3
      %p292 = pnand %p290, %p291
      %p293 = pneg %p292
      // Predicated region
      $region53: #{tpu_custom_call.1} parent=5 // pred_check
        _
      $region54: #{tpu_custom_call.1} parent=5 // pred_check_branch
        %295 = sbr.rel (%p292) target = $region56
      $region55: #{tpu_custom_call.1} parent=5 // pred_region
        %s296 = ssub.s32 %s19, 1
        %p297 = scmp.lt.s32.totalorder %s24, 1
        %s298 = scalar_select %p297, %s24, 1
        %s299 = smul.addr %s298, 3
        %s300 = smul.addr %s299, 4
        %s301 = scalar_lea.vmem %s0, %s300
        %p302 = pneg %p45
        %p303 = pneg %p42
        %p304 = pneg %p66
        %p305 = pneg %p63
        %p306 = pneg %p87
        %p307 = pneg %p84
        %p308 = pneg %p108
        %p309 = pneg %p105
        %p310 = pneg %p129
        %p311 = pneg %p126
        %p312 = pneg %p150
        %p313 = pneg %p147
        %p314 = pneg %p171
        %p315 = pneg %p168
        %p316 = pneg %p192
        %p317 = pneg %p189
        %p318 = pneg %p213
        %p319 = pneg %p210
        %p320 = pneg %p239
        %p321 = pneg %p236
        %s322 = sand.u32 %s226, 1
        %s323 = scalar_lea.sflag [#allocation5], %s322
        %s324 = sand.u32 %s226, 1
        %s325 = smul.addr %s324, 12
        %s326 = scalar_lea.vmem [#allocation4], %s325
        %p327 = scmp.lt.s32.totalorder %s24, 1
        %s328 = scalar_select %p327, %s24, 1
        %s329 = smul.addr %s328, 3
        %s330 = smul.addr %s329, 4
        %s331 = scalar_lea.vmem %s0, %s330
        %v332 = vld [vmem:[%s1] sm:$0xf]
        %v333 = vld [vmem:[%s331] sm:$0xff]
        %v334 = vld [vmem:[%s331 + $0x8] sm:$0xf]
        %s335 = scalar_lea.vmem %s1, 4
        %v336 = vld [vmem:[%s335] sm:$0xf]
        %v339 = vcombine.high %v333, %v333
        %340 = vrot.lane.b32.xlu0 %v333, 127
        %v341 = vpop.permute.xlu0 %340
        %342 = vrot.lane.b32.xlu0 %v339, 127
        %v343 = vpop.permute.xlu0 %342
        %344 = vrot.lane.b32.xlu0 %v334, 127
        %v345 = vpop.permute.xlu0 %344
        %vm346 = vcmask 1039360
        %v347 = vsel %vm346, %v341, %v343
        %v348 = vsel %vm346, %v343, %v345
        %vm349 = vcmask 31744
        %v351 = vsel %vm349, %v336, 0
        %vm353 = vcmask 1043456
        %v354 = vsel %vm353, %v347, 0
        %v356 = vsel %vm353, %v348, 0
        %v358 = vsel %vm353, %v345, 0
        %360 = vmatprep.subr.mxu0 %v356
        %361 = vmatpush1.msra.mxu0 %v354
        %362 = vmatprep.subr.mxu0 0.0
        %363 = vmatpush1.msra.mxu0 0.0
        %364 = vmatprep.subr.mxu0 0.0
        %365 = vmatpush1.msra.mxu0 0.0
        %366 = vmatprep.subr.mxu0 0.0
        %367 = vmatpush1.msra.mxu0 0.0
        %368 = vmatprep.subr.mxu0 0.0
        %369 = vmatpush1.msra.mxu0 0.0
        %370 = vmatprep.subr.mxu0 0.0
        %371 = vmatpush1.msra.mxu0 0.0
        %372 = vmatprep.subr.mxu0 0.0
        %373 = vmatpush1.msra.mxu0 0.0
        %374 = vmatprep.subr.mxu0 0.0
        %375 = vmatpush1.msra.mxu0 0.0
        %376 = vmatprep.subr.mxu0 0.0
        %377 = vmatpush1.msra.mxu0 0.0
        %378 = vmatprep.subr.mxu0 0.0
        %379 = vmatpush1.msra.mxu0 0.0
        %380 = vmatprep.subr.mxu0 0.0
        %381 = vmatpush1.msra.mxu0 0.0
        %382 = vmatprep.subr.mxu0 0.0
        %383 = vmatpush1.msra.mxu0 0.0
        %384 = vmatprep.subr.mxu0 0.0
        %385 = vmatpush1.msra.mxu0 0.0
        %386 = vmatprep.subr.mxu0 0.0
        %387 = vmatpush1.msra.mxu0 0.0
        %388 = vmatprep.subr.mxu0 0.0
        %389 = vmatpush1.msra.mxu0 0.0
        %390 = vmatprep.subr.mxu0 0.0
        %391 = vmatpush1.msra.mxu0 0.0
        %392 = vmatprep.subr.mxu0 0.0
        %393 = vmatpush1.msra.mxu0 0.0
        %394 = vmatprep.subr.mxu0 0.0
        %395 = vmatpush1.msra.mxu0 0.0
        %396 = vmatprep.subr.mxu0 0.0
        %397 = vmatpush1.msra.mxu0 0.0
        %398 = vmatprep.subr.mxu0 0.0
        %399 = vmatpush1.msra.mxu0 0.0
        %400 = vmatprep.subr.mxu0 0.0
        %401 = vmatpush1.msra.mxu0 0.0
        %402 = vmatprep.subr.mxu0 0.0
        %403 = vmatpush1.msra.mxu0 0.0
        %404 = vmatprep.subr.mxu0 0.0
        %405 = vmatpush1.msra.mxu0 0.0
        %406 = vmatprep.subr.mxu0 0.0
        %407 = vmatpush1.msra.mxu0 0.0
        %408 = vmatprep.subr.mxu0 0.0
        %409 = vmatpush1.msra.mxu0 0.0
        %410 = vmatprep.subr.mxu0 0.0
        %411 = vmatpush1.msra.mxu0 0.0
        %412 = vmatprep.subr.mxu0 0.0
        %413 = vmatpush1.msra.mxu0 0.0
        %414 = vmatprep.subr.mxu0 0.0
        %415 = vmatpush1.msra.mxu0 0.0
        %416 = vmatprep.subr.mxu0 0.0
        %417 = vmatpush1.msra.mxu0 0.0
        %418 = vmatprep.subr.mxu0 0.0
        %419 = vmatpush1.msra.mxu0 0.0
        %420 = vmatprep.subr.mxu0 0.0
        %421 = vmatpush1.msra.mxu0 0.0
        %422 = vmatprep.subr.mxu0 0.0
        %423 = vmatpush1.msra.mxu0 0.0
        %424 = vmatprep.mubr.f32.mxu0 0.0
        %425 = vmatmul.mubr.f32.gmra.mrb[0].mxu0 %v351
        %v426 = vpop.f32.mrb[0].mxu0
        %v427 = vadd.f32 0.0, %v426
        %v428 = vpop.f32.mrb[0].mxu0
        %v429 = vadd.f32 0.0, %v428
        %430 = vdwg.mxu0
        %431 = vmatprep.subr.mxu0 0.0
        %432 = vmatpush1.msra.mxu0 %v358
        %433 = vmatprep.subr.mxu0 0.0
        %434 = vmatpush1.msra.mxu0 0.0
        %435 = vmatprep.subr.mxu0 0.0
        %436 = vmatpush1.msra.mxu0 0.0
        %437 = vmatprep.subr.mxu0 0.0
        %438 = vmatpush1.msra.mxu0 0.0
        %439 = vmatprep.subr.mxu0 0.0
        %440 = vmatpush1.msra.mxu0 0.0
        %441 = vmatprep.subr.mxu0 0.0
        %442 = vmatpush1.msra.mxu0 0.0
        %443 = vmatprep.subr.mxu0 0.0
        %444 = vmatpush1.msra.mxu0 0.0
        %445 = vmatprep.subr.mxu0 0.0
        %446 = vmatpush1.msra.mxu0 0.0
        %447 = vmatprep.subr.mxu0 0.0
        %448 = vmatpush1.msra.mxu0 0.0
        %449 = vmatprep.subr.mxu0 0.0
        %450 = vmatpush1.msra.mxu0 0.0
        %451 = vmatprep.subr.mxu0 0.0
        %452 = vmatpush1.msra.mxu0 0.0
        %453 = vmatprep.subr.mxu0 0.0
        %454 = vmatpush1.msra.mxu0 0.0
        %455 = vmatprep.subr.mxu0 0.0
        %456 = vmatpush1.msra.mxu0 0.0
        %457 = vmatprep.subr.mxu0 0.0
        %458 = vmatpush1.msra.mxu0 0.0
        %459 = vmatprep.subr.mxu0 0.0
        %460 = vmatpush1.msra.mxu0 0.0
        %461 = vmatprep.subr.mxu0 0.0
        %462 = vmatpush1.msra.mxu0 0.0
        %463 = vmatprep.subr.mxu0 0.0
        %464 = vmatpush1.msra.mxu0 0.0
        %465 = vmatprep.subr.mxu0 0.0
        %466 = vmatpush1.msra.mxu0 0.0
        %467 = vmatprep.subr.mxu0 0.0
        %468 = vmatpush1.msra.mxu0 0.0
        %469 = vmatprep.subr.mxu0 0.0
        %470 = vmatpush1.msra.mxu0 0.0
        %471 = vmatprep.subr.mxu0 0.0
        %472 = vmatpush1.msra.mxu0 0.0
        %473 = vmatprep.subr.mxu0 0.0
        %474 = vmatpush1.msra.mxu0 0.0
        %475 = vmatprep.subr.mxu0 0.0
        %476 = vmatpush1.msra.mxu0 0.0
        %477 = vmatprep.subr.mxu0 0.0
        %478 = vmatpush1.msra.mxu0 0.0
        %479 = vmatprep.subr.mxu0 0.0
        %480 = vmatpush1.msra.mxu0 0.0
        %481 = vmatprep.subr.mxu0 0.0
        %482 = vmatpush1.msra.mxu0 0.0
        %483 = vmatprep.subr.mxu0 0.0
        %484 = vmatpush1.msra.mxu0 0.0
        %485 = vmatprep.subr.mxu0 0.0
        %486 = vmatpush1.msra.mxu0 0.0
        %487 = vmatprep.subr.mxu0 0.0
        %488 = vmatpush1.msra.mxu0 0.0
        %489 = vmatprep.subr.mxu0 0.0
        %490 = vmatpush1.msra.mxu0 0.0
        %491 = vmatprep.subr.mxu0 0.0
        %492 = vmatpush1.msra.mxu0 0.0
        %493 = vmatprep.subr.mxu0 0.0
        %494 = vmatpush1.msra.mxu0 0.0
        %495 = vmatprep.mubr.f32.mxu0 0.0
        %496 = vmatmul.mubr.f32.gmra.mrb[0].mxu0 %v351
        %v497 = vpop.f32.mrb[0].mxu0
        %v498 = vadd.f32 0.0, %v497
        %v499 = vpop.f32.mrb[0].mxu0
        %500 = vdwg.mxu0
        %v502 = vsel %vm349, %v332, 0
        %v504 = vsel %vm353, %v333, 0
        %v506 = vsel %vm353, %v339, 0
        %v508 = vsel %vm353, %v334, 0
        %510 = vmatprep.subr.mxu0 %v506
        %511 = vmatpush1.msra.mxu0 %v504
        %512 = vmatprep.subr.mxu0 0.0
        %513 = vmatpush1.msra.mxu0 0.0
        %514 = vmatprep.subr.mxu0 0.0
        %515 = vmatpush1.msra.mxu0 0.0
        %516 = vmatprep.subr.mxu0 0.0
        %517 = vmatpush1.msra.mxu0 0.0
        %518 = vmatprep.subr.mxu0 0.0
        %519 = vmatpush1.msra.mxu0 0.0
        %520 = vmatprep.subr.mxu0 0.0
        %521 = vmatpush1.msra.mxu0 0.0
        %522 = vmatprep.subr.mxu0 0.0
        %523 = vmatpush1.msra.mxu0 0.0
        %524 = vmatprep.subr.mxu0 0.0
        %525 = vmatpush1.msra.mxu0 0.0
        %526 = vmatprep.subr.mxu0 0.0
        %527 = vmatpush1.msra.mxu0 0.0
        %528 = vmatprep.subr.mxu0 0.0
        %529 = vmatpush1.msra.mxu0 0.0
        %530 = vmatprep.subr.mxu0 0.0
        %531 = vmatpush1.msra.mxu0 0.0
        %532 = vmatprep.subr.mxu0 0.0
        %533 = vmatpush1.msra.mxu0 0.0
        %534 = vmatprep.subr.mxu0 0.0
        %535 = vmatpush1.msra.mxu0 0.0
        %536 = vmatprep.subr.mxu0 0.0
        %537 = vmatpush1.msra.mxu0 0.0
        %538 = vmatprep.subr.mxu0 0.0
        %539 = vmatpush1.msra.mxu0 0.0
        %540 = vmatprep.subr.mxu0 0.0
        %541 = vmatpush1.msra.mxu0 0.0
        %542 = vmatprep.subr.mxu0 0.0
        %543 = vmatpush1.msra.mxu0 0.0
        %544 = vmatprep.subr.mxu0 0.0
        %545 = vmatpush1.msra.mxu0 0.0
        %546 = vmatprep.subr.mxu0 0.0
        %547 = vmatpush1.msra.mxu0 0.0
        %548 = vmatprep.subr.mxu0 0.0
        %549 = vmatpush1.msra.mxu0 0.0
        %550 = vmatprep.subr.mxu0 0.0
        %551 = vmatpush1.msra.mxu0 0.0
        %552 = vmatprep.subr.mxu0 0.0
        %553 = vmatpush1.msra.mxu0 0.0
        %554 = vmatprep.subr.mxu0 0.0
        %555 = vmatpush1.msra.mxu0 0.0
        %556 = vmatprep.subr.mxu0 0.0
        %557 = vmatpush1.msra.mxu0 0.0
        %558 = vmatprep.subr.mxu0 0.0
        %559 = vmatpush1.msra.mxu0 0.0
        %560 = vmatprep.subr.mxu0 0.0
        %561 = vmatpush1.msra.mxu0 0.0
        %562 = vmatprep.subr.mxu0 0.0
        %563 = vmatpush1.msra.mxu0 0.0
        %564 = vmatprep.subr.mxu0 0.0
        %565 = vmatpush1.msra.mxu0 0.0
        %566 = vmatprep.subr.mxu0 0.0
        %567 = vmatpush1.msra.mxu0 0.0
        %568 = vmatprep.subr.mxu0 0.0
        %569 = vmatpush1.msra.mxu0 0.0
        %570 = vmatprep.subr.mxu0 0.0
        %571 = vmatpush1.msra.mxu0 0.0
        %572 = vmatprep.subr.mxu0 0.0
        %573 = vmatpush1.msra.mxu0 0.0
        %574 = vmatprep.mubr.f32.mxu0 0.0
        %575 = vmatmul.mubr.f32.gmra.mrb[0].mxu0 %v502
        %v576 = vpop.f32.mrb[0].mxu0
        %v577 = vadd.f32 %v427, %v576
        %v578 = vpop.f32.mrb[0].mxu0
        %v579 = vadd.f32 %v429, %v578
        %580 = vdwg.mxu0
        %581 = vmatprep.subr.mxu0 0.0
        %582 = vmatpush1.msra.mxu0 %v508
        %583 = vmatprep.subr.mxu0 0.0
        %584 = vmatpush1.msra.mxu0 0.0
        %585 = vmatprep.subr.mxu0 0.0
        %586 = vmatpush1.msra.mxu0 0.0
        %587 = vmatprep.subr.mxu0 0.0
        %588 = vmatpush1.msra.mxu0 0.0
        %589 = vmatprep.subr.mxu0 0.0
        %590 = vmatpush1.msra.mxu0 0.0
        %591 = vmatprep.subr.mxu0 0.0
        %592 = vmatpush1.msra.mxu0 0.0
        %593 = vmatprep.subr.mxu0 0.0
        %594 = vmatpush1.msra.mxu0 0.0
        %595 = vmatprep.subr.mxu0 0.0
        %596 = vmatpush1.msra.mxu0 0.0
        %597 = vmatprep.subr.mxu0 0.0
        %598 = vmatpush1.msra.mxu0 0.0
        %599 = vmatprep.subr.mxu0 0.0
        %600 = vmatpush1.msra.mxu0 0.0
        %601 = vmatprep.subr.mxu0 0.0
        %602 = vmatpush1.msra.mxu0 0.0
        %603 = vmatprep.subr.mxu0 0.0
        %604 = vmatpush1.msra.mxu0 0.0
        %605 = vmatprep.subr.mxu0 0.0
        %606 = vmatpush1.msra.mxu0 0.0
        %607 = vmatprep.subr.mxu0 0.0
        %608 = vmatpush1.msra.mxu0 0.0
        %609 = vmatprep.subr.mxu0 0.0
        %610 = vmatpush1.msra.mxu0 0.0
        %611 = vmatprep.subr.mxu0 0.0
        %612 = vmatpush1.msra.mxu0 0.0
        %613 = vmatprep.subr.mxu0 0.0
        %614 = vmatpush1.msra.mxu0 0.0
        %615 = vmatprep.subr.mxu0 0.0
        %616 = vmatpush1.msra.mxu0 0.0
        %617 = vmatprep.subr.mxu0 0.0
        %618 = vmatpush1.msra.mxu0 0.0
        %619 = vmatprep.subr.mxu0 0.0
        %620 = vmatpush1.msra.mxu0 0.0
        %621 = vmatprep.subr.mxu0 0.0
        %622 = vmatpush1.msra.mxu0 0.0
        %623 = vmatprep.subr.mxu0 0.0
        %624 = vmatpush1.msra.mxu0 0.0
        %625 = vmatprep.subr.mxu0 0.0
        %626 = vmatpush1.msra.mxu0 0.0
        %627 = vmatprep.subr.mxu0 0.0
        %628 = vmatpush1.msra.mxu0 0.0
        %629 = vmatprep.subr.mxu0 0.0
        %630 = vmatpush1.msra.mxu0 0.0
        %631 = vmatprep.subr.mxu0 0.0
        %632 = vmatpush1.msra.mxu0 0.0
        %633 = vmatprep.subr.mxu0 0.0
        %634 = vmatpush1.msra.mxu0 0.0
        %635 = vmatprep.subr.mxu0 0.0
        %636 = vmatpush1.msra.mxu0 0.0
        %637 = vmatprep.subr.mxu0 0.0
        %638 = vmatpush1.msra.mxu0 0.0
        %639 = vmatprep.subr.mxu0 0.0
        %640 = vmatpush1.msra.mxu0 0.0
        %641 = vmatprep.subr.mxu0 0.0
        %642 = vmatpush1.msra.mxu0 0.0
        %643 = vmatprep.subr.mxu0 0.0
        %644 = vmatpush1.msra.mxu0 0.0
        %645 = vmatprep.mubr.f32.mxu0 0.0
        %646 = vmatmul.mubr.f32.gmra.mrb[0].mxu0 %v502
        %v647 = vpop.f32.mrb[0].mxu0
        %v648 = vadd.f32 %v498, %v647
        %v649 = vpop.f32.mrb[0].mxu0
        %650 = vdwg.mxu0
        %s651 = scalar_lea.vmem %s1, 8
        %v652 = vld [vmem:[%s651] sm:$0xf]
        %v653 = vld [vmem:[%s331] sm:$0xff]
        %v654 = vld [vmem:[%s331 + $0x8] sm:$0xf]
        %v657 = vcombine.high %v653, %v653
        %658 = vrot.lane.b32.xlu0 %v653, 126
        %v659 = vpop.permute.xlu0 %658
        %660 = vrot.lane.b32.xlu0 %v657, 126
        %v661 = vpop.permute.xlu0 %660
        %662 = vrot.lane.b32.xlu0 %v654, 126
        %v663 = vpop.permute.xlu0 %662
        %vm664 = vcmask 1031168
        %v665 = vsel %vm664, %v659, %v661
        %v666 = vsel %vm664, %v661, %v663
        %v668 = vsel %vm349, %v652, 0
        %v670 = vsel %vm353, %v665, 0
        %v672 = vsel %vm353, %v666, 0
        %v674 = vsel %vm353, %v663, 0
        %676 = vmatprep.subr.mxu0 %v672
        %677 = vmatpush1.msra.mxu0 %v670
        %678 = vmatprep.subr.mxu0 0.0
        %679 = vmatpush1.msra.mxu0 0.0
        %680 = vmatprep.subr.mxu0 0.0
        %681 = vmatpush1.msra.mxu0 0.0
        %682 = vmatprep.subr.mxu0 0.0
        %683 = vmatpush1.msra.mxu0 0.0
        %684 = vmatprep.subr.mxu0 0.0
        %685 = vmatpush1.msra.mxu0 0.0
        %686 = vmatprep.subr.mxu0 0.0
        %687 = vmatpush1.msra.mxu0 0.0
        %688 = vmatprep.subr.mxu0 0.0
        %689 = vmatpush1.msra.mxu0 0.0
        %690 = vmatprep.subr.mxu0 0.0
        %691 = vmatpush1.msra.mxu0 0.0
        %692 = vmatprep.subr.mxu0 0.0
        %693 = vmatpush1.msra.mxu0 0.0
        %694 = vmatprep.subr.mxu0 0.0
        %695 = vmatpush1.msra.mxu0 0.0
        %696 = vmatprep.subr.mxu0 0.0
        %697 = vmatpush1.msra.mxu0 0.0
        %698 = vmatprep.subr.mxu0 0.0
        %699 = vmatpush1.msra.mxu0 0.0
        %700 = vmatprep.subr.mxu0 0.0
        %701 = vmatpush1.msra.mxu0 0.0
        %702 = vmatprep.subr.mxu0 0.0
        %703 = vmatpush1.msra.mxu0 0.0
        %704 = vmatprep.subr.mxu0 0.0
        %705 = vmatpush1.msra.mxu0 0.0
        %706 = vmatprep.subr.mxu0 0.0
        %707 = vmatpush1.msra.mxu0 0.0
        %708 = vmatprep.subr.mxu0 0.0
        %709 = vmatpush1.msra.mxu0 0.0
        %710 = vmatprep.subr.mxu0 0.0
        %711 = vmatpush1.msra.mxu0 0.0
        %712 = vmatprep.subr.mxu0 0.0
        %713 = vmatpush1.msra.mxu0 0.0
        %714 = vmatprep.subr.mxu0 0.0
        %715 = vmatpush1.msra.mxu0 0.0
        %716 = vmatprep.subr.mxu0 0.0
        %717 = vmatpush1.msra.mxu0 0.0
        %718 = vmatprep.subr.mxu0 0.0
        %719 = vmatpush1.msra.mxu0 0.0
        %720 = vmatprep.subr.mxu0 0.0
        %721 = vmatpush1.msra.mxu0 0.0
        %722 = vmatprep.subr.mxu0 0.0
        %723 = vmatpush1.msra.mxu0 0.0
        %724 = vmatprep.subr.mxu0 0.0
        %725 = vmatpush1.msra.mxu0 0.0
        %726 = vmatprep.subr.mxu0 0.0
        %727 = vmatpush1.msra.mxu0 0.0
        %728 = vmatprep.subr.mxu0 0.0
        %729 = vmatpush1.msra.mxu0 0.0
        %730 = vmatprep.subr.mxu0 0.0
        %731 = vmatpush1.msra.mxu0 0.0
        %732 = vmatprep.subr.mxu0 0.0
        %733 = vmatpush1.msra.mxu0 0.0
        %734 = vmatprep.subr.mxu0 0.0
        %735 = vmatpush1.msra.mxu0 0.0
        %736 = vmatprep.subr.mxu0 0.0
        %737 = vmatpush1.msra.mxu0 0.0
        %738 = vmatprep.subr.mxu0 0.0
        %739 = vmatpush1.msra.mxu0 0.0
        %740 = vmatprep.mubr.f32.mxu0 0.0
        %741 = vmatmul.mubr.f32.gmra.mrb[0].mxu0 %v668
        %v742 = vpop.f32.mrb[0].mxu0
        %v743 = vadd.f32 0.0, %v742
        %v744 = vpop.f32.mrb[0].mxu0
        %v745 = vadd.f32 0.0, %v744
        %746 = vdwg.mxu0
        %747 = vmatprep.subr.mxu0 0.0
        %748 = vmatpush1.msra.mxu0 %v674
        %749 = vmatprep.subr.mxu0 0.0
        %750 = vmatpush1.msra.mxu0 0.0
        %751 = vmatprep.subr.mxu0 0.0
        %752 = vmatpush1.msra.mxu0 0.0
        %753 = vmatprep.subr.mxu0 0.0
        %754 = vmatpush1.msra.mxu0 0.0
        %755 = vmatprep.subr.mxu0 0.0
        %756 = vmatpush1.msra.mxu0 0.0
        %757 = vmatprep.subr.mxu0 0.0
        %758 = vmatpush1.msra.mxu0 0.0
        %759 = vmatprep.subr.mxu0 0.0
        %760 = vmatpush1.msra.mxu0 0.0
        %761 = vmatprep.subr.mxu0 0.0
        %762 = vmatpush1.msra.mxu0 0.0
        %763 = vmatprep.subr.mxu0 0.0
        %764 = vmatpush1.msra.mxu0 0.0
        %765 = vmatprep.subr.mxu0 0.0
        %766 = vmatpush1.msra.mxu0 0.0
        %767 = vmatprep.subr.mxu0 0.0
        %768 = vmatpush1.msra.mxu0 0.0
        %769 = vmatprep.subr.mxu0 0.0
        %770 = vmatpush1.msra.mxu0 0.0
        %771 = vmatprep.subr.mxu0 0.0
        %772 = vmatpush1.msra.mxu0 0.0
        %773 = vmatprep.subr.mxu0 0.0
        %774 = vmatpush1.msra.mxu0 0.0
        %775 = vmatprep.subr.mxu0 0.0
        %776 = vmatpush1.msra.mxu0 0.0
        %777 = vmatprep.subr.mxu0 0.0
        %778 = vmatpush1.msra.mxu0 0.0
        %779 = vmatprep.subr.mxu0 0.0
        %780 = vmatpush1.msra.mxu0 0.0
        %781 = vmatprep.subr.mxu0 0.0
        %782 = vmatpush1.msra.mxu0 0.0
        %783 = vmatprep.subr.mxu0 0.0
        %784 = vmatpush1.msra.mxu0 0.0
        %785 = vmatprep.subr.mxu0 0.0
        %786 = vmatpush1.msra.mxu0 0.0
        %787 = vmatprep.subr.mxu0 0.0
        %788 = vmatpush1.msra.mxu0 0.0
        %789 = vmatprep.subr.mxu0 0.0
        %790 = vmatpush1.msra.mxu0 0.0
        %791 = vmatprep.subr.mxu0 0.0
        %792 = vmatpush1.msra.mxu0 0.0
        %793 = vmatprep.subr.mxu0 0.0
        %794 = vmatpush1.msra.mxu0 0.0
        %795 = vmatprep.subr.mxu0 0.0
        %796 = vmatpush1.msra.mxu0 0.0
        %797 = vmatprep.subr.mxu0 0.0
        %798 = vmatpush1.msra.mxu0 0.0
        %799 = vmatprep.subr.mxu0 0.0
        %800 = vmatpush1.msra.mxu0 0.0
        %801 = vmatprep.subr.mxu0 0.0
        %802 = vmatpush1.msra.mxu0 0.0
        %803 = vmatprep.subr.mxu0 0.0
        %804 = vmatpush1.msra.mxu0 0.0
        %805 = vmatprep.subr.mxu0 0.0
        %806 = vmatpush1.msra.mxu0 0.0
        %807 = vmatprep.subr.mxu0 0.0
        %808 = vmatpush1.msra.mxu0 0.0
        %809 = vmatprep.subr.mxu0 0.0
        %810 = vmatpush1.msra.mxu0 0.0
        %811 = vmatprep.mubr.f32.mxu0 0.0
        %812 = vmatmul.mubr.f32.gmra.mrb[0].mxu0 %v668
        %v813 = vpop.f32.mrb[0].mxu0
        %v814 = vadd.f32 0.0, %v813
        %v815 = vpop.f32.mrb[0].mxu0
        %816 = vdwg.mxu0
        %v817 = vadd.f32 %v577, %v743
        %v818 = vadd.f32 %v579, %v745
        %v819 = vadd.f32 %v648, %v814
        %s820 = scalar_lea.vmem %s1, 12
        %v821 = vld [vmem:[%s820] sm:$0xf]
        %v822 = vld [vmem:[%s331] sm:$0xff]
        %v823 = vld [vmem:[%s331 + $0x8] sm:$0xf]
        %v826 = vcombine.high %v822, %v822
        %827 = vrot.lane.b32.xlu0 %v822, 110
        %v828 = vpop.permute.xlu0 %827
        %829 = vrot.lane.b32.xlu0 %v826, 110
        %v830 = vpop.permute.xlu0 %829
        %831 = vrot.lane.b32.xlu0 %v823, 110
        %v832 = vpop.permute.xlu0 %831
        %vm833 = vcmask 900096
        %v834 = vsel %vm833, %v828, %v830
        %v835 = vsel %vm833, %v830, %v832
        %v837 = vsel %vm349, %v821, 0
        %v839 = vsel %vm353, %v834, 0
        %v841 = vsel %vm353, %v835, 0
        %v843 = vsel %vm353, %v832, 0
        %845 = vmatprep.subr.mxu0 %v841
        %846 = vmatpush1.msra.mxu0 %v839
        %847 = vmatprep.subr.mxu0 0.0
        %848 = vmatpush1.msra.mxu0 0.0
        %849 = vmatprep.subr.mxu0 0.0
        %850 = vmatpush1.msra.mxu0 0.0
        %851 = vmatprep.subr.mxu0 0.0
        %852 = vmatpush1.msra.mxu0 0.0
        %853 = vmatprep.subr.mxu0 0.0
        %854 = vmatpush1.msra.mxu0 0.0
        %855 = vmatprep.subr.mxu0 0.0
        %856 = vmatpush1.msra.mxu0 0.0
        %857 = vmatprep.subr.mxu0 0.0
        %858 = vmatpush1.msra.mxu0 0.0
        %859 = vmatprep.subr.mxu0 0.0
        %860 = vmatpush1.msra.mxu0 0.0
        %861 = vmatprep.subr.mxu0 0.0
        %862 = vmatpush1.msra.mxu0 0.0
        %863 = vmatprep.subr.mxu0 0.0
        %864 = vmatpush1.msra.mxu0 0.0
        %865 = vmatprep.subr.mxu0 0.0
        %866 = vmatpush1.msra.mxu0 0.0
        %867 = vmatprep.subr.mxu0 0.0
        %868 = vmatpush1.msra.mxu0 0.0
        %869 = vmatprep.subr.mxu0 0.0
        %870 = vmatpush1.msra.mxu0 0.0
        %871 = vmatprep.subr.mxu0 0.0
        %872 = vmatpush1.msra.mxu0 0.0
        %873 = vmatprep.subr.mxu0 0.0
        %874 = vmatpush1.msra.mxu0 0.0
        %875 = vmatprep.subr.mxu0 0.0
        %876 = vmatpush1.msra.mxu0 0.0
        %877 = vmatprep.subr.mxu0 0.0
        %878 = vmatpush1.msra.mxu0 0.0
        %879 = vmatprep.subr.mxu0 0.0
        %880 = vmatpush1.msra.mxu0 0.0
        %881 = vmatprep.subr.mxu0 0.0
        %882 = vmatpush1.msra.mxu0 0.0
        %883 = vmatprep.subr.mxu0 0.0
        %884 = vmatpush1.msra.mxu0 0.0
        %885 = vmatprep.subr.mxu0 0.0
        %886 = vmatpush1.msra.mxu0 0.0
        %887 = vmatprep.subr.mxu0 0.0
        %888 = vmatpush1.msra.mxu0 0.0
        %889 = vmatprep.subr.mxu0 0.0
        %890 = vmatpush1.msra.mxu0 0.0
        %891 = vmatprep.subr.mxu0 0.0
        %892 = vmatpush1.msra.mxu0 0.0
        %893 = vmatprep.subr.mxu0 0.0
        %894 = vmatpush1.msra.mxu0 0.0
        %895 = vmatprep.subr.mxu0 0.0
        %896 = vmatpush1.msra.mxu0 0.0
        %897 = vmatprep.subr.mxu0 0.0
        %898 = vmatpush1.msra.mxu0 0.0
        %899 = vmatprep.subr.mxu0 0.0
        %900 = vmatpush1.msra.mxu0 0.0
        %901 = vmatprep.subr.mxu0 0.0
        %902 = vmatpush1.msra.mxu0 0.0
        %903 = vmatprep.subr.mxu0 0.0
        %904 = vmatpush1.msra.mxu0 0.0
        %905 = vmatprep.subr.mxu0 0.0
        %906 = vmatpush1.msra.mxu0 0.0
        %907 = vmatprep.subr.mxu0 0.0
        %908 = vmatpush1.msra.mxu0 0.0
        %909 = vmatprep.mubr.f32.mxu0 0.0
        %910 = vmatmul.mubr.f32.gmra.mrb[0].mxu0 %v837
        %v911 = vpop.f32.mrb[0].mxu0
        %v912 = vadd.f32 0.0, %v911
        %v913 = vpop.f32.mrb[0].mxu0
        %v914 = vadd.f32 0.0, %v913
        %915 = vdwg.mxu0
        %916 = vmatprep.subr.mxu0 0.0
        %917 = vmatpush1.msra.mxu0 %v843
        %918 = vmatprep.subr.mxu0 0.0
        %919 = vmatpush1.msra.mxu0 0.0
        %920 = vmatprep.subr.mxu0 0.0
        %921 = vmatpush1.msra.mxu0 0.0
        %922 = vmatprep.subr.mxu0 0.0
        %923 = vmatpush1.msra.mxu0 0.0
        %924 = vmatprep.subr.mxu0 0.0
        %925 = vmatpush1.msra.mxu0 0.0
        %926 = vmatprep.subr.mxu0 0.0
        %927 = vmatpush1.msra.mxu0 0.0
        %928 = vmatprep.subr.mxu0 0.0
        %929 = vmatpush1.msra.mxu0 0.0
        %930 = vmatprep.subr.mxu0 0.0
        %931 = vmatpush1.msra.mxu0 0.0
        %932 = vmatprep.subr.mxu0 0.0
        %933 = vmatpush1.msra.mxu0 0.0
        %934 = vmatprep.subr.mxu0 0.0
        %935 = vmatpush1.msra.mxu0 0.0
        %936 = vmatprep.subr.mxu0 0.0
        %937 = vmatpush1.msra.mxu0 0.0
        %938 = vmatprep.subr.mxu0 0.0
        %939 = vmatpush1.msra.mxu0 0.0
        %940 = vmatprep.subr.mxu0 0.0
        %941 = vmatpush1.msra.mxu0 0.0
        %942 = vmatprep.subr.mxu0 0.0
        %943 = vmatpush1.msra.mxu0 0.0
        %944 = vmatprep.subr.mxu0 0.0
        %945 = vmatpush1.msra.mxu0 0.0
        %946 = vmatprep.subr.mxu0 0.0
        %947 = vmatpush1.msra.mxu0 0.0
        %948 = vmatprep.subr.mxu0 0.0
        %949 = vmatpush1.msra.mxu0 0.0
        %950 = vmatprep.subr.mxu0 0.0
        %951 = vmatpush1.msra.mxu0 0.0
        %952 = vmatprep.subr.mxu0 0.0
        %953 = vmatpush1.msra.mxu0 0.0
        %954 = vmatprep.subr.mxu0 0.0
        %955 = vmatpush1.msra.mxu0 0.0
        %956 = vmatprep.subr.mxu0 0.0
        %957 = vmatpush1.msra.mxu0 0.0
        %958 = vmatprep.subr.mxu0 0.0
        %959 = vmatpush1.msra.mxu0 0.0
        %960 = vmatprep.subr.mxu0 0.0
        %961 = vmatpush1.msra.mxu0 0.0
        %962 = vmatprep.subr.mxu0 0.0
        %963 = vmatpush1.msra.mxu0 0.0
        %964 = vmatprep.subr.mxu0 0.0
        %965 = vmatpush1.msra.mxu0 0.0
        %966 = vmatprep.subr.mxu0 0.0
        %967 = vmatpush1.msra.mxu0 0.0
        %968 = vmatprep.subr.mxu0 0.0
        %969 = vmatpush1.msra.mxu0 0.0
        %970 = vmatprep.subr.mxu0 0.0
        %971 = vmatpush1.msra.mxu0 0.0
        %972 = vmatprep.subr.mxu0 0.0
        %973 = vmatpush1.msra.mxu0 0.0
        %974 = vmatprep.subr.mxu0 0.0
        %975 = vmatpush1.msra.mxu0 0.0
        %976 = vmatprep.subr.mxu0 0.0
        %977 = vmatpush1.msra.mxu0 0.0
        %978 = vmatprep.subr.mxu0 0.0
        %979 = vmatpush1.msra.mxu0 0.0
        %980 = vmatprep.mubr.f32.mxu0 0.0
        %981 = vmatmul.mubr.f32.gmra.mrb[0].mxu0 %v837
        %v982 = vpop.f32.mrb[0].mxu0
        %v983 = vadd.f32 0.0, %v982
        %v984 = vpop.f32.mrb[0].mxu0
        %985 = vdwg.mxu0
        %v986 = vadd.f32 %v817, %v912
        %v987 = vadd.f32 %v818, %v914
        %v988 = vadd.f32 %v819, %v983
        %s989 = scalar_lea.vmem %s1, 16
        %v990 = vld [vmem:[%s989] sm:$0xf]
        %v991 = vld [vmem:[%s331] sm:$0xff]
        %v992 = vld [vmem:[%s331 + $0x8] sm:$0xf]
        %v995 = vcombine.high %v991, %v991
        %996 = vrot.lane.b32.xlu0 %v991, 109
        %v997 = vpop.permute.xlu0 %996
        %998 = vrot.lane.b32.xlu0 %v995, 109
        %v999 = vpop.permute.xlu0 %998
        %1000 = vrot.lane.b32.xlu0 %v992, 109
        %v1001 = vpop.permute.xlu0 %1000
        %vm1002 = vcmask 891904
        %v1003 = vsel %vm1002, %v997, %v999
        %v1004 = vsel %vm1002, %v999, %v1001
        %v1006 = vsel %vm349, %v990, 0
        %v1008 = vsel %vm353, %v1003, 0
        %v1010 = vsel %vm353, %v1004, 0
        %v1012 = vsel %vm353, %v1001, 0
        %1014 = vmatprep.subr.mxu0 %v1010
        %1015 = vmatpush1.msra.mxu0 %v1008
        %1016 = vmatprep.subr.mxu0 0.0
        %1017 = vmatpush1.msra.mxu0 0.0
        %1018 = vmatprep.subr.mxu0 0.0
        %1019 = vmatpush1.msra.mxu0 0.0
        %1020 = vmatprep.subr.mxu0 0.0
        %1021 = vmatpush1.msra.mxu0 0.0
        %1022 = vmatprep.subr.mxu0 0.0
        %1023 = vmatpush1.msra.mxu0 0.0
        %1024 = vmatprep.subr.mxu0 0.0
        %1025 = vmatpush1.msra.mxu0 0.0
        %1026 = vmatprep.subr.mxu0 0.0
        %1027 = vmatpush1.msra.mxu0 0.0
        %1028 = vmatprep.subr.mxu0 0.0
        %1029 = vmatpush1.msra.mxu0 0.0
        %1030 = vmatprep.subr.mxu0 0.0
        %1031 = vmatpush1.msra.mxu0 0.0
        %1032 = vmatprep.subr.mxu0 0.0
        %1033 = vmatpush1.msra.mxu0 0.0
        %1034 = vmatprep.subr.mxu0 0.0
        %1035 = vmatpush1.msra.mxu0 0.0
        %1036 = vmatprep.subr.mxu0 0.0
        %1037 = vmatpush1.msra.mxu0 0.0
        %1038 = vmatprep.subr.mxu0 0.0
        %1039 = vmatpush1.msra.mxu0 0.0
        %1040 = vmatprep.subr.mxu0 0.0
        %1041 = vmatpush1.msra.mxu0 0.0
        %1042 = vmatprep.subr.mxu0 0.0
        %1043 = vmatpush1.msra.mxu0 0.0
        %1044 = vmatprep.subr.mxu0 0.0
        %1045 = vmatpush1.msra.mxu0 0.0
        %1046 = vmatprep.subr.mxu0 0.0
        %1047 = vmatpush1.msra.mxu0 0.0
        %1048 = vmatprep.subr.mxu0 0.0
        %1049 = vmatpush1.msra.mxu0 0.0
        %1050 = vmatprep.subr.mxu0 0.0
        %1051 = vmatpush1.msra.mxu0 0.0
        %1052 = vmatprep.subr.mxu0 0.0
        %1053 = vmatpush1.msra.mxu0 0.0
        %1054 = vmatprep.subr.mxu0 0.0
        %1055 = vmatpush1.msra.mxu0 0.0
        %1056 = vmatprep.subr.mxu0 0.0
        %1057 = vmatpush1.msra.mxu0 0.0
        %1058 = vmatprep.subr.mxu0 0.0
        %1059 = vmatpush1.msra.mxu0 0.0
        %1060 = vmatprep.subr.mxu0 0.0
        %1061 = vmatpush1.msra.mxu0 0.0
        %1062 = vmatprep.subr.mxu0 0.0
        %1063 = vmatpush1.msra.mxu0 0.0
        %1064 = vmatprep.subr.mxu0 0.0
        %1065 = vmatpush1.msra.mxu0 0.0
        %1066 = vmatprep.subr.mxu0 0.0
        %1067 = vmatpush1.msra.mxu0 0.0
        %1068 = vmatprep.subr.mxu0 0.0
        %1069 = vmatpush1.msra.mxu0 0.0
        %1070 = vmatprep.subr.mxu0 0.0
        %1071 = vmatpush1.msra.mxu0 0.0
        %1072 = vmatprep.subr.mxu0 0.0
        %1073 = vmatpush1.msra.mxu0 0.0
        %1074 = vmatprep.subr.mxu0 0.0
        %1075 = vmatpush1.msra.mxu0 0.0
        %1076 = vmatprep.subr.mxu0 0.0
        %1077 = vmatpush1.msra.mxu0 0.0
        %1078 = vmatprep.mubr.f32.mxu0 0.0
        %1079 = vmatmul.mubr.f32.gmra.mrb[0].mxu0 %v1006
        %v1080 = vpop.f32.mrb[0].mxu0
        %v1081 = vadd.f32 0.0, %v1080
        %v1082 = vpop.f32.mrb[0].mxu0
        %v1083 = vadd.f32 0.0, %v1082
        %1084 = vdwg.mxu0
        %1085 = vmatprep.subr.mxu0 0.0
        %1086 = vmatpush1.msra.mxu0 %v1012
        %1087 = vmatprep.subr.mxu0 0.0
        %1088 = vmatpush1.msra.mxu0 0.0
        %1089 = vmatprep.subr.mxu0 0.0
        %1090 = vmatpush1.msra.mxu0 0.0
        %1091 = vmatprep.subr.mxu0 0.0
        %1092 = vmatpush1.msra.mxu0 0.0
        %1093 = vmatprep.subr.mxu0 0.0
        %1094 = vmatpush1.msra.mxu0 0.0
        %1095 = vmatprep.subr.mxu0 0.0
        %1096 = vmatpush1.msra.mxu0 0.0
        %1097 = vmatprep.subr.mxu0 0.0
        %1098 = vmatpush1.msra.mxu0 0.0
        %1099 = vmatprep.subr.mxu0 0.0
        %1100 = vmatpush1.msra.mxu0 0.0
        %1101 = vmatprep.subr.mxu0 0.0
        %1102 = vmatpush1.msra.mxu0 0.0
        %1103 = vmatprep.subr.mxu0 0.0
        %1104 = vmatpush1.msra.mxu0 0.0
        %1105 = vmatprep.subr.mxu0 0.0
        %1106 = vmatpush1.msra.mxu0 0.0
        %1107 = vmatprep.subr.mxu0 0.0
        %1108 = vmatpush1.msra.mxu0 0.0
        %1109 = vmatprep.subr.mxu0 0.0
        %1110 = vmatpush1.msra.mxu0 0.0
        %1111 = vmatprep.subr.mxu0 0.0
        %1112 = vmatpush1.msra.mxu0 0.0
        %1113 = vmatprep.subr.mxu0 0.0
        %1114 = vmatpush1.msra.mxu0 0.0
        %1115 = vmatprep.subr.mxu0 0.0
        %1116 = vmatpush1.msra.mxu0 0.0
        %1117 = vmatprep.subr.mxu0 0.0
        %1118 = vmatpush1.msra.mxu0 0.0
        %1119 = vmatprep.subr.mxu0 0.0
        %1120 = vmatpush1.msra.mxu0 0.0
        %1121 = vmatprep.subr.mxu0 0.0
        %1122 = vmatpush1.msra.mxu0 0.0
        %1123 = vmatprep.subr.mxu0 0.0
        %1124 = vmatpush1.msra.mxu0 0.0
        %1125 = vmatprep.subr.mxu0 0.0
        %1126 = vmatpush1.msra.mxu0 0.0
        %1127 = vmatprep.subr.mxu0 0.0
        %1128 = vmatpush1.msra.mxu0 0.0
        %1129 = vmatprep.subr.mxu0 0.0
        %1130 = vmatpush1.msra.mxu0 0.0
        %1131 = vmatprep.subr.mxu0 0.0
        %1132 = vmatpush1.msra.mxu0 0.0
        %1133 = vmatprep.subr.mxu0 0.0
        %1134 = vmatpush1.msra.mxu0 0.0
        %1135 = vmatprep.subr.mxu0 0.0
        %1136 = vmatpush1.msra.mxu0 0.0
        %1137 = vmatprep.subr.mxu0 0.0
        %1138 = vmatpush1.msra.mxu0 0.0
        %1139 = vmatprep.subr.mxu0 0.0
        %1140 = vmatpush1.msra.mxu0 0.0
        %1141 = vmatprep.subr.mxu0 0.0
        %1142 = vmatpush1.msra.mxu0 0.0
        %1143 = vmatprep.subr.mxu0 0.0
        %1144 = vmatpush1.msra.mxu0 0.0
        %1145 = vmatprep.subr.mxu0 0.0
        %1146 = vmatpush1.msra.mxu0 0.0
        %1147 = vmatprep.subr.mxu0 0.0
        %1148 = vmatpush1.msra.mxu0 0.0
        %1149 = vmatprep.mubr.f32.mxu0 0.0
        %1150 = vmatmul.mubr.f32.gmra.mrb[0].mxu0 %v1006
        %v1151 = vpop.f32.mrb[0].mxu0
        %v1152 = vadd.f32 0.0, %v1151
        %v1153 = vpop.f32.mrb[0].mxu0
        %1154 = vdwg.mxu0
        %v1155 = vadd.f32 %v986, %v1081
        %v1156 = vadd.f32 %v987, %v1083
        %v1157 = vadd.f32 %v988, %v1152
        %s1158 = scalar_lea.vmem %s1, 20
        %v1159 = vld [vmem:[%s1158] sm:$0xf]
        %v1160 = vld [vmem:[%s331] sm:$0xff]
        %v1161 = vld [vmem:[%s331 + $0x8] sm:$0xf]
        %v1164 = vcombine.high %v1160, %v1160
        %1165 = vrot.lane.b32.xlu0 %v1160, 108
        %v1166 = vpop.permute.xlu0 %1165
        %1167 = vrot.lane.b32.xlu0 %v1164, 108
        %v1168 = vpop.permute.xlu0 %1167
        %1169 = vrot.lane.b32.xlu0 %v1161, 108
        %v1170 = vpop.permute.xlu0 %1169
        %vm1171 = vcmask 883712
        %v1172 = vsel %vm1171, %v1166, %v1168
        %v1173 = vsel %vm1171, %v1168, %v1170
        %v1175 = vsel %vm349, %v1159, 0
        %v1177 = vsel %vm353, %v1172, 0
        %v1179 = vsel %vm353, %v1173, 0
        %v1181 = vsel %vm353, %v1170, 0
        %1183 = vmatprep.subr.mxu0 %v1179
        %1184 = vmatpush1.msra.mxu0 %v1177
        %1185 = vmatprep.subr.mxu0 0.0
        %1186 = vmatpush1.msra.mxu0 0.0
        %1187 = vmatprep.subr.mxu0 0.0
        %1188 = vmatpush1.msra.mxu0 0.0
        %1189 = vmatprep.subr.mxu0 0.0
        %1190 = vmatpush1.msra.mxu0 0.0
        %1191 = vmatprep.subr.mxu0 0.0
        %1192 = vmatpush1.msra.mxu0 0.0
        %1193 = vmatprep.subr.mxu0 0.0
        %1194 = vmatpush1.msra.mxu0 0.0
        %1195 = vmatprep.subr.mxu0 0.0
        %1196 = vmatpush1.msra.mxu0 0.0
        %1197 = vmatprep.subr.mxu0 0.0
        %1198 = vmatpush1.msra.mxu0 0.0
        %1199 = vmatprep.subr.mxu0 0.0
        %1200 = vmatpush1.msra.mxu0 0.0
        %1201 = vmatprep.subr.mxu0 0.0
        %1202 = vmatpush1.msra.mxu0 0.0
        %1203 = vmatprep.subr.mxu0 0.0
        %1204 = vmatpush1.msra.mxu0 0.0
        %1205 = vmatprep.subr.mxu0 0.0
        %1206 = vmatpush1.msra.mxu0 0.0
        %1207 = vmatprep.subr.mxu0 0.0
        %1208 = vmatpush1.msra.mxu0 0.0
        %1209 = vmatprep.subr.mxu0 0.0
        %1210 = vmatpush1.msra.mxu0 0.0
        %1211 = vmatprep.subr.mxu0 0.0
        %1212 = vmatpush1.msra.mxu0 0.0
        %1213 = vmatprep.subr.mxu0 0.0
        %1214 = vmatpush1.msra.mxu0 0.0
        %1215 = vmatprep.subr.mxu0 0.0
        %1216 = vmatpush1.msra.mxu0 0.0
        %1217 = vmatprep.subr.mxu0 0.0
        %1218 = vmatpush1.msra.mxu0 0.0
        %1219 = vmatprep.subr.mxu0 0.0
        %1220 = vmatpush1.msra.mxu0 0.0
        %1221 = vmatprep.subr.mxu0 0.0
        %1222 = vmatpush1.msra.mxu0 0.0
        %1223 = vmatprep.subr.mxu0 0.0
        %1224 = vmatpush1.msra.mxu0 0.0
        %1225 = vmatprep.subr.mxu0 0.0
        %1226 = vmatpush1.msra.mxu0 0.0
        %1227 = vmatprep.subr.mxu0 0.0
        %1228 = vmatpush1.msra.mxu0 0.0
        %1229 = vmatprep.subr.mxu0 0.0
        %1230 = vmatpush1.msra.mxu0 0.0
        %1231 = vmatprep.subr.mxu0 0.0
        %1232 = vmatpush1.msra.mxu0 0.0
        %1233 = vmatprep.subr.mxu0 0.0
        %1234 = vmatpush1.msra.mxu0 0.0
        %1235 = vmatprep.subr.mxu0 0.0
        %1236 = vmatpush1.msra.mxu0 0.0
        %1237 = vmatprep.subr.mxu0 0.0
        %1238 = vmatpush1.msra.mxu0 0.0
        %1239 = vmatprep.subr.mxu0 0.0
        %1240 = vmatpush1.msra.mxu0 0.0
        %1241 = vmatprep.subr.mxu0 0.0
        %1242 = vmatpush1.msra.mxu0 0.0
        %1243 = vmatprep.subr.mxu0 0.0
        %1244 = vmatpush1.msra.mxu0 0.0
        %1245 = vmatprep.subr.mxu0 0.0
        %1246 = vmatpush1.msra.mxu0 0.0
        %1247 = vmatprep.mubr.f32.mxu0 0.0
        %1248 = vmatmul.mubr.f32.gmra.mrb[0].mxu0 %v1175
        %v1249 = vpop.f32.mrb[0].mxu0
        %v1250 = vadd.f32 0.0, %v1249
        %v1251 = vpop.f32.mrb[0].mxu0
        %v1252 = vadd.f32 0.0, %v1251
        %1253 = vdwg.mxu0
        %1254 = vmatprep.subr.mxu0 0.0
        %1255 = vmatpush1.msra.mxu0 %v1181
        %1256 = vmatprep.subr.mxu0 0.0
        %1257 = vmatpush1.msra.mxu0 0.0
        %1258 = vmatprep.subr.mxu0 0.0
        %1259 = vmatpush1.msra.mxu0 0.0
        %1260 = vmatprep.subr.mxu0 0.0
        %1261 = vmatpush1.msra.mxu0 0.0
        %1262 = vmatprep.subr.mxu0 0.0
        %1263 = vmatpush1.msra.mxu0 0.0
        %1264 = vmatprep.subr.mxu0 0.0
        %1265 = vmatpush1.msra.mxu0 0.0
        %1266 = vmatprep.subr.mxu0 0.0
        %1267 = vmatpush1.msra.mxu0 0.0
        %1268 = vmatprep.subr.mxu0 0.0
        %1269 = vmatpush1.msra.mxu0 0.0
        %1270 = vmatprep.subr.mxu0 0.0
        %1271 = vmatpush1.msra.mxu0 0.0
        %1272 = vmatprep.subr.mxu0 0.0
        %1273 = vmatpush1.msra.mxu0 0.0
        %1274 = vmatprep.subr.mxu0 0.0
        %1275 = vmatpush1.msra.mxu0 0.0
        %1276 = vmatprep.subr.mxu0 0.0
        %1277 = vmatpush1.msra.mxu0 0.0
        %1278 = vmatprep.subr.mxu0 0.0
        %1279 = vmatpush1.msra.mxu0 0.0
        %1280 = vmatprep.subr.mxu0 0.0
        %1281 = vmatpush1.msra.mxu0 0.0
        %1282 = vmatprep.subr.mxu0 0.0
        %1283 = vmatpush1.msra.mxu0 0.0
        %1284 = vmatprep.subr.mxu0 0.0
        %1285 = vmatpush1.msra.mxu0 0.0
        %1286 = vmatprep.subr.mxu0 0.0
        %1287 = vmatpush1.msra.mxu0 0.0
        %1288 = vmatprep.subr.mxu0 0.0
        %1289 = vmatpush1.msra.mxu0 0.0
        %1290 = vmatprep.subr.mxu0 0.0
        %1291 = vmatpush1.msra.mxu0 0.0
        %1292 = vmatprep.subr.mxu0 0.0
        %1293 = vmatpush1.msra.mxu0 0.0
        %1294 = vmatprep.subr.mxu0 0.0
        %1295 = vmatpush1.msra.mxu0 0.0
        %1296 = vmatprep.subr.mxu0 0.0
        %1297 = vmatpush1.msra.mxu0 0.0
        %1298 = vmatprep.subr.mxu0 0.0
        %1299 = vmatpush1.msra.mxu0 0.0
        %1300 = vmatprep.subr.mxu0 0.0
        %1301 = vmatpush1.msra.mxu0 0.0
        %1302 = vmatprep.subr.mxu0 0.0
        %1303 = vmatpush1.msra.mxu0 0.0
        %1304 = vmatprep.subr.mxu0 0.0
        %1305 = vmatpush1.msra.mxu0 0.0
        %1306 = vmatprep.subr.mxu0 0.0
        %1307 = vmatpush1.msra.mxu0 0.0
        %1308 = vmatprep.subr.mxu0 0.0
        %1309 = vmatpush1.msra.mxu0 0.0
        %1310 = vmatprep.subr.mxu0 0.0
        %1311 = vmatpush1.msra.mxu0 0.0
        %1312 = vmatprep.subr.mxu0 0.0
        %1313 = vmatpush1.msra.mxu0 0.0
        %1314 = vmatprep.subr.mxu0 0.0
        %1315 = vmatpush1.msra.mxu0 0.0
        %1316 = vmatprep.subr.mxu0 0.0
        %1317 = vmatpush1.msra.mxu0 0.0
        %1318 = vmatprep.mubr.f32.mxu0 0.0
        %1319 = vmatmul.mubr.f32.gmra.mrb[0].mxu0 %v1175
        %v1320 = vpop.f32.mrb[0].mxu0
        %v1321 = vadd.f32 0.0, %v1320
        %v1322 = vpop.f32.mrb[0].mxu0
        %1323 = vdwg.mxu0
        %v1324 = vadd.f32 %v1155, %v1250
        %v1325 = vadd.f32 %v1156, %v1252
        %v1326 = vadd.f32 %v1157, %v1321
        %s1327 = scalar_lea.vmem %s1, 24
        %v1328 = vld [vmem:[%s1327] sm:$0xf]
        %v1329 = vld [vmem:[%s331] sm:$0xff]
        %v1330 = vld [vmem:[%s331 + $0x8] sm:$0xf]
        %v1333 = vcombine.high %v1329, %v1329
        %1334 = vrot.lane.b32.xlu0 %v1329, 92
        %v1335 = vpop.permute.xlu0 %1334
        %1336 = vrot.lane.b32.xlu0 %v1333, 92
        %v1337 = vpop.permute.xlu0 %1336
        %1338 = vrot.lane.b32.xlu0 %v1330, 92
        %v1339 = vpop.permute.xlu0 %1338
        %vm1340 = vcmask 752640
        %v1341 = vsel %vm1340, %v1335, %v1337
        %v1342 = vsel %vm1340, %v1337, %v1339
        %v1344 = vsel %vm349, %v1328, 0
        %v1346 = vsel %vm353, %v1341, 0
        %v1348 = vsel %vm353, %v1342, 0
        %v1350 = vsel %vm353, %v1339, 0
        %1352 = vmatprep.subr.mxu0 %v1348
        %1353 = vmatpush1.msra.mxu0 %v1346
        %1354 = vmatprep.subr.mxu0 0.0
        %1355 = vmatpush1.msra.mxu0 0.0
        %1356 = vmatprep.subr.mxu0 0.0
        %1357 = vmatpush1.msra.mxu0 0.0
        %1358 = vmatprep.subr.mxu0 0.0
        %1359 = vmatpush1.msra.mxu0 0.0
        %1360 = vmatprep.subr.mxu0 0.0
        %1361 = vmatpush1.msra.mxu0 0.0
        %1362 = vmatprep.subr.mxu0 0.0
        %1363 = vmatpush1.msra.mxu0 0.0
        %1364 = vmatprep.subr.mxu0 0.0
        %1365 = vmatpush1.msra.mxu0 0.0
        %1366 = vmatprep.subr.mxu0 0.0
        %1367 = vmatpush1.msra.mxu0 0.0
        %1368 = vmatprep.subr.mxu0 0.0
        %1369 = vmatpush1.msra.mxu0 0.0
        %1370 = vmatprep.subr.mxu0 0.0
        %1371 = vmatpush1.msra.mxu0 0.0
        %1372 = vmatprep.subr.mxu0 0.0
        %1373 = vmatpush1.msra.mxu0 0.0
        %1374 = vmatprep.subr.mxu0 0.0
        %1375 = vmatpush1.msra.mxu0 0.0
        %1376 = vmatprep.subr.mxu0 0.0
        %1377 = vmatpush1.msra.mxu0 0.0
        %1378 = vmatprep.subr.mxu0 0.0
        %1379 = vmatpush1.msra.mxu0 0.0
        %1380 = vmatprep.subr.mxu0 0.0
        %1381 = vmatpush1.msra.mxu0 0.0
        %1382 = vmatprep.subr.mxu0 0.0
        %1383 = vmatpush1.msra.mxu0 0.0
        %1384 = vmatprep.subr.mxu0 0.0
        %1385 = vmatpush1.msra.mxu0 0.0
        %1386 = vmatprep.subr.mxu0 0.0
        %1387 = vmatpush1.msra.mxu0 0.0
        %1388 = vmatprep.subr.mxu0 0.0
        %1389 = vmatpush1.msra.mxu0 0.0
        %1390 = vmatprep.subr.mxu0 0.0
        %1391 = vmatpush1.msra.mxu0 0.0
        %1392 = vmatprep.subr.mxu0 0.0
        %1393 = vmatpush1.msra.mxu0 0.0
        %1394 = vmatprep.subr.mxu0 0.0
        %1395 = vmatpush1.msra.mxu0 0.0
        %1396 = vmatprep.subr.mxu0 0.0
        %1397 = vmatpush1.msra.mxu0 0.0
        %1398 = vmatprep.subr.mxu0 0.0
        %1399 = vmatpush1.msra.mxu0 0.0
        %1400 = vmatprep.subr.mxu0 0.0
        %1401 = vmatpush1.msra.mxu0 0.0
        %1402 = vmatprep.subr.mxu0 0.0
        %1403 = vmatpush1.msra.mxu0 0.0
        %1404 = vmatprep.subr.mxu0 0.0
        %1405 = vmatpush1.msra.mxu0 0.0
        %1406 = vmatprep.subr.mxu0 0.0
        %1407 = vmatpush1.msra.mxu0 0.0
        %1408 = vmatprep.subr.mxu0 0.0
        %1409 = vmatpush1.msra.mxu0 0.0
        %1410 = vmatprep.subr.mxu0 0.0
        %1411 = vmatpush1.msra.mxu0 0.0
        %1412 = vmatprep.subr.mxu0 0.0
        %1413 = vmatpush1.msra.mxu0 0.0
        %1414 = vmatprep.subr.mxu0 0.0
        %1415 = vmatpush1.msra.mxu0 0.0
        %1416 = vmatprep.mubr.f32.mxu0 0.0
        %1417 = vmatmul.mubr.f32.gmra.mrb[0].mxu0 %v1344
        %v1418 = vpop.f32.mrb[0].mxu0
        %v1419 = vadd.f32 0.0, %v1418
        %v1420 = vpop.f32.mrb[0].mxu0
        %v1421 = vadd.f32 0.0, %v1420
        %1422 = vdwg.mxu0
        %1423 = vmatprep.subr.mxu0 0.0
        %1424 = vmatpush1.msra.mxu0 %v1350
        %1425 = vmatprep.subr.mxu0 0.0
        %1426 = vmatpush1.msra.mxu0 0.0
        %1427 = vmatprep.subr.mxu0 0.0
        %1428 = vmatpush1.msra.mxu0 0.0
        %1429 = vmatprep.subr.mxu0 0.0
        %1430 = vmatpush1.msra.mxu0 0.0
        %1431 = vmatprep.subr.mxu0 0.0
        %1432 = vmatpush1.msra.mxu0 0.0
        %1433 = vmatprep.subr.mxu0 0.0
        %1434 = vmatpush1.msra.mxu0 0.0
        %1435 = vmatprep.subr.mxu0 0.0
        %1436 = vmatpush1.msra.mxu0 0.0
        %1437 = vmatprep.subr.mxu0 0.0
        %1438 = vmatpush1.msra.mxu0 0.0
        %1439 = vmatprep.subr.mxu0 0.0
        %1440 = vmatpush1.msra.mxu0 0.0
        %1441 = vmatprep.subr.mxu0 0.0
        %1442 = vmatpush1.msra.mxu0 0.0
        %1443 = vmatprep.subr.mxu0 0.0
        %1444 = vmatpush1.msra.mxu0 0.0
        %1445 = vmatprep.subr.mxu0 0.0
        %1446 = vmatpush1.msra.mxu0 0.0
        %1447 = vmatprep.subr.mxu0 0.0
        %1448 = vmatpush1.msra.mxu0 0.0
        %1449 = vmatprep.subr.mxu0 0.0
        %1450 = vmatpush1.msra.mxu0 0.0
        %1451 = vmatprep.subr.mxu0 0.0
        %1452 = vmatpush1.msra.mxu0 0.0
        %1453 = vmatprep.subr.mxu0 0.0
        %1454 = vmatpush1.msra.mxu0 0.0
        %1455 = vmatprep.subr.mxu0 0.0
        %1456 = vmatpush1.msra.mxu0 0.0
        %1457 = vmatprep.subr.mxu0 0.0
        %1458 = vmatpush1.msra.mxu0 0.0
        %1459 = vmatprep.subr.mxu0 0.0
        %1460 = vmatpush1.msra.mxu0 0.0
        %1461 = vmatprep.subr.mxu0 0.0
        %1462 = vmatpush1.msra.mxu0 0.0
        %1463 = vmatprep.subr.mxu0 0.0
        %1464 = vmatpush1.msra.mxu0 0.0
        %1465 = vmatprep.subr.mxu0 0.0
        %1466 = vmatpush1.msra.mxu0 0.0
        %1467 = vmatprep.subr.mxu0 0.0
        %1468 = vmatpush1.msra.mxu0 0.0
        %1469 = vmatprep.subr.mxu0 0.0
        %1470 = vmatpush1.msra.mxu0 0.0
        %1471 = vmatprep.subr.mxu0 0.0
        %1472 = vmatpush1.msra.mxu0 0.0
        %1473 = vmatprep.subr.mxu0 0.0
        %1474 = vmatpush1.msra.mxu0 0.0
        %1475 = vmatprep.subr.mxu0 0.0
        %1476 = vmatpush1.msra.mxu0 0.0
        %1477 = vmatprep.subr.mxu0 0.0
        %1478 = vmatpush1.msra.mxu0 0.0
        %1479 = vmatprep.subr.mxu0 0.0
        %1480 = vmatpush1.msra.mxu0 0.0
        %1481 = vmatprep.subr.mxu0 0.0
        %1482 = vmatpush1.msra.mxu0 0.0
        %1483 = vmatprep.subr.mxu0 0.0
        %1484 = vmatpush1.msra.mxu0 0.0
        %1485 = vmatprep.subr.mxu0 0.0
        %1486 = vmatpush1.msra.mxu0 0.0
        %1487 = vmatprep.mubr.f32.mxu0 0.0
        %1488 = vmatmul.mubr.f32.gmra.mrb[0].mxu0 %v1344
        %v1489 = vpop.f32.mrb[0].mxu0
        %v1490 = vadd.f32 0.0, %v1489
        %v1491 = vpop.f32.mrb[0].mxu0
        %1492 = vdwg.mxu0
        %v1493 = vadd.f32 %v1324, %v1419
        %v1494 = vadd.f32 %v1325, %v1421
        %v1495 = vadd.f32 %v1326, %v1490
        %s1496 = scalar_lea.vmem %s1, 28
        %v1497 = vld [vmem:[%s1496] sm:$0xf]
        %v1498 = vld [vmem:[%s331] sm:$0xff]
        %v1499 = vld [vmem:[%s331 + $0x8] sm:$0xf]
        %v1502 = vcombine.high %v1498, %v1498
        %1503 = vrot.lane.b32.xlu0 %v1498, 91
        %v1504 = vpop.permute.xlu0 %1503
        %1505 = vrot.lane.b32.xlu0 %v1502, 91
        %v1506 = vpop.permute.xlu0 %1505
        %1507 = vrot.lane.b32.xlu0 %v1499, 91
        %v1508 = vpop.permute.xlu0 %1507
        %vm1509 = vcmask 744448
        %v1510 = vsel %vm1509, %v1504, %v1506
        %v1511 = vsel %vm1509, %v1506, %v1508
        %v1513 = vsel %vm349, %v1497, 0
        %v1515 = vsel %vm353, %v1510, 0
        %v1517 = vsel %vm353, %v1511, 0
        %v1519 = vsel %vm353, %v1508, 0
        %1521 = vmatprep.subr.mxu0 %v1517
        %1522 = vmatpush1.msra.mxu0 %v1515
        %1523 = vmatprep.subr.mxu0 0.0
        %1524 = vmatpush1.msra.mxu0 0.0
        %1525 = vmatprep.subr.mxu0 0.0
        %1526 = vmatpush1.msra.mxu0 0.0
        %1527 = vmatprep.subr.mxu0 0.0
        %1528 = vmatpush1.msra.mxu0 0.0
        %1529 = vmatprep.subr.mxu0 0.0
        %1530 = vmatpush1.msra.mxu0 0.0
        %1531 = vmatprep.subr.mxu0 0.0
        %1532 = vmatpush1.msra.mxu0 0.0
        %1533 = vmatprep.subr.mxu0 0.0
        %1534 = vmatpush1.msra.mxu0 0.0
        %1535 = vmatprep.subr.mxu0 0.0
        %1536 = vmatpush1.msra.mxu0 0.0
        %1537 = vmatprep.subr.mxu0 0.0
        %1538 = vmatpush1.msra.mxu0 0.0
        %1539 = vmatprep.subr.mxu0 0.0
        %1540 = vmatpush1.msra.mxu0 0.0
        %1541 = vmatprep.subr.mxu0 0.0
        %1542 = vmatpush1.msra.mxu0 0.0
        %1543 = vmatprep.subr.mxu0 0.0
        %1544 = vmatpush1.msra.mxu0 0.0
        %1545 = vmatprep.subr.mxu0 0.0
        %1546 = vmatpush1.msra.mxu0 0.0
        %1547 = vmatprep.subr.mxu0 0.0
        %1548 = vmatpush1.msra.mxu0 0.0
        %1549 = vmatprep.subr.mxu0 0.0
        %1550 = vmatpush1.msra.mxu0 0.0
        %1551 = vmatprep.subr.mxu0 0.0
        %1552 = vmatpush1.msra.mxu0 0.0
        %1553 = vmatprep.subr.mxu0 0.0
        %1554 = vmatpush1.msra.mxu0 0.0
        %1555 = vmatprep.subr.mxu0 0.0
        %1556 = vmatpush1.msra.mxu0 0.0
        %1557 = vmatprep.subr.mxu0 0.0
        %1558 = vmatpush1.msra.mxu0 0.0
        %1559 = vmatprep.subr.mxu0 0.0
        %1560 = vmatpush1.msra.mxu0 0.0
        %1561 = vmatprep.subr.mxu0 0.0
        %1562 = vmatpush1.msra.mxu0 0.0
        %1563 = vmatprep.subr.mxu0 0.0
        %1564 = vmatpush1.msra.mxu0 0.0
        %1565 = vmatprep.subr.mxu0 0.0
        %1566 = vmatpush1.msra.mxu0 0.0
        %1567 = vmatprep.subr.mxu0 0.0
        %1568 = vmatpush1.msra.mxu0 0.0
        %1569 = vmatprep.subr.mxu0 0.0
        %1570 = vmatpush1.msra.mxu0 0.0
        %1571 = vmatprep.subr.mxu0 0.0
        %1572 = vmatpush1.msra.mxu0 0.0
        %1573 = vmatprep.subr.mxu0 0.0
        %1574 = vmatpush1.msra.mxu0 0.0
        %1575 = vmatprep.subr.mxu0 0.0
        %1576 = vmatpush1.msra.mxu0 0.0
        %1577 = vmatprep.subr.mxu0 0.0
        %1578 = vmatpush1.msra.mxu0 0.0
        %1579 = vmatprep.subr.mxu0 0.0
        %1580 = vmatpush1.msra.mxu0 0.0
        %1581 = vmatprep.subr.mxu0 0.0
        %1582 = vmatpush1.msra.mxu0 0.0
        %1583 = vmatprep.subr.mxu0 0.0
        %1584 = vmatpush1.msra.mxu0 0.0
        %1585 = vmatprep.mubr.f32.mxu0 0.0
        %1586 = vmatmul.mubr.f32.gmra.mrb[0].mxu0 %v1513
        %v1587 = vpop.f32.mrb[0].mxu0
        %v1588 = vadd.f32 0.0, %v1587
        %v1589 = vpop.f32.mrb[0].mxu0
        %v1590 = vadd.f32 0.0, %v1589
        %1591 = vdwg.mxu0
        %1592 = vmatprep.subr.mxu0 0.0
        %1593 = vmatpush1.msra.mxu0 %v1519
        %1594 = vmatprep.subr.mxu0 0.0
        %1595 = vmatpush1.msra.mxu0 0.0
        %1596 = vmatprep.subr.mxu0 0.0
        %1597 = vmatpush1.msra.mxu0 0.0
        %1598 = vmatprep.subr.mxu0 0.0
        %1599 = vmatpush1.msra.mxu0 0.0
        %1600 = vmatprep.subr.mxu0 0.0
        %1601 = vmatpush1.msra.mxu0 0.0
        %1602 = vmatprep.subr.mxu0 0.0
        %1603 = vmatpush1.msra.mxu0 0.0
        %1604 = vmatprep.subr.mxu0 0.0
        %1605 = vmatpush1.msra.mxu0 0.0
        %1606 = vmatprep.subr.mxu0 0.0
        %1607 = vmatpush1.msra.mxu0 0.0
        %1608 = vmatprep.subr.mxu0 0.0
        %1609 = vmatpush1.msra.mxu0 0.0
        %1610 = vmatprep.subr.mxu0 0.0
        %1611 = vmatpush1.msra.mxu0 0.0
        %1612 = vmatprep.subr.mxu0 0.0
        %1613 = vmatpush1.msra.mxu0 0.0
        %1614 = vmatprep.subr.mxu0 0.0
        %1615 = vmatpush1.msra.mxu0 0.0
        %1616 = vmatprep.subr.mxu0 0.0
        %1617 = vmatpush1.msra.mxu0 0.0
        %1618 = vmatprep.subr.mxu0 0.0
        %1619 = vmatpush1.msra.mxu0 0.0
        %1620 = vmatprep.subr.mxu0 0.0
        %1621 = vmatpush1.msra.mxu0 0.0
        %1622 = vmatprep.subr.mxu0 0.0
        %1623 = vmatpush1.msra.mxu0 0.0
        %1624 = vmatprep.subr.mxu0 0.0
        %1625 = vmatpush1.msra.mxu0 0.0
        %1626 = vmatprep.subr.mxu0 0.0
        %1627 = vmatpush1.msra.mxu0 0.0
        %1628 = vmatprep.subr.mxu0 0.0
        %1629 = vmatpush1.msra.mxu0 0.0
        %1630 = vmatprep.subr.mxu0 0.0
        %1631 = vmatpush1.msra.mxu0 0.0
        %1632 = vmatprep.subr.mxu0 0.0
        %1633 = vmatpush1.msra.mxu0 0.0
        %1634 = vmatprep.subr.mxu0 0.0
        %1635 = vmatpush1.msra.mxu0 0.0
        %1636 = vmatprep.subr.mxu0 0.0
        %1637 = vmatpush1.msra.mxu0 0.0
        %1638 = vmatprep.subr.mxu0 0.0
        %1639 = vmatpush1.msra.mxu0 0.0
        %1640 = vmatprep.subr.mxu0 0.0
        %1641 = vmatpush1.msra.mxu0 0.0
        %1642 = vmatprep.subr.mxu0 0.0
        %1643 = vmatpush1.msra.mxu0 0.0
        %1644 = vmatprep.subr.mxu0 0.0
        %1645 = vmatpush1.msra.mxu0 0.0
        %1646 = vmatprep.subr.mxu0 0.0
        %1647 = vmatpush1.msra.mxu0 0.0
        %1648 = vmatprep.subr.mxu0 0.0
        %1649 = vmatpush1.msra.mxu0 0.0
        %1650 = vmatprep.subr.mxu0 0.0
        %1651 = vmatpush1.msra.mxu0 0.0
        %1652 = vmatprep.subr.mxu0 0.0
        %1653 = vmatpush1.msra.mxu0 0.0
        %1654 = vmatprep.subr.mxu0 0.0
        %1655 = vmatpush1.msra.mxu0 0.0
        %1656 = vmatprep.mubr.f32.mxu0 0.0
        %1657 = vmatmul.mubr.f32.gmra.mrb[0].mxu0 %v1513
        %v1658 = vpop.f32.mrb[0].mxu0
        %v1659 = vadd.f32 0.0, %v1658
        %v1660 = vpop.f32.mrb[0].mxu0
        %1661 = vdwg.mxu0
        %v1662 = vadd.f32 %v1493, %v1588
        %v1663 = vadd.f32 %v1494, %v1590
        %v1664 = vadd.f32 %v1495, %v1659
        %s1665 = scalar_lea.vmem %s1, 32
        %v1666 = vld [vmem:[%s1665] sm:$0xf]
        %v1667 = vld [vmem:[%s331] sm:$0xff]
        %v1668 = vld [vmem:[%s331 + $0x8] sm:$0xf]
        %v1671 = vcombine.high %v1667, %v1667
        %1672 = vrot.lane.b32.xlu0 %v1667, 90
        %v1673 = vpop.permute.xlu0 %1672
        %1674 = vrot.lane.b32.xlu0 %v1671, 90
        %v1675 = vpop.permute.xlu0 %1674
        %1676 = vrot.lane.b32.xlu0 %v1668, 90
        %v1677 = vpop.permute.xlu0 %1676
        %vm1678 = vcmask 736256
        %v1679 = vsel %vm1678, %v1673, %v1675
        %v1680 = vsel %vm1678, %v1675, %v1677
        %v1682 = vsel %vm349, %v1666, 0
        %v1684 = vsel %vm353, %v1679, 0
        %v1686 = vsel %vm353, %v1680, 0
        %v1688 = vsel %vm353, %v1677, 0
        %1690 = vmatprep.subr.mxu0 %v1686
        %1691 = vmatpush1.msra.mxu0 %v1684
        %1692 = vmatprep.subr.mxu0 0.0
        %1693 = vmatpush1.msra.mxu0 0.0
        %1694 = vmatprep.subr.mxu0 0.0
        %1695 = vmatpush1.msra.mxu0 0.0
        %1696 = vmatprep.subr.mxu0 0.0
        %1697 = vmatpush1.msra.mxu0 0.0
        %1698 = vmatprep.subr.mxu0 0.0
        %1699 = vmatpush1.msra.mxu0 0.0
        %1700 = vmatprep.subr.mxu0 0.0
        %1701 = vmatpush1.msra.mxu0 0.0
        %1702 = vmatprep.subr.mxu0 0.0
        %1703 = vmatpush1.msra.mxu0 0.0
        %1704 = vmatprep.subr.mxu0 0.0
        %1705 = vmatpush1.msra.mxu0 0.0
        %1706 = vmatprep.subr.mxu0 0.0
        %1707 = vmatpush1.msra.mxu0 0.0
        %1708 = vmatprep.subr.mxu0 0.0
        %1709 = vmatpush1.msra.mxu0 0.0
        %1710 = vmatprep.subr.mxu0 0.0
        %1711 = vmatpush1.msra.mxu0 0.0
        %1712 = vmatprep.subr.mxu0 0.0
        %1713 = vmatpush1.msra.mxu0 0.0
        %1714 = vmatprep.subr.mxu0 0.0
        %1715 = vmatpush1.msra.mxu0 0.0
        %1716 = vmatprep.subr.mxu0 0.0
        %1717 = vmatpush1.msra.mxu0 0.0
        %1718 = vmatprep.subr.mxu0 0.0
        %1719 = vmatpush1.msra.mxu0 0.0
        %1720 = vmatprep.subr.mxu0 0.0
        %1721 = vmatpush1.msra.mxu0 0.0
        %1722 = vmatprep.subr.mxu0 0.0
        %1723 = vmatpush1.msra.mxu0 0.0
        %1724 = vmatprep.subr.mxu0 0.0
        %1725 = vmatpush1.msra.mxu0 0.0
        %1726 = vmatprep.subr.mxu0 0.0
        %1727 = vmatpush1.msra.mxu0 0.0
        %1728 = vmatprep.subr.mxu0 0.0
        %1729 = vmatpush1.msra.mxu0 0.0
        %1730 = vmatprep.subr.mxu0 0.0
        %1731 = vmatpush1.msra.mxu0 0.0
        %1732 = vmatprep.subr.mxu0 0.0
        %1733 = vmatpush1.msra.mxu0 0.0
        %1734 = vmatprep.subr.mxu0 0.0
        %1735 = vmatpush1.msra.mxu0 0.0
        %1736 = vmatprep.subr.mxu0 0.0
        %1737 = vmatpush1.msra.mxu0 0.0
        %1738 = vmatprep.subr.mxu0 0.0
        %1739 = vmatpush1.msra.mxu0 0.0
        %1740 = vmatprep.subr.mxu0 0.0
        %1741 = vmatpush1.msra.mxu0 0.0
        %1742 = vmatprep.subr.mxu0 0.0
        %1743 = vmatpush1.msra.mxu0 0.0
        %1744 = vmatprep.subr.mxu0 0.0
        %1745 = vmatpush1.msra.mxu0 0.0
        %1746 = vmatprep.subr.mxu0 0.0
        %1747 = vmatpush1.msra.mxu0 0.0
        %1748 = vmatprep.subr.mxu0 0.0
        %1749 = vmatpush1.msra.mxu0 0.0
        %1750 = vmatprep.subr.mxu0 0.0
        %1751 = vmatpush1.msra.mxu0 0.0
        %1752 = vmatprep.subr.mxu0 0.0
        %1753 = vmatpush1.msra.mxu0 0.0
        %1754 = vmatprep.mubr.f32.mxu0 0.0
        %1755 = vmatmul.mubr.f32.gmra.mrb[0].mxu0 %v1682
        %v1756 = vpop.f32.mrb[0].mxu0
        %v1757 = vadd.f32 0.0, %v1756
        %v1758 = vpop.f32.mrb[0].mxu0
        %v1759 = vadd.f32 0.0, %v1758
        %1760 = vdwg.mxu0
        %1761 = vmatprep.subr.mxu0 0.0
        %1762 = vmatpush1.msra.mxu0 %v1688
        %1763 = vmatprep.subr.mxu0 0.0
        %1764 = vmatpush1.msra.mxu0 0.0
        %1765 = vmatprep.subr.mxu0 0.0
        %1766 = vmatpush1.msra.mxu0 0.0
        %1767 = vmatprep.subr.mxu0 0.0
        %1768 = vmatpush1.msra.mxu0 0.0
        %1769 = vmatprep.subr.mxu0 0.0
        %1770 = vmatpush1.msra.mxu0 0.0
        %1771 = vmatprep.subr.mxu0 0.0
        %1772 = vmatpush1.msra.mxu0 0.0
        %1773 = vmatprep.subr.mxu0 0.0
        %1774 = vmatpush1.msra.mxu0 0.0
        %1775 = vmatprep.subr.mxu0 0.0
        %1776 = vmatpush1.msra.mxu0 0.0
        %1777 = vmatprep.subr.mxu0 0.0
        %1778 = vmatpush1.msra.mxu0 0.0
        %1779 = vmatprep.subr.mxu0 0.0
        %1780 = vmatpush1.msra.mxu0 0.0
        %1781 = vmatprep.subr.mxu0 0.0
        %1782 = vmatpush1.msra.mxu0 0.0
        %1783 = vmatprep.subr.mxu0 0.0
        %1784 = vmatpush1.msra.mxu0 0.0
        %1785 = vmatprep.subr.mxu0 0.0
        %1786 = vmatpush1.msra.mxu0 0.0
        %1787 = vmatprep.subr.mxu0 0.0
        %1788 = vmatpush1.msra.mxu0 0.0
        %1789 = vmatprep.subr.mxu0 0.0
        %1790 = vmatpush1.msra.mxu0 0.0
        %1791 = vmatprep.subr.mxu0 0.0
        %1792 = vmatpush1.msra.mxu0 0.0
        %1793 = vmatprep.subr.mxu0 0.0
        %1794 = vmatpush1.msra.mxu0 0.0
        %1795 = vmatprep.subr.mxu0 0.0
        %1796 = vmatpush1.msra.mxu0 0.0
        %1797 = vmatprep.subr.mxu0 0.0
        %1798 = vmatpush1.msra.mxu0 0.0
        %1799 = vmatprep.subr.mxu0 0.0
        %1800 = vmatpush1.msra.mxu0 0.0
        %1801 = vmatprep.subr.mxu0 0.0
        %1802 = vmatpush1.msra.mxu0 0.0
        %1803 = vmatprep.subr.mxu0 0.0
        %1804 = vmatpush1.msra.mxu0 0.0
        %1805 = vmatprep.subr.mxu0 0.0
        %1806 = vmatpush1.msra.mxu0 0.0
        %1807 = vmatprep.subr.mxu0 0.0
        %1808 = vmatpush1.msra.mxu0 0.0
        %1809 = vmatprep.subr.mxu0 0.0
        %1810 = vmatpush1.msra.mxu0 0.0
        %1811 = vmatprep.subr.mxu0 0.0
        %1812 = vmatpush1.msra.mxu0 0.0
        %1813 = vmatprep.subr.mxu0 0.0
        %1814 = vmatpush1.msra.mxu0 0.0
        %1815 = vmatprep.subr.mxu0 0.0
        %1816 = vmatpush1.msra.mxu0 0.0
        %1817 = vmatprep.subr.mxu0 0.0
        %1818 = vmatpush1.msra.mxu0 0.0
        %1819 = vmatprep.subr.mxu0 0.0
        %1820 = vmatpush1.msra.mxu0 0.0
        %1821 = vmatprep.subr.mxu0 0.0
        %1822 = vmatpush1.msra.mxu0 0.0
        %1823 = vmatprep.subr.mxu0 0.0
        %1824 = vmatpush1.msra.mxu0 0.0
        %1825 = vmatprep.mubr.f32.mxu0 0.0
        %1826 = vmatmul.mubr.f32.gmra.mrb[0].mxu0 %v1682
        %v1827 = vpop.f32.mrb[0].mxu0
        %v1828 = vadd.f32 0.0, %v1827
        %v1829 = vpop.f32.mrb[0].mxu0
        %1830 = vdwg.mxu0
        %v1831 = vadd.f32 %v1662, %v1757
        %v1832 = vadd.f32 %v1663, %v1759
        %v1833 = vadd.f32 %v1664, %v1828
        %v1834 = vld [vmem:[%s2] sm:$0xf]
        %1836 = vset.pattern.permute.xlu0 0
        %1837 = vperm.xlu0 %1836, %v1834
        %v1838 = vpop.permute.xlu0 %1837
        %v1840 = vmul.f32 %v1831, %v1838
        %v1841 = vmul.f32 %v1832, %v1838
        %v1842 = vmul.f32 %v1833, %v1838
        %v1843 = vld [vmem:[%s3] sm:$0xf]
        %1845 = vset.pattern.permute.xlu0 0
        %1846 = vperm.xlu0 %1845, %v1843
        %v1847 = vpop.permute.xlu0 %1846
        %v1849 = vadd.f32 %v1840, %v1847
        %v1850 = vadd.f32 %v1841, %v1847
        %v1851 = vadd.f32 %v1842, %v1847
        %s1852 = sld [smem:[#allocation3]]
        %vm1853 = vcmp.gt.f32.partialorder %v1849, 0.0
        %vm1854 = vcmp.gt.f32.partialorder %v1850, 0.0
        %vm1855 = vcmp.gt.f32.partialorder %v1851, 0.0
        %v1856 = vstv %s1852
        %v1857 = vmul.f32 %v1856, %v1849
        %v1858 = vmul.f32 %v1856, %v1850
        %v1859 = vmul.f32 %v1856, %v1851
        %v1860 = vsel %vm1853, %v1849, %v1857
        %v1861 = vsel %vm1854, %v1850, %v1858
        %v1862 = vsel %vm1855, %v1851, %v1859
        %v1863 = vld [vmem:[%s7] sm:$0x7]
        %v1865 = vlaneseq
        %v1866 = vshrl.u32 %v1865, 7
        %v1867 = vsub.s32 0, %v1866
        %v1868 = vrot.slane %v1863, %v1867
        %v1869 = vlaneseq
        %v1870 = vshrl.u32 %v1869, 7
        %v1871 = vsub.s32 1, %v1870
        %v1872 = vrot.slane %v1863, %v1871
        %v1873 = vlaneseq
        %v1874 = vshrl.u32 %v1873, 7
        %v1875 = vsub.s32 2, %v1874
        %v1876 = vrot.slane %v1863, %v1875
        %v1880 = vmul.f32 %v1860, %v1868
        %v1881 = vmul.f32 %v1861, %v1872
        %v1882 = vmul.f32 %v1862, %v1876
        %vm1883 = vcmask 150528
        %1884 = vst.msk [vmem:[#allocation2] sm:$0xf] %vm1883, 0.0
        %vm1885 = vcmask 863928
        %1886 = vst.msk [vmem:[#allocation2 + $0x8] sm:$0xf] %vm1885, 0.0
        %v1890 = vcombine.low %v1880, %v1881
        %1891 = vrot.lane.b32.xlu0 %v1890, 19
        %v1892 = vpop.permute.xlu0 %1891
        %1893 = vrot.lane.b32.xlu0 %v1882, 19
        %v1894 = vpop.permute.xlu0 %1893
        %v1895 = vrot.slane %v1892, 4
        %vm1896 = vcmask 154624
        %v1897 = vsel %vm1896, %v1895, %v1892
        %v1898 = vsel %vm1896, %v1895, %v1894
        %vm1901 = vcmask 1043608
        %vm1902 = vcmask 1047556
        %vm1903 = vmor %vm1902, %vm1901
        %1904 = vst.msk [vmem:[#allocation2] sm:$0xff] %vm1903, %v1897
        %vm1905 = vcmask 707584
        %1906 = vst.msk [vmem:[#allocation2 + $0x8] sm:$0xf] %vm1905, %v1898
        %v1907 = vld [vmem:[%s4] sm:$0xf]
        %v1908 = vld [vmem:[#allocation2] sm:$0xff]
        %v1909 = vld [vmem:[#allocation2 + $0x8] sm:$0xf]
        %s1910 = scalar_lea.vmem %s4, 4
        %v1911 = vld [vmem:[%s1910] sm:$0xf]
        %v1914 = vcombine.high %v1908, %v1908
        %1915 = vrot.lane.b32.xlu0 %v1908, 127
        %v1916 = vpop.permute.xlu0 %1915
        %1917 = vrot.lane.b32.xlu0 %v1914, 127
        %v1918 = vpop.permute.xlu0 %1917
        %1919 = vrot.lane.b32.xlu0 %v1909, 127
        %v1920 = vpop.permute.xlu0 %1919
        %v1921 = vsel %vm346, %v1916, %v1918
        %v1922 = vsel %vm346, %v1918, %v1920
        %v1924 = vsel %vm349, %v1911, 0
        %v1926 = vsel %vm353, %v1921, 0
        %v1928 = vsel %vm353, %v1922, 0
        %v1930 = vsel %vm353, %v1920, 0
        %1932 = vmatprep.subr.mxu0 %v1928
        %1933 = vmatpush1.msra.mxu0 %v1926
        %1934 = vmatprep.subr.mxu0 0.0
        %1935 = vmatpush1.msra.mxu0 0.0
        %1936 = vmatprep.subr.mxu0 0.0
        %1937 = vmatpush1.msra.mxu0 0.0
        %1938 = vmatprep.subr.mxu0 0.0
        %1939 = vmatpush1.msra.mxu0 0.0
        %1940 = vmatprep.subr.mxu0 0.0
        %1941 = vmatpush1.msra.mxu0 0.0
        %1942 = vmatprep.subr.mxu0 0.0
        %1943 = vmatpush1.msra.mxu0 0.0
        %1944 = vmatprep.subr.mxu0 0.0
        %1945 = vmatpush1.msra.mxu0 0.0
        %1946 = vmatprep.subr.mxu0 0.0
        %1947 = vmatpush1.msra.mxu0 0.0
        %1948 = vmatprep.subr.mxu0 0.0
        %1949 = vmatpush1.msra.mxu0 0.0
        %1950 = vmatprep.subr.mxu0 0.0
        %1951 = vmatpush1.msra.mxu0 0.0
        %1952 = vmatprep.subr.mxu0 0.0
        %1953 = vmatpush1.msra.mxu0 0.0
        %1954 = vmatprep.subr.mxu0 0.0
        %1955 = vmatpush1.msra.mxu0 0.0
        %1956 = vmatprep.subr.mxu0 0.0
        %1957 = vmatpush1.msra.mxu0 0.0
        %1958 = vmatprep.subr.mxu0 0.0
        %1959 = vmatpush1.msra.mxu0 0.0
        %1960 = vmatprep.subr.mxu0 0.0
        %1961 = vmatpush1.msra.mxu0 0.0
        %1962 = vmatprep.subr.mxu0 0.0
        %1963 = vmatpush1.msra.mxu0 0.0
        %1964 = vmatprep.subr.mxu0 0.0
        %1965 = vmatpush1.msra.mxu0 0.0
        %1966 = vmatprep.subr.mxu0 0.0
        %1967 = vmatpush1.msra.mxu0 0.0
        %1968 = vmatprep.subr.mxu0 0.0
        %1969 = vmatpush1.msra.mxu0 0.0
        %1970 = vmatprep.subr.mxu0 0.0
        %1971 = vmatpush1.msra.mxu0 0.0
        %1972 = vmatprep.subr.mxu0 0.0
        %1973 = vmatpush1.msra.mxu0 0.0
        %1974 = vmatprep.subr.mxu0 0.0
        %1975 = vmatpush1.msra.mxu0 0.0
        %1976 = vmatprep.subr.mxu0 0.0
        %1977 = vmatpush1.msra.mxu0 0.0
        %1978 = vmatprep.subr.mxu0 0.0
        %1979 = vmatpush1.msra.mxu0 0.0
        %1980 = vmatprep.subr.mxu0 0.0
        %1981 = vmatpush1.msra.mxu0 0.0
        %1982 = vmatprep.subr.mxu0 0.0
        %1983 = vmatpush1.msra.mxu0 0.0
        %1984 = vmatprep.subr.mxu0 0.0
        %1985 = vmatpush1.msra.mxu0 0.0
        %1986 = vmatprep.subr.mxu0 0.0
        %1987 = vmatpush1.msra.mxu0 0.0
        %1988 = vmatprep.subr.mxu0 0.0
        %1989 = vmatpush1.msra.mxu0 0.0
        %1990 = vmatprep.subr.mxu0 0.0
        %1991 = vmatpush1.msra.mxu0 0.0
        %1992 = vmatprep.subr.mxu0 0.0
        %1993 = vmatpush1.msra.mxu0 0.0
        %1994 = vmatprep.subr.mxu0 0.0
        %1995 = vmatpush1.msra.mxu0 0.0
        %1996 = vmatprep.mubr.f32.mxu0 0.0
        %1997 = vmatmul.mubr.f32.gmra.mrb[0].mxu0 %v1924
        %v1998 = vpop.f32.mrb[0].mxu0
        %v1999 = vadd.f32 0.0, %v1998
        %v2000 = vpop.f32.mrb[0].mxu0
        %v2001 = vadd.f32 0.0, %v2000
        %2002 = vdwg.mxu0
        %2003 = vmatprep.subr.mxu0 0.0
        %2004 = vmatpush1.msra.mxu0 %v1930
        %2005 = vmatprep.subr.mxu0 0.0
        %2006 = vmatpush1.msra.mxu0 0.0
        %2007 = vmatprep.subr.mxu0 0.0
        %2008 = vmatpush1.msra.mxu0 0.0
        %2009 = vmatprep.subr.mxu0 0.0
        %2010 = vmatpush1.msra.mxu0 0.0
        %2011 = vmatprep.subr.mxu0 0.0
        %2012 = vmatpush1.msra.mxu0 0.0
        %2013 = vmatprep.subr.mxu0 0.0
        %2014 = vmatpush1.msra.mxu0 0.0
        %2015 = vmatprep.subr.mxu0 0.0
        %2016 = vmatpush1.msra.mxu0 0.0
        %2017 = vmatprep.subr.mxu0 0.0
        %2018 = vmatpush1.msra.mxu0 0.0
        %2019 = vmatprep.subr.mxu0 0.0
        %2020 = vmatpush1.msra.mxu0 0.0
        %2021 = vmatprep.subr.mxu0 0.0
        %2022 = vmatpush1.msra.mxu0 0.0
        %2023 = vmatprep.subr.mxu0 0.0
        %2024 = vmatpush1.msra.mxu0 0.0
        %2025 = vmatprep.subr.mxu0 0.0
        %2026 = vmatpush1.msra.mxu0 0.0
        %2027 = vmatprep.subr.mxu0 0.0
        %2028 = vmatpush1.msra.mxu0 0.0
        %2029 = vmatprep.subr.mxu0 0.0
        %2030 = vmatpush1.msra.mxu0 0.0
        %2031 = vmatprep.subr.mxu0 0.0
        %2032 = vmatpush1.msra.mxu0 0.0
        %2033 = vmatprep.subr.mxu0 0.0
        %2034 = vmatpush1.msra.mxu0 0.0
        %2035 = vmatprep.subr.mxu0 0.0
        %2036 = vmatpush1.msra.mxu0 0.0
        %2037 = vmatprep.subr.mxu0 0.0
        %2038 = vmatpush1.msra.mxu0 0.0
        %2039 = vmatprep.subr.mxu0 0.0
        %2040 = vmatpush1.msra.mxu0 0.0
        %2041 = vmatprep.subr.mxu0 0.0
        %2042 = vmatpush1.msra.mxu0 0.0
        %2043 = vmatprep.subr.mxu0 0.0
        %2044 = vmatpush1.msra.mxu0 0.0
        %2045 = vmatprep.subr.mxu0 0.0
        %2046 = vmatpush1.msra.mxu0 0.0
        %2047 = vmatprep.subr.mxu0 0.0
        %2048 = vmatpush1.msra.mxu0 0.0
        %2049 = vmatprep.subr.mxu0 0.0
        %2050 = vmatpush1.msra.mxu0 0.0
        %2051 = vmatprep.subr.mxu0 0.0
        %2052 = vmatpush1.msra.mxu0 0.0
        %2053 = vmatprep.subr.mxu0 0.0
        %2054 = vmatpush1.msra.mxu0 0.0
        %2055 = vmatprep.subr.mxu0 0.0
        %2056 = vmatpush1.msra.mxu0 0.0
        %2057 = vmatprep.subr.mxu0 0.0
        %2058 = vmatpush1.msra.mxu0 0.0
        %2059 = vmatprep.subr.mxu0 0.0
        %2060 = vmatpush1.msra.mxu0 0.0
        %2061 = vmatprep.subr.mxu0 0.0
        %2062 = vmatpush1.msra.mxu0 0.0
        %2063 = vmatprep.subr.mxu0 0.0
        %2064 = vmatpush1.msra.mxu0 0.0
        %2065 = vmatprep.subr.mxu0 0.0
        %2066 = vmatpush1.msra.mxu0 0.0
        %2067 = vmatprep.mubr.f32.mxu0 0.0
        %2068 = vmatmul.mubr.f32.gmra.mrb[0].mxu0 %v1924
        %v2069 = vpop.f32.mrb[0].mxu0
        %v2070 = vadd.f32 0.0, %v2069
        %v2071 = vpop.f32.mrb[0].mxu0
        %2072 = vdwg.mxu0
        %v2074 = vsel %vm349, %v1907, 0
        %v2076 = vsel %vm353, %v1908, 0
        %v2078 = vsel %vm353, %v1914, 0
        %v2080 = vsel %vm353, %v1909, 0
        %2082 = vmatprep.subr.mxu0 %v2078
        %2083 = vmatpush1.msra.mxu0 %v2076
        %2084 = vmatprep.subr.mxu0 0.0
        %2085 = vmatpush1.msra.mxu0 0.0
        %2086 = vmatprep.subr.mxu0 0.0
        %2087 = vmatpush1.msra.mxu0 0.0
        %2088 = vmatprep.subr.mxu0 0.0
        %2089 = vmatpush1.msra.mxu0 0.0
        %2090 = vmatprep.subr.mxu0 0.0
        %2091 = vmatpush1.msra.mxu0 0.0
        %2092 = vmatprep.subr.mxu0 0.0
        %2093 = vmatpush1.msra.mxu0 0.0
        %2094 = vmatprep.subr.mxu0 0.0
        %2095 = vmatpush1.msra.mxu0 0.0
        %2096 = vmatprep.subr.mxu0 0.0
        %2097 = vmatpush1.msra.mxu0 0.0
        %2098 = vmatprep.subr.mxu0 0.0
        %2099 = vmatpush1.msra.mxu0 0.0
        %2100 = vmatprep.subr.mxu0 0.0
        %2101 = vmatpush1.msra.mxu0 0.0
        %2102 = vmatprep.subr.mxu0 0.0
        %2103 = vmatpush1.msra.mxu0 0.0
        %2104 = vmatprep.subr.mxu0 0.0
        %2105 = vmatpush1.msra.mxu0 0.0
        %2106 = vmatprep.subr.mxu0 0.0
        %2107 = vmatpush1.msra.mxu0 0.0
        %2108 = vmatprep.subr.mxu0 0.0
        %2109 = vmatpush1.msra.mxu0 0.0
        %2110 = vmatprep.subr.mxu0 0.0
        %2111 = vmatpush1.msra.mxu0 0.0
        %2112 = vmatprep.subr.mxu0 0.0
        %2113 = vmatpush1.msra.mxu0 0.0
        %2114 = vmatprep.subr.mxu0 0.0
        %2115 = vmatpush1.msra.mxu0 0.0
        %2116 = vmatprep.subr.mxu0 0.0
        %2117 = vmatpush1.msra.mxu0 0.0
        %2118 = vmatprep.subr.mxu0 0.0
        %2119 = vmatpush1.msra.mxu0 0.0
        %2120 = vmatprep.subr.mxu0 0.0
        %2121 = vmatpush1.msra.mxu0 0.0
        %2122 = vmatprep.subr.mxu0 0.0
        %2123 = vmatpush1.msra.mxu0 0.0
        %2124 = vmatprep.subr.mxu0 0.0
        %2125 = vmatpush1.msra.mxu0 0.0
        %2126 = vmatprep.subr.mxu0 0.0
        %2127 = vmatpush1.msra.mxu0 0.0
        %2128 = vmatprep.subr.mxu0 0.0
        %2129 = vmatpush1.msra.mxu0 0.0
        %2130 = vmatprep.subr.mxu0 0.0
        %2131 = vmatpush1.msra.mxu0 0.0
        %2132 = vmatprep.subr.mxu0 0.0
        %2133 = vmatpush1.msra.mxu0 0.0
        %2134 = vmatprep.subr.mxu0 0.0
        %2135 = vmatpush1.msra.mxu0 0.0
        %2136 = vmatprep.subr.mxu0 0.0
        %2137 = vmatpush1.msra.mxu0 0.0
        %2138 = vmatprep.subr.mxu0 0.0
        %2139 = vmatpush1.msra.mxu0 0.0
        %2140 = vmatprep.subr.mxu0 0.0
        %2141 = vmatpush1.msra.mxu0 0.0
        %2142 = vmatprep.subr.mxu0 0.0
        %2143 = vmatpush1.msra.mxu0 0.0
        %2144 = vmatprep.subr.mxu0 0.0
        %2145 = vmatpush1.msra.mxu0 0.0
        %2146 = vmatprep.mubr.f32.mxu0 0.0
        %2147 = vmatmul.mubr.f32.gmra.mrb[0].mxu0 %v2074
        %v2148 = vpop.f32.mrb[0].mxu0
        %v2149 = vadd.f32 %v1999, %v2148
        %v2150 = vpop.f32.mrb[0].mxu0
        %v2151 = vadd.f32 %v2001, %v2150
        %2152 = vdwg.mxu0
        %2153 = vmatprep.subr.mxu0 0.0
        %2154 = vmatpush1.msra.mxu0 %v2080
        %2155 = vmatprep.subr.mxu0 0.0
        %2156 = vmatpush1.msra.mxu0 0.0
        %2157 = vmatprep.subr.mxu0 0.0
        %2158 = vmatpush1.msra.mxu0 0.0
        %2159 = vmatprep.subr.mxu0 0.0
        %2160 = vmatpush1.msra.mxu0 0.0
        %2161 = vmatprep.subr.mxu0 0.0
        %2162 = vmatpush1.msra.mxu0 0.0
        %2163 = vmatprep.subr.mxu0 0.0
        %2164 = vmatpush1.msra.mxu0 0.0
        %2165 = vmatprep.subr.mxu0 0.0
        %2166 = vmatpush1.msra.mxu0 0.0
        %2167 = vmatprep.subr.mxu0 0.0
        %2168 = vmatpush1.msra.mxu0 0.0
        %2169 = vmatprep.subr.mxu0 0.0
        %2170 = vmatpush1.msra.mxu0 0.0
        %2171 = vmatprep.subr.mxu0 0.0
        %2172 = vmatpush1.msra.mxu0 0.0
        %2173 = vmatprep.subr.mxu0 0.0
        %2174 = vmatpush1.msra.mxu0 0.0
        %2175 = vmatprep.subr.mxu0 0.0
        %2176 = vmatpush1.msra.mxu0 0.0
        %2177 = vmatprep.subr.mxu0 0.0
        %2178 = vmatpush1.msra.mxu0 0.0
        %2179 = vmatprep.subr.mxu0 0.0
        %2180 = vmatpush1.msra.mxu0 0.0
        %2181 = vmatprep.subr.mxu0 0.0
        %2182 = vmatpush1.msra.mxu0 0.0
        %2183 = vmatprep.subr.mxu0 0.0
        %2184 = vmatpush1.msra.mxu0 0.0
        %2185 = vmatprep.subr.mxu0 0.0
        %2186 = vmatpush1.msra.mxu0 0.0
        %2187 = vmatprep.subr.mxu0 0.0
        %2188 = vmatpush1.msra.mxu0 0.0
        %2189 = vmatprep.subr.mxu0 0.0
        %2190 = vmatpush1.msra.mxu0 0.0
        %2191 = vmatprep.subr.mxu0 0.0
        %2192 = vmatpush1.msra.mxu0 0.0
        %2193 = vmatprep.subr.mxu0 0.0
        %2194 = vmatpush1.msra.mxu0 0.0
        %2195 = vmatprep.subr.mxu0 0.0
        %2196 = vmatpush1.msra.mxu0 0.0
        %2197 = vmatprep.subr.mxu0 0.0
        %2198 = vmatpush1.msra.mxu0 0.0
        %2199 = vmatprep.subr.mxu0 0.0
        %2200 = vmatpush1.msra.mxu0 0.0
        %2201 = vmatprep.subr.mxu0 0.0
        %2202 = vmatpush1.msra.mxu0 0.0
        %2203 = vmatprep.subr.mxu0 0.0
        %2204 = vmatpush1.msra.mxu0 0.0
        %2205 = vmatprep.subr.mxu0 0.0
        %2206 = vmatpush1.msra.mxu0 0.0
        %2207 = vmatprep.subr.mxu0 0.0
        %2208 = vmatpush1.msra.mxu0 0.0
        %2209 = vmatprep.subr.mxu0 0.0
        %2210 = vmatpush1.msra.mxu0 0.0
        %2211 = vmatprep.subr.mxu0 0.0
        %2212 = vmatpush1.msra.mxu0 0.0
        %2213 = vmatprep.subr.mxu0 0.0
        %2214 = vmatpush1.msra.mxu0 0.0
        %2215 = vmatprep.subr.mxu0 0.0
        %2216 = vmatpush1.msra.mxu0 0.0
        %2217 = vmatprep.mubr.f32.mxu0 0.0
        %2218 = vmatmul.mubr.f32.gmra.mrb[0].mxu0 %v2074
        %v2219 = vpop.f32.mrb[0].mxu0
        %v2220 = vadd.f32 %v2070, %v2219
        %v2221 = vpop.f32.mrb[0].mxu0
        %2222 = vdwg.mxu0
        %s2223 = scalar_lea.vmem %s4, 8
        %v2224 = vld [vmem:[%s2223] sm:$0xf]
        %v2225 = vld [vmem:[#allocation2] sm:$0xff]
        %v2226 = vld [vmem:[#allocation2 + $0x8] sm:$0xf]
        %v2229 = vcombine.high %v2225, %v2225
        %2230 = vrot.lane.b32.xlu0 %v2225, 126
        %v2231 = vpop.permute.xlu0 %2230
        %2232 = vrot.lane.b32.xlu0 %v2229, 126
        %v2233 = vpop.permute.xlu0 %2232
        %2234 = vrot.lane.b32.xlu0 %v2226, 126
        %v2235 = vpop.permute.xlu0 %2234
        %v2236 = vsel %vm664, %v2231, %v2233
        %v2237 = vsel %vm664, %v2233, %v2235
        %v2239 = vsel %vm349, %v2224, 0
        %v2241 = vsel %vm353, %v2236, 0
        %v2243 = vsel %vm353, %v2237, 0
        %v2245 = vsel %vm353, %v2235, 0
        %2247 = vmatprep.subr.mxu0 %v2243
        %2248 = vmatpush1.msra.mxu0 %v2241
        %2249 = vmatprep.subr.mxu0 0.0
        %2250 = vmatpush1.msra.mxu0 0.0
        %2251 = vmatprep.subr.mxu0 0.0
        %2252 = vmatpush1.msra.mxu0 0.0
        %2253 = vmatprep.subr.mxu0 0.0
        %2254 = vmatpush1.msra.mxu0 0.0
        %2255 = vmatprep.subr.mxu0 0.0
        %2256 = vmatpush1.msra.mxu0 0.0
        %2257 = vmatprep.subr.mxu0 0.0
        %2258 = vmatpush1.msra.mxu0 0.0
        %2259 = vmatprep.subr.mxu0 0.0
        %2260 = vmatpush1.msra.mxu0 0.0
        %2261 = vmatprep.subr.mxu0 0.0
        %2262 = vmatpush1.msra.mxu0 0.0
        %2263 = vmatprep.subr.mxu0 0.0
        %2264 = vmatpush1.msra.mxu0 0.0
        %2265 = vmatprep.subr.mxu0 0.0
        %2266 = vmatpush1.msra.mxu0 0.0
        %2267 = vmatprep.subr.mxu0 0.0
        %2268 = vmatpush1.msra.mxu0 0.0
        %2269 = vmatprep.subr.mxu0 0.0
        %2270 = vmatpush1.msra.mxu0 0.0
        %2271 = vmatprep.subr.mxu0 0.0
        %2272 = vmatpush1.msra.mxu0 0.0
        %2273 = vmatprep.subr.mxu0 0.0
        %2274 = vmatpush1.msra.mxu0 0.0
        %2275 = vmatprep.subr.mxu0 0.0
        %2276 = vmatpush1.msra.mxu0 0.0
        %2277 = vmatprep.subr.mxu0 0.0
        %2278 = vmatpush1.msra.mxu0 0.0
        %2279 = vmatprep.subr.mxu0 0.0
        %2280 = vmatpush1.msra.mxu0 0.0
        %2281 = vmatprep.subr.mxu0 0.0
        %2282 = vmatpush1.msra.mxu0 0.0
        %2283 = vmatprep.subr.mxu0 0.0
        %2284 = vmatpush1.msra.mxu0 0.0
        %2285 = vmatprep.subr.mxu0 0.0
        %2286 = vmatpush1.msra.mxu0 0.0
        %2287 = vmatprep.subr.mxu0 0.0
        %2288 = vmatpush1.msra.mxu0 0.0
        %2289 = vmatprep.subr.mxu0 0.0
        %2290 = vmatpush1.msra.mxu0 0.0
        %2291 = vmatprep.subr.mxu0 0.0
        %2292 = vmatpush1.msra.mxu0 0.0
        %2293 = vmatprep.subr.mxu0 0.0
        %2294 = vmatpush1.msra.mxu0 0.0
        %2295 = vmatprep.subr.mxu0 0.0
        %2296 = vmatpush1.msra.mxu0 0.0
        %2297 = vmatprep.subr.mxu0 0.0
        %2298 = vmatpush1.msra.mxu0 0.0
        %2299 = vmatprep.subr.mxu0 0.0
        %2300 = vmatpush1.msra.mxu0 0.0
        %2301 = vmatprep.subr.mxu0 0.0
        %2302 = vmatpush1.msra.mxu0 0.0
        %2303 = vmatprep.subr.mxu0 0.0
        %2304 = vmatpush1.msra.mxu0 0.0
        %2305 = vmatprep.subr.mxu0 0.0
        %2306 = vmatpush1.msra.mxu0 0.0
        %2307 = vmatprep.subr.mxu0 0.0
        %2308 = vmatpush1.msra.mxu0 0.0
        %2309 = vmatprep.subr.mxu0 0.0
        %2310 = vmatpush1.msra.mxu0 0.0
        %2311 = vmatprep.mubr.f32.mxu0 0.0
        %2312 = vmatmul.mubr.f32.gmra.mrb[0].mxu0 %v2239
        %v2313 = vpop.f32.mrb[0].mxu0
        %v2314 = vadd.f32 0.0, %v2313
        %v2315 = vpop.f32.mrb[0].mxu0
        %v2316 = vadd.f32 0.0, %v2315
        %2317 = vdwg.mxu0
        %2318 = vmatprep.subr.mxu0 0.0
        %2319 = vmatpush1.msra.mxu0 %v2245
        %2320 = vmatprep.subr.mxu0 0.0
        %2321 = vmatpush1.msra.mxu0 0.0
        %2322 = vmatprep.subr.mxu0 0.0
        %2323 = vmatpush1.msra.mxu0 0.0
        %2324 = vmatprep.subr.mxu0 0.0
        %2325 = vmatpush1.msra.mxu0 0.0
        %2326 = vmatprep.subr.mxu0 0.0
        %2327 = vmatpush1.msra.mxu0 0.0
        %2328 = vmatprep.subr.mxu0 0.0
        %2329 = vmatpush1.msra.mxu0 0.0
        %2330 = vmatprep.subr.mxu0 0.0
        %2331 = vmatpush1.msra.mxu0 0.0
        %2332 = vmatprep.subr.mxu0 0.0
        %2333 = vmatpush1.msra.mxu0 0.0
        %2334 = vmatprep.subr.mxu0 0.0
        %2335 = vmatpush1.msra.mxu0 0.0
        %2336 = vmatprep.subr.mxu0 0.0
        %2337 = vmatpush1.msra.mxu0 0.0
        %2338 = vmatprep.subr.mxu0 0.0
        %2339 = vmatpush1.msra.mxu0 0.0
        %2340 = vmatprep.subr.mxu0 0.0
        %2341 = vmatpush1.msra.mxu0 0.0
        %2342 = vmatprep.subr.mxu0 0.0
        %2343 = vmatpush1.msra.mxu0 0.0
        %2344 = vmatprep.subr.mxu0 0.0
        %2345 = vmatpush1.msra.mxu0 0.0
        %2346 = vmatprep.subr.mxu0 0.0
        %2347 = vmatpush1.msra.mxu0 0.0
        %2348 = vmatprep.subr.mxu0 0.0
        %2349 = vmatpush1.msra.mxu0 0.0
        %2350 = vmatprep.subr.mxu0 0.0
        %2351 = vmatpush1.msra.mxu0 0.0
        %2352 = vmatprep.subr.mxu0 0.0
        %2353 = vmatpush1.msra.mxu0 0.0
        %2354 = vmatprep.subr.mxu0 0.0
        %2355 = vmatpush1.msra.mxu0 0.0
        %2356 = vmatprep.subr.mxu0 0.0
        %2357 = vmatpush1.msra.mxu0 0.0
        %2358 = vmatprep.subr.mxu0 0.0
        %2359 = vmatpush1.msra.mxu0 0.0
        %2360 = vmatprep.subr.mxu0 0.0
        %2361 = vmatpush1.msra.mxu0 0.0
        %2362 = vmatprep.subr.mxu0 0.0
        %2363 = vmatpush1.msra.mxu0 0.0
        %2364 = vmatprep.subr.mxu0 0.0
        %2365 = vmatpush1.msra.mxu0 0.0
        %2366 = vmatprep.subr.mxu0 0.0
        %2367 = vmatpush1.msra.mxu0 0.0
        %2368 = vmatprep.subr.mxu0 0.0
        %2369 = vmatpush1.msra.mxu0 0.0
        %2370 = vmatprep.subr.mxu0 0.0
        %2371 = vmatpush1.msra.mxu0 0.0
        %2372 = vmatprep.subr.mxu0 0.0
        %2373 = vmatpush1.msra.mxu0 0.0
        %2374 = vmatprep.subr.mxu0 0.0
        %2375 = vmatpush1.msra.mxu0 0.0
        %2376 = vmatprep.subr.mxu0 0.0
        %2377 = vmatpush1.msra.mxu0 0.0
        %2378 = vmatprep.subr.mxu0 0.0
        %2379 = vmatpush1.msra.mxu0 0.0
        %2380 = vmatprep.subr.mxu0 0.0
        %2381 = vmatpush1.msra.mxu0 0.0
        %2382 = vmatprep.mubr.f32.mxu0 0.0
        %2383 = vmatmul.mubr.f32.gmra.mrb[0].mxu0 %v2239
        %v2384 = vpop.f32.mrb[0].mxu0
        %v2385 = vadd.f32 0.0, %v2384
        %v2386 = vpop.f32.mrb[0].mxu0
        %2387 = vdwg.mxu0
        %v2388 = vadd.f32 %v2149, %v2314
        %v2389 = vadd.f32 %v2151, %v2316
        %v2390 = vadd.f32 %v2220, %v2385
        %s2391 = scalar_lea.vmem %s4, 12
        %v2392 = vld [vmem:[%s2391] sm:$0xf]
        %v2393 = vld [vmem:[#allocation2] sm:$0xff]
        %v2394 = vld [vmem:[#allocation2 + $0x8] sm:$0xf]
        %v2397 = vcombine.high %v2393, %v2393
        %2398 = vrot.lane.b32.xlu0 %v2393, 110
        %v2399 = vpop.permute.xlu0 %2398
        %2400 = vrot.lane.b32.xlu0 %v2397, 110
        %v2401 = vpop.permute.xlu0 %2400
        %2402 = vrot.lane.b32.xlu0 %v2394, 110
        %v2403 = vpop.permute.xlu0 %2402
        %v2404 = vsel %vm833, %v2399, %v2401
        %v2405 = vsel %vm833, %v2401, %v2403
        %v2407 = vsel %vm349, %v2392, 0
        %v2409 = vsel %vm353, %v2404, 0
        %v2411 = vsel %vm353, %v2405, 0
        %v2413 = vsel %vm353, %v2403, 0
        %2415 = vmatprep.subr.mxu0 %v2411
        %2416 = vmatpush1.msra.mxu0 %v2409
        %2417 = vmatprep.subr.mxu0 0.0
        %2418 = vmatpush1.msra.mxu0 0.0
        %2419 = vmatprep.subr.mxu0 0.0
        %2420 = vmatpush1.msra.mxu0 0.0
        %2421 = vmatprep.subr.mxu0 0.0
        %2422 = vmatpush1.msra.mxu0 0.0
        %2423 = vmatprep.subr.mxu0 0.0
        %2424 = vmatpush1.msra.mxu0 0.0
        %2425 = vmatprep.subr.mxu0 0.0
        %2426 = vmatpush1.msra.mxu0 0.0
        %2427 = vmatprep.subr.mxu0 0.0
        %2428 = vmatpush1.msra.mxu0 0.0
        %2429 = vmatprep.subr.mxu0 0.0
        %2430 = vmatpush1.msra.mxu0 0.0
        %2431 = vmatprep.subr.mxu0 0.0
        %2432 = vmatpush1.msra.mxu0 0.0
        %2433 = vmatprep.subr.mxu0 0.0
        %2434 = vmatpush1.msra.mxu0 0.0
        %2435 = vmatprep.subr.mxu0 0.0
        %2436 = vmatpush1.msra.mxu0 0.0
        %2437 = vmatprep.subr.mxu0 0.0
        %2438 = vmatpush1.msra.mxu0 0.0
        %2439 = vmatprep.subr.mxu0 0.0
        %2440 = vmatpush1.msra.mxu0 0.0
        %2441 = vmatprep.subr.mxu0 0.0
        %2442 = vmatpush1.msra.mxu0 0.0
        %2443 = vmatprep.subr.mxu0 0.0
        %2444 = vmatpush1.msra.mxu0 0.0
        %2445 = vmatprep.subr.mxu0 0.0
        %2446 = vmatpush1.msra.mxu0 0.0
        %2447 = vmatprep.subr.mxu0 0.0
        %2448 = vmatpush1.msra.mxu0 0.0
        %2449 = vmatprep.subr.mxu0 0.0
        %2450 = vmatpush1.msra.mxu0 0.0
        %2451 = vmatprep.subr.mxu0 0.0
        %2452 = vmatpush1.msra.mxu0 0.0
        %2453 = vmatprep.subr.mxu0 0.0
        %2454 = vmatpush1.msra.mxu0 0.0
        %2455 = vmatprep.subr.mxu0 0.0
        %2456 = vmatpush1.msra.mxu0 0.0
        %2457 = vmatprep.subr.mxu0 0.0
        %2458 = vmatpush1.msra.mxu0 0.0
        %2459 = vmatprep.subr.mxu0 0.0
        %2460 = vmatpush1.msra.mxu0 0.0
        %2461 = vmatprep.subr.mxu0 0.0
        %2462 = vmatpush1.msra.mxu0 0.0
        %2463 = vmatprep.subr.mxu0 0.0
        %2464 = vmatpush1.msra.mxu0 0.0
        %2465 = vmatprep.subr.mxu0 0.0
        %2466 = vmatpush1.msra.mxu0 0.0
        %2467 = vmatprep.subr.mxu0 0.0
        %2468 = vmatpush1.msra.mxu0 0.0
        %2469 = vmatprep.subr.mxu0 0.0
        %2470 = vmatpush1.msra.mxu0 0.0
        %2471 = vmatprep.subr.mxu0 0.0
        %2472 = vmatpush1.msra.mxu0 0.0
        %2473 = vmatprep.subr.mxu0 0.0
        %2474 = vmatpush1.msra.mxu0 0.0
        %2475 = vmatprep.subr.mxu0 0.0
        %2476 = vmatpush1.msra.mxu0 0.0
        %2477 = vmatprep.subr.mxu0 0.0
        %2478 = vmatpush1.msra.mxu0 0.0
        %2479 = vmatprep.mubr.f32.mxu0 0.0
        %2480 = vmatmul.mubr.f32.gmra.mrb[0].mxu0 %v2407
        %v2481 = vpop.f32.mrb[0].mxu0
        %v2482 = vadd.f32 0.0, %v2481
        %v2483 = vpop.f32.mrb[0].mxu0
        %v2484 = vadd.f32 0.0, %v2483
        %2485 = vdwg.mxu0
        %2486 = vmatprep.subr.mxu0 0.0
        %2487 = vmatpush1.msra.mxu0 %v2413
        %2488 = vmatprep.subr.mxu0 0.0
        %2489 = vmatpush1.msra.mxu0 0.0
        %2490 = vmatprep.subr.mxu0 0.0
        %2491 = vmatpush1.msra.mxu0 0.0
        %2492 = vmatprep.subr.mxu0 0.0
        %2493 = vmatpush1.msra.mxu0 0.0
        %2494 = vmatprep.subr.mxu0 0.0
        %2495 = vmatpush1.msra.mxu0 0.0
        %2496 = vmatprep.subr.mxu0 0.0
        %2497 = vmatpush1.msra.mxu0 0.0
        %2498 = vmatprep.subr.mxu0 0.0
        %2499 = vmatpush1.msra.mxu0 0.0
        %2500 = vmatprep.subr.mxu0 0.0
        %2501 = vmatpush1.msra.mxu0 0.0
        %2502 = vmatprep.subr.mxu0 0.0
        %2503 = vmatpush1.msra.mxu0 0.0
        %2504 = vmatprep.subr.mxu0 0.0
        %2505 = vmatpush1.msra.mxu0 0.0
        %2506 = vmatprep.subr.mxu0 0.0
        %2507 = vmatpush1.msra.mxu0 0.0
        %2508 = vmatprep.subr.mxu0 0.0
        %2509 = vmatpush1.msra.mxu0 0.0
        %2510 = vmatprep.subr.mxu0 0.0
        %2511 = vmatpush1.msra.mxu0 0.0
        %2512 = vmatprep.subr.mxu0 0.0
        %2513 = vmatpush1.msra.mxu0 0.0
        %2514 = vmatprep.subr.mxu0 0.0
        %2515 = vmatpush1.msra.mxu0 0.0
        %2516 = vmatprep.subr.mxu0 0.0
        %2517 = vmatpush1.msra.mxu0 0.0
        %2518 = vmatprep.subr.mxu0 0.0
        %2519 = vmatpush1.msra.mxu0 0.0
        %2520 = vmatprep.subr.mxu0 0.0
        %2521 = vmatpush1.msra.mxu0 0.0
        %2522 = vmatprep.subr.mxu0 0.0
        %2523 = vmatpush1.msra.mxu0 0.0
        %2524 = vmatprep.subr.mxu0 0.0
        %2525 = vmatpush1.msra.mxu0 0.0
        %2526 = vmatprep.subr.mxu0 0.0
        %2527 = vmatpush1.msra.mxu0 0.0
        %2528 = vmatprep.subr.mxu0 0.0
        %2529 = vmatpush1.msra.mxu0 0.0
        %2530 = vmatprep.subr.mxu0 0.0
        %2531 = vmatpush1.msra.mxu0 0.0
        %2532 = vmatprep.subr.mxu0 0.0
        %2533 = vmatpush1.msra.mxu0 0.0
        %2534 = vmatprep.subr.mxu0 0.0
        %2535 = vmatpush1.msra.mxu0 0.0
        %2536 = vmatprep.subr.mxu0 0.0
        %2537 = vmatpush1.msra.mxu0 0.0
        %2538 = vmatprep.subr.mxu0 0.0
        %2539 = vmatpush1.msra.mxu0 0.0
        %2540 = vmatprep.subr.mxu0 0.0
        %2541 = vmatpush1.msra.mxu0 0.0
        %2542 = vmatprep.subr.mxu0 0.0
        %2543 = vmatpush1.msra.mxu0 0.0
        %2544 = vmatprep.subr.mxu0 0.0
        %2545 = vmatpush1.msra.mxu0 0.0
        %2546 = vmatprep.subr.mxu0 0.0
        %2547 = vmatpush1.msra.mxu0 0.0
        %2548 = vmatprep.subr.mxu0 0.0
        %2549 = vmatpush1.msra.mxu0 0.0
        %2550 = vmatprep.mubr.f32.mxu0 0.0
        %2551 = vmatmul.mubr.f32.gmra.mrb[0].mxu0 %v2407
        %v2552 = vpop.f32.mrb[0].mxu0
        %v2553 = vadd.f32 0.0, %v2552
        %v2554 = vpop.f32.mrb[0].mxu0
        %2555 = vdwg.mxu0
        %v2556 = vadd.f32 %v2388, %v2482
        %v2557 = vadd.f32 %v2389, %v2484
        %v2558 = vadd.f32 %v2390, %v2553
        %s2559 = scalar_lea.vmem %s4, 16
        %v2560 = vld [vmem:[%s2559] sm:$0xf]
        %v2561 = vld [vmem:[#allocation2] sm:$0xff]
        %v2562 = vld [vmem:[#allocation2 + $0x8] sm:$0xf]
        %v2565 = vcombine.high %v2561, %v2561
        %2566 = vrot.lane.b32.xlu0 %v2561, 109
        %v2567 = vpop.permute.xlu0 %2566
        %2568 = vrot.lane.b32.xlu0 %v2565, 109
        %v2569 = vpop.permute.xlu0 %2568
        %2570 = vrot.lane.b32.xlu0 %v2562, 109
        %v2571 = vpop.permute.xlu0 %2570
        %v2572 = vsel %vm1002, %v2567, %v2569
        %v2573 = vsel %vm1002, %v2569, %v2571
        %v2575 = vsel %vm349, %v2560, 0
        %v2577 = vsel %vm353, %v2572, 0
        %v2579 = vsel %vm353, %v2573, 0
        %v2581 = vsel %vm353, %v2571, 0
        %2583 = vmatprep.subr.mxu0 %v2579
        %2584 = vmatpush1.msra.mxu0 %v2577
        %2585 = vmatprep.subr.mxu0 0.0
        %2586 = vmatpush1.msra.mxu0 0.0
        %2587 = vmatprep.subr.mxu0 0.0
        %2588 = vmatpush1.msra.mxu0 0.0
        %2589 = vmatprep.subr.mxu0 0.0
        %2590 = vmatpush1.msra.mxu0 0.0
        %2591 = vmatprep.subr.mxu0 0.0
        %2592 = vmatpush1.msra.mxu0 0.0
        %2593 = vmatprep.subr.mxu0 0.0
        %2594 = vmatpush1.msra.mxu0 0.0
        %2595 = vmatprep.subr.mxu0 0.0
        %2596 = vmatpush1.msra.mxu0 0.0
        %2597 = vmatprep.subr.mxu0 0.0
        %2598 = vmatpush1.msra.mxu0 0.0
        %2599 = vmatprep.subr.mxu0 0.0
        %2600 = vmatpush1.msra.mxu0 0.0
        %2601 = vmatprep.subr.mxu0 0.0
        %2602 = vmatpush1.msra.mxu0 0.0
        %2603 = vmatprep.subr.mxu0 0.0
        %2604 = vmatpush1.msra.mxu0 0.0
        %2605 = vmatprep.subr.mxu0 0.0
        %2606 = vmatpush1.msra.mxu0 0.0
        %2607 = vmatprep.subr.mxu0 0.0
        %2608 = vmatpush1.msra.mxu0 0.0
        %2609 = vmatprep.subr.mxu0 0.0
        %2610 = vmatpush1.msra.mxu0 0.0
        %2611 = vmatprep.subr.mxu0 0.0
        %2612 = vmatpush1.msra.mxu0 0.0
        %2613 = vmatprep.subr.mxu0 0.0
        %2614 = vmatpush1.msra.mxu0 0.0
        %2615 = vmatprep.subr.mxu0 0.0
        %2616 = vmatpush1.msra.mxu0 0.0
        %2617 = vmatprep.subr.mxu0 0.0
        %2618 = vmatpush1.msra.mxu0 0.0
        %2619 = vmatprep.subr.mxu0 0.0
        %2620 = vmatpush1.msra.mxu0 0.0
        %2621 = vmatprep.subr.mxu0 0.0
        %2622 = vmatpush1.msra.mxu0 0.0
        %2623 = vmatprep.subr.mxu0 0.0
        %2624 = vmatpush1.msra.mxu0 0.0
        %2625 = vmatprep.subr.mxu0 0.0
        %2626 = vmatpush1.msra.mxu0 0.0
        %2627 = vmatprep.subr.mxu0 0.0
        %2628 = vmatpush1.msra.mxu0 0.0
        %2629 = vmatprep.subr.mxu0 0.0
        %2630 = vmatpush1.msra.mxu0 0.0
        %2631 = vmatprep.subr.mxu0 0.0
        %2632 = vmatpush1.msra.mxu0 0.0
        %2633 = vmatprep.subr.mxu0 0.0
        %2634 = vmatpush1.msra.mxu0 0.0
        %2635 = vmatprep.subr.mxu0 0.0
        %2636 = vmatpush1.msra.mxu0 0.0
        %2637 = vmatprep.subr.mxu0 0.0
        %2638 = vmatpush1.msra.mxu0 0.0
        %2639 = vmatprep.subr.mxu0 0.0
        %2640 = vmatpush1.msra.mxu0 0.0
        %2641 = vmatprep.subr.mxu0 0.0
        %2642 = vmatpush1.msra.mxu0 0.0
        %2643 = vmatprep.subr.mxu0 0.0
        %2644 = vmatpush1.msra.mxu0 0.0
        %2645 = vmatprep.subr.mxu0 0.0
        %2646 = vmatpush1.msra.mxu0 0.0
        %2647 = vmatprep.mubr.f32.mxu0 0.0
        %2648 = vmatmul.mubr.f32.gmra.mrb[0].mxu0 %v2575
        %v2649 = vpop.f32.mrb[0].mxu0
        %v2650 = vadd.f32 0.0, %v2649
        %v2651 = vpop.f32.mrb[0].mxu0
        %v2652 = vadd.f32 0.0, %v2651
        %2653 = vdwg.mxu0
        %2654 = vmatprep.subr.mxu0 0.0
        %2655 = vmatpush1.msra.mxu0 %v2581
        %2656 = vmatprep.subr.mxu0 0.0
        %2657 = vmatpush1.msra.mxu0 0.0
        %2658 = vmatprep.subr.mxu0 0.0
        %2659 = vmatpush1.msra.mxu0 0.0
        %2660 = vmatprep.subr.mxu0 0.0
        %2661 = vmatpush1.msra.mxu0 0.0
        %2662 = vmatprep.subr.mxu0 0.0
        %2663 = vmatpush1.msra.mxu0 0.0
        %2664 = vmatprep.subr.mxu0 0.0
        %2665 = vmatpush1.msra.mxu0 0.0
        %2666 = vmatprep.subr.mxu0 0.0
        %2667 = vmatpush1.msra.mxu0 0.0
        %2668 = vmatprep.subr.mxu0 0.0
        %2669 = vmatpush1.msra.mxu0 0.0
        %2670 = vmatprep.subr.mxu0 0.0
        %2671 = vmatpush1.msra.mxu0 0.0
        %2672 = vmatprep.subr.mxu0 0.0
        %2673 = vmatpush1.msra.mxu0 0.0
        %2674 = vmatprep.subr.mxu0 0.0
        %2675 = vmatpush1.msra.mxu0 0.0
        %2676 = vmatprep.subr.mxu0 0.0
        %2677 = vmatpush1.msra.mxu0 0.0
        %2678 = vmatprep.subr.mxu0 0.0
        %2679 = vmatpush1.msra.mxu0 0.0
        %2680 = vmatprep.subr.mxu0 0.0
        %2681 = vmatpush1.msra.mxu0 0.0
        %2682 = vmatprep.subr.mxu0 0.0
        %2683 = vmatpush1.msra.mxu0 0.0
        %2684 = vmatprep.subr.mxu0 0.0
        %2685 = vmatpush1.msra.mxu0 0.0
        %2686 = vmatprep.subr.mxu0 0.0
        %2687 = vmatpush1.msra.mxu0 0.0
        %2688 = vmatprep.subr.mxu0 0.0
        %2689 = vmatpush1.msra.mxu0 0.0
        %2690 = vmatprep.subr.mxu0 0.0
        %2691 = vmatpush1.msra.mxu0 0.0
        %2692 = vmatprep.subr.mxu0 0.0
        %2693 = vmatpush1.msra.mxu0 0.0
        %2694 = vmatprep.subr.mxu0 0.0
        %2695 = vmatpush1.msra.mxu0 0.0
        %2696 = vmatprep.subr.mxu0 0.0
        %2697 = vmatpush1.msra.mxu0 0.0
        %2698 = vmatprep.subr.mxu0 0.0
        %2699 = vmatpush1.msra.mxu0 0.0
        %2700 = vmatprep.subr.mxu0 0.0
        %2701 = vmatpush1.msra.mxu0 0.0
        %2702 = vmatprep.subr.mxu0 0.0
        %2703 = vmatpush1.msra.mxu0 0.0
        %2704 = vmatprep.subr.mxu0 0.0
        %2705 = vmatpush1.msra.mxu0 0.0
        %2706 = vmatprep.subr.mxu0 0.0
        %2707 = vmatpush1.msra.mxu0 0.0
        %2708 = vmatprep.subr.mxu0 0.0
        %2709 = vmatpush1.msra.mxu0 0.0
        %2710 = vmatprep.subr.mxu0 0.0
        %2711 = vmatpush1.msra.mxu0 0.0
        %2712 = vmatprep.subr.mxu0 0.0
        %2713 = vmatpush1.msra.mxu0 0.0
        %2714 = vmatprep.subr.mxu0 0.0
        %2715 = vmatpush1.msra.mxu0 0.0
        %2716 = vmatprep.subr.mxu0 0.0
        %2717 = vmatpush1.msra.mxu0 0.0
        %2718 = vmatprep.mubr.f32.mxu0 0.0
        %2719 = vmatmul.mubr.f32.gmra.mrb[0].mxu0 %v2575
        %v2720 = vpop.f32.mrb[0].mxu0
        %v2721 = vadd.f32 0.0, %v2720
        %v2722 = vpop.f32.mrb[0].mxu0
        %2723 = vdwg.mxu0
        %v2724 = vadd.f32 %v2556, %v2650
        %v2725 = vadd.f32 %v2557, %v2652
        %v2726 = vadd.f32 %v2558, %v2721
        %s2727 = scalar_lea.vmem %s4, 20
        %v2728 = vld [vmem:[%s2727] sm:$0xf]
        %v2729 = vld [vmem:[#allocation2] sm:$0xff]
        %v2730 = vld [vmem:[#allocation2 + $0x8] sm:$0xf]
        %v2733 = vcombine.high %v2729, %v2729
        %2734 = vrot.lane.b32.xlu0 %v2729, 108
        %v2735 = vpop.permute.xlu0 %2734
        %2736 = vrot.lane.b32.xlu0 %v2733, 108
        %v2737 = vpop.permute.xlu0 %2736
        %2738 = vrot.lane.b32.xlu0 %v2730, 108
        %v2739 = vpop.permute.xlu0 %2738
        %v2740 = vsel %vm1171, %v2735, %v2737
        %v2741 = vsel %vm1171, %v2737, %v2739
        %v2743 = vsel %vm349, %v2728, 0
        %v2745 = vsel %vm353, %v2740, 0
        %v2747 = vsel %vm353, %v2741, 0
        %v2749 = vsel %vm353, %v2739, 0
        %2751 = vmatprep.subr.mxu0 %v2747
        %2752 = vmatpush1.msra.mxu0 %v2745
        %2753 = vmatprep.subr.mxu0 0.0
        %2754 = vmatpush1.msra.mxu0 0.0
        %2755 = vmatprep.subr.mxu0 0.0
        %2756 = vmatpush1.msra.mxu0 0.0
        %2757 = vmatprep.subr.mxu0 0.0
        %2758 = vmatpush1.msra.mxu0 0.0
        %2759 = vmatprep.subr.mxu0 0.0
        %2760 = vmatpush1.msra.mxu0 0.0
        %2761 = vmatprep.subr.mxu0 0.0
        %2762 = vmatpush1.msra.mxu0 0.0
        %2763 = vmatprep.subr.mxu0 0.0
        %2764 = vmatpush1.msra.mxu0 0.0
        %2765 = vmatprep.subr.mxu0 0.0
        %2766 = vmatpush1.msra.mxu0 0.0
        %2767 = vmatprep.subr.mxu0 0.0
        %2768 = vmatpush1.msra.mxu0 0.0
        %2769 = vmatprep.subr.mxu0 0.0
        %2770 = vmatpush1.msra.mxu0 0.0
        %2771 = vmatprep.subr.mxu0 0.0
        %2772 = vmatpush1.msra.mxu0 0.0
        %2773 = vmatprep.subr.mxu0 0.0
        %2774 = vmatpush1.msra.mxu0 0.0
        %2775 = vmatprep.subr.mxu0 0.0
        %2776 = vmatpush1.msra.mxu0 0.0
        %2777 = vmatprep.subr.mxu0 0.0
        %2778 = vmatpush1.msra.mxu0 0.0
        %2779 = vmatprep.subr.mxu0 0.0
        %2780 = vmatpush1.msra.mxu0 0.0
        %2781 = vmatprep.subr.mxu0 0.0
        %2782 = vmatpush1.msra.mxu0 0.0
        %2783 = vmatprep.subr.mxu0 0.0
        %2784 = vmatpush1.msra.mxu0 0.0
        %2785 = vmatprep.subr.mxu0 0.0
        %2786 = vmatpush1.msra.mxu0 0.0
        %2787 = vmatprep.subr.mxu0 0.0
        %2788 = vmatpush1.msra.mxu0 0.0
        %2789 = vmatprep.subr.mxu0 0.0
        %2790 = vmatpush1.msra.mxu0 0.0
        %2791 = vmatprep.subr.mxu0 0.0
        %2792 = vmatpush1.msra.mxu0 0.0
        %2793 = vmatprep.subr.mxu0 0.0
        %2794 = vmatpush1.msra.mxu0 0.0
        %2795 = vmatprep.subr.mxu0 0.0
        %2796 = vmatpush1.msra.mxu0 0.0
        %2797 = vmatprep.subr.mxu0 0.0
        %2798 = vmatpush1.msra.mxu0 0.0
        %2799 = vmatprep.subr.mxu0 0.0
        %2800 = vmatpush1.msra.mxu0 0.0
        %2801 = vmatprep.subr.mxu0 0.0
        %2802 = vmatpush1.msra.mxu0 0.0
        %2803 = vmatprep.subr.mxu0 0.0
        %2804 = vmatpush1.msra.mxu0 0.0
        %2805 = vmatprep.subr.mxu0 0.0
        %2806 = vmatpush1.msra.mxu0 0.0
        %2807 = vmatprep.subr.mxu0 0.0
        %2808 = vmatpush1.msra.mxu0 0.0
        %2809 = vmatprep.subr.mxu0 0.0
        %2810 = vmatpush1.msra.mxu0 0.0
        %2811 = vmatprep.subr.mxu0 0.0
        %2812 = vmatpush1.msra.mxu0 0.0
        %2813 = vmatprep.subr.mxu0 0.0
        %2814 = vmatpush1.msra.mxu0 0.0
        %2815 = vmatprep.mubr.f32.mxu0 0.0
        %2816 = vmatmul.mubr.f32.gmra.mrb[0].mxu0 %v2743
        %v2817 = vpop.f32.mrb[0].mxu0
        %v2818 = vadd.f32 0.0, %v2817
        %v2819 = vpop.f32.mrb[0].mxu0
        %v2820 = vadd.f32 0.0, %v2819
        %2821 = vdwg.mxu0
        %2822 = vmatprep.subr.mxu0 0.0
        %2823 = vmatpush1.msra.mxu0 %v2749
        %2824 = vmatprep.subr.mxu0 0.0
        %2825 = vmatpush1.msra.mxu0 0.0
        %2826 = vmatprep.subr.mxu0 0.0
        %2827 = vmatpush1.msra.mxu0 0.0
        %2828 = vmatprep.subr.mxu0 0.0
        %2829 = vmatpush1.msra.mxu0 0.0
        %2830 = vmatprep.subr.mxu0 0.0
        %2831 = vmatpush1.msra.mxu0 0.0
        %2832 = vmatprep.subr.mxu0 0.0
        %2833 = vmatpush1.msra.mxu0 0.0
        %2834 = vmatprep.subr.mxu0 0.0
        %2835 = vmatpush1.msra.mxu0 0.0
        %2836 = vmatprep.subr.mxu0 0.0
        %2837 = vmatpush1.msra.mxu0 0.0
        %2838 = vmatprep.subr.mxu0 0.0
        %2839 = vmatpush1.msra.mxu0 0.0
        %2840 = vmatprep.subr.mxu0 0.0
        %2841 = vmatpush1.msra.mxu0 0.0
        %2842 = vmatprep.subr.mxu0 0.0
        %2843 = vmatpush1.msra.mxu0 0.0
        %2844 = vmatprep.subr.mxu0 0.0
        %2845 = vmatpush1.msra.mxu0 0.0
        %2846 = vmatprep.subr.mxu0 0.0
        %2847 = vmatpush1.msra.mxu0 0.0
        %2848 = vmatprep.subr.mxu0 0.0
        %2849 = vmatpush1.msra.mxu0 0.0
        %2850 = vmatprep.subr.mxu0 0.0
        %2851 = vmatpush1.msra.mxu0 0.0
        %2852 = vmatprep.subr.mxu0 0.0
        %2853 = vmatpush1.msra.mxu0 0.0
        %2854 = vmatprep.subr.mxu0 0.0
        %2855 = vmatpush1.msra.mxu0 0.0
        %2856 = vmatprep.subr.mxu0 0.0
        %2857 = vmatpush1.msra.mxu0 0.0
        %2858 = vmatprep.subr.mxu0 0.0
        %2859 = vmatpush1.msra.mxu0 0.0
        %2860 = vmatprep.subr.mxu0 0.0
        %2861 = vmatpush1.msra.mxu0 0.0
        %2862 = vmatprep.subr.mxu0 0.0
        %2863 = vmatpush1.msra.mxu0 0.0
        %2864 = vmatprep.subr.mxu0 0.0
        %2865 = vmatpush1.msra.mxu0 0.0
        %2866 = vmatprep.subr.mxu0 0.0
        %2867 = vmatpush1.msra.mxu0 0.0
        %2868 = vmatprep.subr.mxu0 0.0
        %2869 = vmatpush1.msra.mxu0 0.0
        %2870 = vmatprep.subr.mxu0 0.0
        %2871 = vmatpush1.msra.mxu0 0.0
        %2872 = vmatprep.subr.mxu0 0.0
        %2873 = vmatpush1.msra.mxu0 0.0
        %2874 = vmatprep.subr.mxu0 0.0
        %2875 = vmatpush1.msra.mxu0 0.0
        %2876 = vmatprep.subr.mxu0 0.0
        %2877 = vmatpush1.msra.mxu0 0.0
        %2878 = vmatprep.subr.mxu0 0.0
        %2879 = vmatpush1.msra.mxu0 0.0
        %2880 = vmatprep.subr.mxu0 0.0
        %2881 = vmatpush1.msra.mxu0 0.0
        %2882 = vmatprep.subr.mxu0 0.0
        %2883 = vmatpush1.msra.mxu0 0.0
        %2884 = vmatprep.subr.mxu0 0.0
        %2885 = vmatpush1.msra.mxu0 0.0
        %2886 = vmatprep.mubr.f32.mxu0 0.0
        %2887 = vmatmul.mubr.f32.gmra.mrb[0].mxu0 %v2743
        %v2888 = vpop.f32.mrb[0].mxu0
        %v2889 = vadd.f32 0.0, %v2888
        %v2890 = vpop.f32.mrb[0].mxu0
        %2891 = vdwg.mxu0
        %v2892 = vadd.f32 %v2724, %v2818
        %v2893 = vadd.f32 %v2725, %v2820
        %v2894 = vadd.f32 %v2726, %v2889
        %s2895 = scalar_lea.vmem %s4, 24
        %v2896 = vld [vmem:[%s2895] sm:$0xf]
        %v2897 = vld [vmem:[#allocation2] sm:$0xff]
        %v2898 = vld [vmem:[#allocation2 + $0x8] sm:$0xf]
        %v2901 = vcombine.high %v2897, %v2897
        %2902 = vrot.lane.b32.xlu0 %v2897, 92
        %v2903 = vpop.permute.xlu0 %2902
        %2904 = vrot.lane.b32.xlu0 %v2901, 92
        %v2905 = vpop.permute.xlu0 %2904
        %2906 = vrot.lane.b32.xlu0 %v2898, 92
        %v2907 = vpop.permute.xlu0 %2906
        %v2908 = vsel %vm1340, %v2903, %v2905
        %v2909 = vsel %vm1340, %v2905, %v2907
        %v2911 = vsel %vm349, %v2896, 0
        %v2913 = vsel %vm353, %v2908, 0
        %v2915 = vsel %vm353, %v2909, 0
        %v2917 = vsel %vm353, %v2907, 0
        %2919 = vmatprep.subr.mxu0 %v2915
        %2920 = vmatpush1.msra.mxu0 %v2913
        %2921 = vmatprep.subr.mxu0 0.0
        %2922 = vmatpush1.msra.mxu0 0.0
        %2923 = vmatprep.subr.mxu0 0.0
        %2924 = vmatpush1.msra.mxu0 0.0
        %2925 = vmatprep.subr.mxu0 0.0
        %2926 = vmatpush1.msra.mxu0 0.0
        %2927 = vmatprep.subr.mxu0 0.0
        %2928 = vmatpush1.msra.mxu0 0.0
        %2929 = vmatprep.subr.mxu0 0.0
        %2930 = vmatpush1.msra.mxu0 0.0
        %2931 = vmatprep.subr.mxu0 0.0
        %2932 = vmatpush1.msra.mxu0 0.0
        %2933 = vmatprep.subr.mxu0 0.0
        %2934 = vmatpush1.msra.mxu0 0.0
        %2935 = vmatprep.subr.mxu0 0.0
        %2936 = vmatpush1.msra.mxu0 0.0
        %2937 = vmatprep.subr.mxu0 0.0
        %2938 = vmatpush1.msra.mxu0 0.0
        %2939 = vmatprep.subr.mxu0 0.0
        %2940 = vmatpush1.msra.mxu0 0.0
        %2941 = vmatprep.subr.mxu0 0.0
        %2942 = vmatpush1.msra.mxu0 0.0
        %2943 = vmatprep.subr.mxu0 0.0
        %2944 = vmatpush1.msra.mxu0 0.0
        %2945 = vmatprep.subr.mxu0 0.0
        %2946 = vmatpush1.msra.mxu0 0.0
        %2947 = vmatprep.subr.mxu0 0.0
        %2948 = vmatpush1.msra.mxu0 0.0
        %2949 = vmatprep.subr.mxu0 0.0
        %2950 = vmatpush1.msra.mxu0 0.0
        %2951 = vmatprep.subr.mxu0 0.0
        %2952 = vmatpush1.msra.mxu0 0.0
        %2953 = vmatprep.subr.mxu0 0.0
        %2954 = vmatpush1.msra.mxu0 0.0
        %2955 = vmatprep.subr.mxu0 0.0
        %2956 = vmatpush1.msra.mxu0 0.0
        %2957 = vmatprep.subr.mxu0 0.0
        %2958 = vmatpush1.msra.mxu0 0.0
        %2959 = vmatprep.subr.mxu0 0.0
        %2960 = vmatpush1.msra.mxu0 0.0
        %2961 = vmatprep.subr.mxu0 0.0
        %2962 = vmatpush1.msra.mxu0 0.0
        %2963 = vmatprep.subr.mxu0 0.0
        %2964 = vmatpush1.msra.mxu0 0.0
        %2965 = vmatprep.subr.mxu0 0.0
        %2966 = vmatpush1.msra.mxu0 0.0
        %2967 = vmatprep.subr.mxu0 0.0
        %2968 = vmatpush1.msra.mxu0 0.0
        %2969 = vmatprep.subr.mxu0 0.0
        %2970 = vmatpush1.msra.mxu0 0.0
        %2971 = vmatprep.subr.mxu0 0.0
        %2972 = vmatpush1.msra.mxu0 0.0
        %2973 = vmatprep.subr.mxu0 0.0
        %2974 = vmatpush1.msra.mxu0 0.0
        %2975 = vmatprep.subr.mxu0 0.0
        %2976 = vmatpush1.msra.mxu0 0.0
        %2977 = vmatprep.subr.mxu0 0.0
        %2978 = vmatpush1.msra.mxu0 0.0
        %2979 = vmatprep.subr.mxu0 0.0
        %2980 = vmatpush1.msra.mxu0 0.0
        %2981 = vmatprep.subr.mxu0 0.0
        %2982 = vmatpush1.msra.mxu0 0.0
        %2983 = vmatprep.mubr.f32.mxu0 0.0
        %2984 = vmatmul.mubr.f32.gmra.mrb[0].mxu0 %v2911
        %v2985 = vpop.f32.mrb[0].mxu0
        %v2986 = vadd.f32 0.0, %v2985
        %v2987 = vpop.f32.mrb[0].mxu0
        %v2988 = vadd.f32 0.0, %v2987
        %2989 = vdwg.mxu0
        %2990 = vmatprep.subr.mxu0 0.0
        %2991 = vmatpush1.msra.mxu0 %v2917
        %2992 = vmatprep.subr.mxu0 0.0
        %2993 = vmatpush1.msra.mxu0 0.0
        %2994 = vmatprep.subr.mxu0 0.0
        %2995 = vmatpush1.msra.mxu0 0.0
        %2996 = vmatprep.subr.mxu0 0.0
        %2997 = vmatpush1.msra.mxu0 0.0
        %2998 = vmatprep.subr.mxu0 0.0
        %2999 = vmatpush1.msra.mxu0 0.0
        %3000 = vmatprep.subr.mxu0 0.0
        %3001 = vmatpush1.msra.mxu0 0.0
        %3002 = vmatprep.subr.mxu0 0.0
        %3003 = vmatpush1.msra.mxu0 0.0
        %3004 = vmatprep.subr.mxu0 0.0
        %3005 = vmatpush1.msra.mxu0 0.0
        %3006 = vmatprep.subr.mxu0 0.0
        %3007 = vmatpush1.msra.mxu0 0.0
        %3008 = vmatprep.subr.mxu0 0.0
        %3009 = vmatpush1.msra.mxu0 0.0
        %3010 = vmatprep.subr.mxu0 0.0
        %3011 = vmatpush1.msra.mxu0 0.0
        %3012 = vmatprep.subr.mxu0 0.0
        %3013 = vmatpush1.msra.mxu0 0.0
        %3014 = vmatprep.subr.mxu0 0.0
        %3015 = vmatpush1.msra.mxu0 0.0
        %3016 = vmatprep.subr.mxu0 0.0
        %3017 = vmatpush1.msra.mxu0 0.0
        %3018 = vmatprep.subr.mxu0 0.0
        %3019 = vmatpush1.msra.mxu0 0.0
        %3020 = vmatprep.subr.mxu0 0.0
        %3021 = vmatpush1.msra.mxu0 0.0
        %3022 = vmatprep.subr.mxu0 0.0
        %3023 = vmatpush1.msra.mxu0 0.0
        %3024 = vmatprep.subr.mxu0 0.0
        %3025 = vmatpush1.msra.mxu0 0.0
        %3026 = vmatprep.subr.mxu0 0.0
        %3027 = vmatpush1.msra.mxu0 0.0
        %3028 = vmatprep.subr.mxu0 0.0
        %3029 = vmatpush1.msra.mxu0 0.0
        %3030 = vmatprep.subr.mxu0 0.0
        %3031 = vmatpush1.msra.mxu0 0.0
        %3032 = vmatprep.subr.mxu0 0.0
        %3033 = vmatpush1.msra.mxu0 0.0
        %3034 = vmatprep.subr.mxu0 0.0
        %3035 = vmatpush1.msra.mxu0 0.0
        %3036 = vmatprep.subr.mxu0 0.0
        %3037 = vmatpush1.msra.mxu0 0.0
        %3038 = vmatprep.subr.mxu0 0.0
        %3039 = vmatpush1.msra.mxu0 0.0
        %3040 = vmatprep.subr.mxu0 0.0
        %3041 = vmatpush1.msra.mxu0 0.0
        %3042 = vmatprep.subr.mxu0 0.0
        %3043 = vmatpush1.msra.mxu0 0.0
        %3044 = vmatprep.subr.mxu0 0.0
        %3045 = vmatpush1.msra.mxu0 0.0
        %3046 = vmatprep.subr.mxu0 0.0
        %3047 = vmatpush1.msra.mxu0 0.0
        %3048 = vmatprep.subr.mxu0 0.0
        %3049 = vmatpush1.msra.mxu0 0.0
        %3050 = vmatprep.subr.mxu0 0.0
        %3051 = vmatpush1.msra.mxu0 0.0
        %3052 = vmatprep.subr.mxu0 0.0
        %3053 = vmatpush1.msra.mxu0 0.0
        %3054 = vmatprep.mubr.f32.mxu0 0.0
        %3055 = vmatmul.mubr.f32.gmra.mrb[0].mxu0 %v2911
        %v3056 = vpop.f32.mrb[0].mxu0
        %v3057 = vadd.f32 0.0, %v3056
        %v3058 = vpop.f32.mrb[0].mxu0
        %3059 = vdwg.mxu0
        %v3060 = vadd.f32 %v2892, %v2986
        %v3061 = vadd.f32 %v2893, %v2988
        %v3062 = vadd.f32 %v2894, %v3057
        %s3063 = scalar_lea.vmem %s4, 28
        %v3064 = vld [vmem:[%s3063] sm:$0xf]
        %v3065 = vld [vmem:[#allocation2] sm:$0xff]
        %v3066 = vld [vmem:[#allocation2 + $0x8] sm:$0xf]
        %v3069 = vcombine.high %v3065, %v3065
        %3070 = vrot.lane.b32.xlu0 %v3065, 91
        %v3071 = vpop.permute.xlu0 %3070
        %3072 = vrot.lane.b32.xlu0 %v3069, 91
        %v3073 = vpop.permute.xlu0 %3072
        %3074 = vrot.lane.b32.xlu0 %v3066, 91
        %v3075 = vpop.permute.xlu0 %3074
        %v3076 = vsel %vm1509, %v3071, %v3073
        %v3077 = vsel %vm1509, %v3073, %v3075
        %v3079 = vsel %vm349, %v3064, 0
        %v3081 = vsel %vm353, %v3076, 0
        %v3083 = vsel %vm353, %v3077, 0
        %v3085 = vsel %vm353, %v3075, 0
        %3087 = vmatprep.subr.mxu0 %v3083
        %3088 = vmatpush1.msra.mxu0 %v3081
        %3089 = vmatprep.subr.mxu0 0.0
        %3090 = vmatpush1.msra.mxu0 0.0
        %3091 = vmatprep.subr.mxu0 0.0
        %3092 = vmatpush1.msra.mxu0 0.0
        %3093 = vmatprep.subr.mxu0 0.0
        %3094 = vmatpush1.msra.mxu0 0.0
        %3095 = vmatprep.subr.mxu0 0.0
        %3096 = vmatpush1.msra.mxu0 0.0
        %3097 = vmatprep.subr.mxu0 0.0
        %3098 = vmatpush1.msra.mxu0 0.0
        %3099 = vmatprep.subr.mxu0 0.0
        %3100 = vmatpush1.msra.mxu0 0.0
        %3101 = vmatprep.subr.mxu0 0.0
        %3102 = vmatpush1.msra.mxu0 0.0
        %3103 = vmatprep.subr.mxu0 0.0
        %3104 = vmatpush1.msra.mxu0 0.0
        %3105 = vmatprep.subr.mxu0 0.0
        %3106 = vmatpush1.msra.mxu0 0.0
        %3107 = vmatprep.subr.mxu0 0.0
        %3108 = vmatpush1.msra.mxu0 0.0
        %3109 = vmatprep.subr.mxu0 0.0
        %3110 = vmatpush1.msra.mxu0 0.0
        %3111 = vmatprep.subr.mxu0 0.0
        %3112 = vmatpush1.msra.mxu0 0.0
        %3113 = vmatprep.subr.mxu0 0.0
        %3114 = vmatpush1.msra.mxu0 0.0
        %3115 = vmatprep.subr.mxu0 0.0
        %3116 = vmatpush1.msra.mxu0 0.0
        %3117 = vmatprep.subr.mxu0 0.0
        %3118 = vmatpush1.msra.mxu0 0.0
        %3119 = vmatprep.subr.mxu0 0.0
        %3120 = vmatpush1.msra.mxu0 0.0
        %3121 = vmatprep.subr.mxu0 0.0
        %3122 = vmatpush1.msra.mxu0 0.0
        %3123 = vmatprep.subr.mxu0 0.0
        %3124 = vmatpush1.msra.mxu0 0.0
        %3125 = vmatprep.subr.mxu0 0.0
        %3126 = vmatpush1.msra.mxu0 0.0
        %3127 = vmatprep.subr.mxu0 0.0
        %3128 = vmatpush1.msra.mxu0 0.0
        %3129 = vmatprep.subr.mxu0 0.0
        %3130 = vmatpush1.msra.mxu0 0.0
        %3131 = vmatprep.subr.mxu0 0.0
        %3132 = vmatpush1.msra.mxu0 0.0
        %3133 = vmatprep.subr.mxu0 0.0
        %3134 = vmatpush1.msra.mxu0 0.0
        %3135 = vmatprep.subr.mxu0 0.0
        %3136 = vmatpush1.msra.mxu0 0.0
        %3137 = vmatprep.subr.mxu0 0.0
        %3138 = vmatpush1.msra.mxu0 0.0
        %3139 = vmatprep.subr.mxu0 0.0
        %3140 = vmatpush1.msra.mxu0 0.0
        %3141 = vmatprep.subr.mxu0 0.0
        %3142 = vmatpush1.msra.mxu0 0.0
        %3143 = vmatprep.subr.mxu0 0.0
        %3144 = vmatpush1.msra.mxu0 0.0
        %3145 = vmatprep.subr.mxu0 0.0
        %3146 = vmatpush1.msra.mxu0 0.0
        %3147 = vmatprep.subr.mxu0 0.0
        %3148 = vmatpush1.msra.mxu0 0.0
        %3149 = vmatprep.subr.mxu0 0.0
        %3150 = vmatpush1.msra.mxu0 0.0
        %3151 = vmatprep.mubr.f32.mxu0 0.0
        %3152 = vmatmul.mubr.f32.gmra.mrb[0].mxu0 %v3079
        %v3153 = vpop.f32.mrb[0].mxu0
        %v3154 = vadd.f32 0.0, %v3153
        %v3155 = vpop.f32.mrb[0].mxu0
        %v3156 = vadd.f32 0.0, %v3155
        %3157 = vdwg.mxu0
        %3158 = vmatprep.subr.mxu0 0.0
        %3159 = vmatpush1.msra.mxu0 %v3085
        %3160 = vmatprep.subr.mxu0 0.0
        %3161 = vmatpush1.msra.mxu0 0.0
        %3162 = vmatprep.subr.mxu0 0.0
        %3163 = vmatpush1.msra.mxu0 0.0
        %3164 = vmatprep.subr.mxu0 0.0
        %3165 = vmatpush1.msra.mxu0 0.0
        %3166 = vmatprep.subr.mxu0 0.0
        %3167 = vmatpush1.msra.mxu0 0.0
        %3168 = vmatprep.subr.mxu0 0.0
        %3169 = vmatpush1.msra.mxu0 0.0
        %3170 = vmatprep.subr.mxu0 0.0
        %3171 = vmatpush1.msra.mxu0 0.0
        %3172 = vmatprep.subr.mxu0 0.0
        %3173 = vmatpush1.msra.mxu0 0.0
        %3174 = vmatprep.subr.mxu0 0.0
        %3175 = vmatpush1.msra.mxu0 0.0
        %3176 = vmatprep.subr.mxu0 0.0
        %3177 = vmatpush1.msra.mxu0 0.0
        %3178 = vmatprep.subr.mxu0 0.0
        %3179 = vmatpush1.msra.mxu0 0.0
        %3180 = vmatprep.subr.mxu0 0.0
        %3181 = vmatpush1.msra.mxu0 0.0
        %3182 = vmatprep.subr.mxu0 0.0
        %3183 = vmatpush1.msra.mxu0 0.0
        %3184 = vmatprep.subr.mxu0 0.0
        %3185 = vmatpush1.msra.mxu0 0.0
        %3186 = vmatprep.subr.mxu0 0.0
        %3187 = vmatpush1.msra.mxu0 0.0
        %3188 = vmatprep.subr.mxu0 0.0
        %3189 = vmatpush1.msra.mxu0 0.0
        %3190 = vmatprep.subr.mxu0 0.0
        %3191 = vmatpush1.msra.mxu0 0.0
        %3192 = vmatprep.subr.mxu0 0.0
        %3193 = vmatpush1.msra.mxu0 0.0
        %3194 = vmatprep.subr.mxu0 0.0
        %3195 = vmatpush1.msra.mxu0 0.0
        %3196 = vmatprep.subr.mxu0 0.0
        %3197 = vmatpush1.msra.mxu0 0.0
        %3198 = vmatprep.subr.mxu0 0.0
        %3199 = vmatpush1.msra.mxu0 0.0
        %3200 = vmatprep.subr.mxu0 0.0
        %3201 = vmatpush1.msra.mxu0 0.0
        %3202 = vmatprep.subr.mxu0 0.0
        %3203 = vmatpush1.msra.mxu0 0.0
        %3204 = vmatprep.subr.mxu0 0.0
        %3205 = vmatpush1.msra.mxu0 0.0
        %3206 = vmatprep.subr.mxu0 0.0
        %3207 = vmatpush1.msra.mxu0 0.0
        %3208 = vmatprep.subr.mxu0 0.0
        %3209 = vmatpush1.msra.mxu0 0.0
        %3210 = vmatprep.subr.mxu0 0.0
        %3211 = vmatpush1.msra.mxu0 0.0
        %3212 = vmatprep.subr.mxu0 0.0
        %3213 = vmatpush1.msra.mxu0 0.0
        %3214 = vmatprep.subr.mxu0 0.0
        %3215 = vmatpush1.msra.mxu0 0.0
        %3216 = vmatprep.subr.mxu0 0.0
        %3217 = vmatpush1.msra.mxu0 0.0
        %3218 = vmatprep.subr.mxu0 0.0
        %3219 = vmatpush1.msra.mxu0 0.0
        %3220 = vmatprep.subr.mxu0 0.0
        %3221 = vmatpush1.msra.mxu0 0.0
        %3222 = vmatprep.mubr.f32.mxu0 0.0
        %3223 = vmatmul.mubr.f32.gmra.mrb[0].mxu0 %v3079
        %v3224 = vpop.f32.mrb[0].mxu0
        %v3225 = vadd.f32 0.0, %v3224
        %v3226 = vpop.f32.mrb[0].mxu0
        %3227 = vdwg.mxu0
        %v3228 = vadd.f32 %v3060, %v3154
        %v3229 = vadd.f32 %v3061, %v3156
        %v3230 = vadd.f32 %v3062, %v3225
        %s3231 = scalar_lea.vmem %s4, 32
        %v3232 = vld [vmem:[%s3231] sm:$0xf]
        %v3233 = vld [vmem:[#allocation2] sm:$0xff]
        %v3234 = vld [vmem:[#allocation2 + $0x8] sm:$0xf]
        %v3237 = vcombine.high %v3233, %v3233
        %3238 = vrot.lane.b32.xlu0 %v3233, 90
        %v3239 = vpop.permute.xlu0 %3238
        %3240 = vrot.lane.b32.xlu0 %v3237, 90
        %v3241 = vpop.permute.xlu0 %3240
        %3242 = vrot.lane.b32.xlu0 %v3234, 90
        %v3243 = vpop.permute.xlu0 %3242
        %v3244 = vsel %vm1678, %v3239, %v3241
        %v3245 = vsel %vm1678, %v3241, %v3243
        %v3247 = vsel %vm349, %v3232, 0
        %v3249 = vsel %vm353, %v3244, 0
        %v3251 = vsel %vm353, %v3245, 0
        %v3253 = vsel %vm353, %v3243, 0
        %3255 = vmatprep.subr.mxu0 %v3251
        %3256 = vmatpush1.msra.mxu0 %v3249
        %3257 = vmatprep.subr.mxu0 0.0
        %3258 = vmatpush1.msra.mxu0 0.0
        %3259 = vmatprep.subr.mxu0 0.0
        %3260 = vmatpush1.msra.mxu0 0.0
        %3261 = vmatprep.subr.mxu0 0.0
        %3262 = vmatpush1.msra.mxu0 0.0
        %3263 = vmatprep.subr.mxu0 0.0
        %3264 = vmatpush1.msra.mxu0 0.0
        %3265 = vmatprep.subr.mxu0 0.0
        %3266 = vmatpush1.msra.mxu0 0.0
        %3267 = vmatprep.subr.mxu0 0.0
        %3268 = vmatpush1.msra.mxu0 0.0
        %3269 = vmatprep.subr.mxu0 0.0
        %3270 = vmatpush1.msra.mxu0 0.0
        %3271 = vmatprep.subr.mxu0 0.0
        %3272 = vmatpush1.msra.mxu0 0.0
        %3273 = vmatprep.subr.mxu0 0.0
        %3274 = vmatpush1.msra.mxu0 0.0
        %3275 = vmatprep.subr.mxu0 0.0
        %3276 = vmatpush1.msra.mxu0 0.0
        %3277 = vmatprep.subr.mxu0 0.0
        %3278 = vmatpush1.msra.mxu0 0.0
        %3279 = vmatprep.subr.mxu0 0.0
        %3280 = vmatpush1.msra.mxu0 0.0
        %3281 = vmatprep.subr.mxu0 0.0
        %3282 = vmatpush1.msra.mxu0 0.0
        %3283 = vmatprep.subr.mxu0 0.0
        %3284 = vmatpush1.msra.mxu0 0.0
        %3285 = vmatprep.subr.mxu0 0.0
        %3286 = vmatpush1.msra.mxu0 0.0
        %3287 = vmatprep.subr.mxu0 0.0
        %3288 = vmatpush1.msra.mxu0 0.0
        %3289 = vmatprep.subr.mxu0 0.0
        %3290 = vmatpush1.msra.mxu0 0.0
        %3291 = vmatprep.subr.mxu0 0.0
        %3292 = vmatpush1.msra.mxu0 0.0
        %3293 = vmatprep.subr.mxu0 0.0
        %3294 = vmatpush1.msra.mxu0 0.0
        %3295 = vmatprep.subr.mxu0 0.0
        %3296 = vmatpush1.msra.mxu0 0.0
        %3297 = vmatprep.subr.mxu0 0.0
        %3298 = vmatpush1.msra.mxu0 0.0
        %3299 = vmatprep.subr.mxu0 0.0
        %3300 = vmatpush1.msra.mxu0 0.0
        %3301 = vmatprep.subr.mxu0 0.0
        %3302 = vmatpush1.msra.mxu0 0.0
        %3303 = vmatprep.subr.mxu0 0.0
        %3304 = vmatpush1.msra.mxu0 0.0
        %3305 = vmatprep.subr.mxu0 0.0
        %3306 = vmatpush1.msra.mxu0 0.0
        %3307 = vmatprep.subr.mxu0 0.0
        %3308 = vmatpush1.msra.mxu0 0.0
        %3309 = vmatprep.subr.mxu0 0.0
        %3310 = vmatpush1.msra.mxu0 0.0
        %3311 = vmatprep.subr.mxu0 0.0
        %3312 = vmatpush1.msra.mxu0 0.0
        %3313 = vmatprep.subr.mxu0 0.0
        %3314 = vmatpush1.msra.mxu0 0.0
        %3315 = vmatprep.subr.mxu0 0.0
        %3316 = vmatpush1.msra.mxu0 0.0
        %3317 = vmatprep.subr.mxu0 0.0
        %3318 = vmatpush1.msra.mxu0 0.0
        %3319 = vmatprep.mubr.f32.mxu0 0.0
        %3320 = vmatmul.mubr.f32.gmra.mrb[0].mxu0 %v3247
        %v3321 = vpop.f32.mrb[0].mxu0
        %v3322 = vadd.f32 0.0, %v3321
        %v3323 = vpop.f32.mrb[0].mxu0
        %v3324 = vadd.f32 0.0, %v3323
        %3325 = vdwg.mxu0
        %3326 = vmatprep.subr.mxu0 0.0
        %3327 = vmatpush1.msra.mxu0 %v3253
        %3328 = vmatprep.subr.mxu0 0.0
        %3329 = vmatpush1.msra.mxu0 0.0
        %3330 = vmatprep.subr.mxu0 0.0
        %3331 = vmatpush1.msra.mxu0 0.0
        %3332 = vmatprep.subr.mxu0 0.0
        %3333 = vmatpush1.msra.mxu0 0.0
        %3334 = vmatprep.subr.mxu0 0.0
        %3335 = vmatpush1.msra.mxu0 0.0
        %3336 = vmatprep.subr.mxu0 0.0
        %3337 = vmatpush1.msra.mxu0 0.0
        %3338 = vmatprep.subr.mxu0 0.0
        %3339 = vmatpush1.msra.mxu0 0.0
        %3340 = vmatprep.subr.mxu0 0.0
        %3341 = vmatpush1.msra.mxu0 0.0
        %3342 = vmatprep.subr.mxu0 0.0
        %3343 = vmatpush1.msra.mxu0 0.0
        %3344 = vmatprep.subr.mxu0 0.0
        %3345 = vmatpush1.msra.mxu0 0.0
        %3346 = vmatprep.subr.mxu0 0.0
        %3347 = vmatpush1.msra.mxu0 0.0
        %3348 = vmatprep.subr.mxu0 0.0
        %3349 = vmatpush1.msra.mxu0 0.0
        %3350 = vmatprep.subr.mxu0 0.0
        %3351 = vmatpush1.msra.mxu0 0.0
        %3352 = vmatprep.subr.mxu0 0.0
        %3353 = vmatpush1.msra.mxu0 0.0
        %3354 = vmatprep.subr.mxu0 0.0
        %3355 = vmatpush1.msra.mxu0 0.0
        %3356 = vmatprep.subr.mxu0 0.0
        %3357 = vmatpush1.msra.mxu0 0.0
        %3358 = vmatprep.subr.mxu0 0.0
        %3359 = vmatpush1.msra.mxu0 0.0
        %3360 = vmatprep.subr.mxu0 0.0
        %3361 = vmatpush1.msra.mxu0 0.0
        %3362 = vmatprep.subr.mxu0 0.0
        %3363 = vmatpush1.msra.mxu0 0.0
        %3364 = vmatprep.subr.mxu0 0.0
        %3365 = vmatpush1.msra.mxu0 0.0
        %3366 = vmatprep.subr.mxu0 0.0
        %3367 = vmatpush1.msra.mxu0 0.0
        %3368 = vmatprep.subr.mxu0 0.0
        %3369 = vmatpush1.msra.mxu0 0.0
        %3370 = vmatprep.subr.mxu0 0.0
        %3371 = vmatpush1.msra.mxu0 0.0
        %3372 = vmatprep.subr.mxu0 0.0
        %3373 = vmatpush1.msra.mxu0 0.0
        %3374 = vmatprep.subr.mxu0 0.0
        %3375 = vmatpush1.msra.mxu0 0.0
        %3376 = vmatprep.subr.mxu0 0.0
        %3377 = vmatpush1.msra.mxu0 0.0
        %3378 = vmatprep.subr.mxu0 0.0
        %3379 = vmatpush1.msra.mxu0 0.0
        %3380 = vmatprep.subr.mxu0 0.0
        %3381 = vmatpush1.msra.mxu0 0.0
        %3382 = vmatprep.subr.mxu0 0.0
        %3383 = vmatpush1.msra.mxu0 0.0
        %3384 = vmatprep.subr.mxu0 0.0
        %3385 = vmatpush1.msra.mxu0 0.0
        %3386 = vmatprep.subr.mxu0 0.0
        %3387 = vmatpush1.msra.mxu0 0.0
        %3388 = vmatprep.subr.mxu0 0.0
        %3389 = vmatpush1.msra.mxu0 0.0
        %3390 = vmatprep.mubr.f32.mxu0 0.0
        %3391 = vmatmul.mubr.f32.gmra.mrb[0].mxu0 %v3247
        %v3392 = vpop.f32.mrb[0].mxu0
        %v3393 = vadd.f32 0.0, %v3392
        %v3394 = vpop.f32.mrb[0].mxu0
        %3395 = vdwg.mxu0
        %v3396 = vadd.f32 %v3228, %v3322
        %v3397 = vadd.f32 %v3229, %v3324
        %v3398 = vadd.f32 %v3230, %v3393
        %v3399 = vld [vmem:[%s5] sm:$0xf]
        %3401 = vset.pattern.permute.xlu0 0
        %3402 = vperm.xlu0 %3401, %v3399
        %v3403 = vpop.permute.xlu0 %3402
        %v3405 = vmul.f32 %v3396, %v3403
        %v3406 = vmul.f32 %v3397, %v3403
        %v3407 = vmul.f32 %v3398, %v3403
        %v3408 = vld [vmem:[%s6] sm:$0xf]
        %3410 = vset.pattern.permute.xlu0 0
        %3411 = vperm.xlu0 %3410, %v3408
        %v3412 = vpop.permute.xlu0 %3411
        %v3414 = vadd.f32 %v3405, %v3412
        %v3415 = vadd.f32 %v3406, %v3412
        %v3416 = vadd.f32 %v3407, %v3412
        %v3417 = vld [vmem:[%s331] sm:$0xff]
        %v3418 = vld [vmem:[%s331 + $0x8] sm:$0xf]
        %v3421 = vcombine.high %v3417, %v3417
        %3422 = vrot.lane.b32.xlu0 %v3417, 109
        %v3423 = vpop.permute.xlu0 %3422
        %3424 = vrot.lane.b32.xlu0 %v3421, 109
        %v3425 = vpop.permute.xlu0 %3424
        %3426 = vrot.lane.b32.xlu0 %v3418, 109
        %v3427 = vpop.permute.xlu0 %3426
        %v3428 = vsel %vm1002, %v3423, %v3425
        %v3429 = vsel %vm1002, %v3425, %v3427
        %v3433 = vadd.f32 %v3414, %v3428
        %v3434 = vadd.f32 %v3415, %v3429
        %v3435 = vadd.f32 %v3416, %v3427
        %v3438 = vcombine.low %v3433, %v3434
        %3440 = vst [vmem:[%s326] sm:$0xff] %v3438
        %vm3441 = vcmask 551936
        %3442 = vst.msk [vmem:[%s326 + $0x8] sm:$0xf] %vm3441, %v3435
        %s3443 = sand.u32 %s226, 1
        %s3444 = scalar_lea.sflag [#allocation5], %s3443
        %s3445 = sand.u32 %s226, 1
        %s3446 = smul.addr %s3445, 12
        %s3447 = scalar_lea.vmem [#allocation4], %s3446
        // Predicated region
        $region57: #{tpu_custom_call.1} parent=55 // pred_check
          %p3448 = pneg %p236
        $region58: #{tpu_custom_call.1} parent=55 // pred_check_branch
          %3450 = sbr.rel (%p3448) target = $region60
        $region59: #{tpu_custom_call.1} parent=55 // pred_region
          %s3452 = ssub.s32 192, 192
          %3453 = vsyncadd %s3444, %s3452
          %s3454 = smul.addr %s24, 3
          %s3455 = smul.addr %s3454, 64
          %s3456 = scalar_lea.hbm %s9, %s3455
          %s3458 = sshll.u32 %s3447, 4
          %s3459 = int_to_ptr.vmem [resolvable:$true] %s3458
          %3461 = dma.vmem_to_hbm [thread:$0]  %s3459, 192, %s3456, %s3444
        $region60: #{tpu_custom_call.1} parent=55 // pred_fallthru
          _
      $region56: #{tpu_custom_call.1} parent=5 // pred_fallthru
        _
      %p3462 = scmp.le.s32.totalorder 2, %s19
      // Predicated region
      $region61: #{tpu_custom_call.1} parent=5 // pred_check
        %p3463 = pneg %p3462
      $region62: #{tpu_custom_call.1} parent=5 // pred_check_branch
        %3465 = sbr.rel (%p3463) target = $region64
      $region63: #{tpu_custom_call.1} parent=5 // pred_region
        %s3466 = ssub.s32 %s19, 2
        // Predicated region
        $region65: #{tpu_custom_call.1} parent=63 // pred_check
          %p3467 = pneg %p242
        $region66: #{tpu_custom_call.1} parent=63 // pred_check_branch
          %3469 = sbr.rel (%p3467) target = $region68
        $region67: #{tpu_custom_call.1} parent=63 // pred_region
          %s3470 = sand.u32 %s227, 1
          %s3471 = scalar_lea.sflag [#allocation5], %s3470
          %s3472 = sand.u32 %s227, 1
          %s3473 = smul.addr %s3472, 12
          %s3474 = scalar_lea.vmem [#allocation4], %s3473
          %3475 = dma.done %s3471, 192
        $region68: #{tpu_custom_call.1} parent=63 // pred_fallthru
          _
      $region64: #{tpu_custom_call.1} parent=5 // pred_fallthru
        _
    $region6: #{tpu_custom_call.1} parent=1 // loop_footer
      %s23 = sadd.s32 1, %s19
    $region7: #{tpu_custom_call.1} parent=1 // loop_footer_branch
      %18 = sbr.rel target = $region3
    $region8: #{tpu_custom_call.1} parent=1 // loop_exit
      _
    %3476 = vsyncpa [#allocation5], 1
    %s3477 = scalar_lea.sflag [#allocation5], 1
    %3478 = vsyncpa %s3477, 1

</llo_original>
